<compile_context>
chip_gen: v7x
topology: tpu7x:2x2x1
jax: 0.10.0
libtpu: 0.0.40
codegen_flags: <defaults>
</compile_context>

<pallas_src>
import jax
import jax.numpy as jnp
import numpy as np
from jax import lax
from jax.experimental import pallas as pl
from jax.experimental.pallas import tpu as pltpu


def _round_up(x, m):
    return ((x + m - 1) // m) * m


def _sigmoid(x):
    # logistic via a single tanh EUP push (vs exp + divide): sigma(x) = 0.5*tanh(x/2)+0.5
    return 0.5 * jnp.tanh(0.5 * x) + 0.5


def _make_lstm_kernel(*, T, Tc, Bb, Hp, unroll):
    """Kernel for grid=(batch_blocks, time_chunks)."""
    chunk_rows = Tc * Bb
    # Only mask time steps when the last chunk is ragged (static decision).
    ragged = (T % Tc) != 0

    def kernel(xf_ref, xn_ref, wih_ref, whh_ref, b_ref, h0_ref, c0_ref,
               out_ref, hN_ref, cN_ref, pg_ref, h_sc, c_sc):
        t_chunk = pl.program_id(1)
        n_chunks = pl.num_programs(1)

        # pre-gates double buffer lives in one 2-D scratch: rows
        # [cur_base, cur_base + Tc*Bb) = current chunk, the other half = next chunk.
        cur = t_chunk % 2
        cur_base = cur * chunk_rows
        nxt_base = (1 - cur) * chunk_rows

        bias = b_ref[...]                      # (1, 4*Hp) f32
        wih = wih_ref[...]                     # (I, 4*Hp) compute dtype
        mm_dtype = wih.dtype

        # ---- chunk-0 prologue: reset carries + project this chunk's inputs ----
        @pl.when(t_chunk == 0)
        def _():
            h_sc[...] = h0_ref[...]
            c_sc[...] = c0_ref[...]

            def proj(t, carry):
                row = pl.multiple_of(t * Bb, Bb)
                pg_ref[pl.ds(row, Bb), :] = (
                    jnp.dot(xf_ref[t], wih, preferred_element_type=jnp.float32)
                    + bias)
                return carry

            lax.fori_loop(0, Tc, proj, 0, unroll=min(Tc, 8))

        do_next = t_chunk + 1 < n_chunks

        # ---- serial recurrence over this chunk ----
        def step(t, carry):
            h_prev, c_prev = carry
            hx = h_prev.astype(mm_dtype)
            row = pl.multiple_of(cur_base + t * Bb, Bb)

            def gate(k):
                # per-gate dot + per-gate pre-gate load: EUP can start the
                # activation while later gate columns are still in the MXU,
                # and the live gates temp stays at one (Bb, Hp) tile.
                w_k = whh_ref[:, k * Hp:(k + 1) * Hp]
                pg_k = pg_ref[pl.ds(row, Bb), pl.ds(k * Hp, Hp)]
                return pg_k + jnp.dot(hx, w_k, preferred_element_type=jnp.float32)

            i_g = _sigmoid(gate(0))
            g_g = jnp.tanh(gate(2))
            ig = i_g * g_g
            f_g = _sigmoid(gate(1))
            c_new = f_g * c_prev + ig
            o_g = _sigmoid(gate(3))
            h_new = o_g * jnp.tanh(c_new)

            if ragged:
                valid = (t_chunk * Tc + t) < T
                h_new = jnp.where(valid, h_new, h_prev)
                c_new = jnp.where(valid, c_new, c_prev)

            out_ref[t] = h_new.astype(out_ref.dtype)

            # Interleaved projection of the NEXT chunk's row block t: independent
            # of the recurrence chain, so it fills the MXU slots the tiny
            # per-step dots leave idle (phase-1 hidden under phase-2).
            @pl.when(do_next)
            def _():
                nrow = pl.multiple_of(nxt_base + t * Bb, Bb)
                pg_ref[pl.ds(nrow, Bb), :] = (
                    jnp.dot(xn_ref[t], wih, preferred_element_type=jnp.float32)
                    + bias)

            return (h_new, c_new)

        h_last, c_last = lax.fori_loop(0, Tc, step, (h_sc[...], c_sc[...]),
                                       unroll=unroll)
        h_sc[...] = h_last
        c_sc[...] = c_last

        @pl.when(t_chunk == n_chunks - 1)
        def _():
            hN_ref[...] = h_last.astype(hN_ref.dtype)
            cN_ref[...] = c_last.astype(cN_ref.dtype)

    return kernel


def rnn_layer_forward(x, state, w_ih, w_hh, b_ih, b_hh, *,
                      compute_dtype=jnp.bfloat16,
                      time_chunk=None,
                      num_batch_blocks=1):
    """Pallas equivalent of RNNLayer.forward with an LSTM cell.

    x:      (T, B, I)
    state:  tuple (h0, c0), each (B, H)
    w_ih:   (4H, I), w_hh: (4H, H), b_ih/b_hh: (4H,)   (PyTorch LSTMCell layout)
    compute_dtype:     dtype fed to the MXU (default bf16 - native on v5e/v6e/v7x);
                       gate math / carries / pre-gates stay f32.
    time_chunk:        time steps per pipelined chunk (auto if None).
    num_batch_blocks:  >1 splits the batch over a leading 'parallel' grid axis
                       (use 2 on v7x to engage both TensorCores; needs B >= ~16
                       to be worthwhile).
    returns (outputs (T, B, H), (h_T, c_T))
    """
    h0, c0 = state
    T, B, I = x.shape
    H = h0.shape[-1]
    out_dtype = x.dtype

    if T == 0:  # PyTorch loop would not execute; state passes through unchanged.
        return jnp.zeros((0, B, H), out_dtype), (h0, c0)

    # Lane / sublane padding: hidden -> multiple of 128 (lane-aligned gate
    # slices and dense output stores), batch -> multiple of 8 (16 when batch
    # blocked, so sub-32-bit blocks stay sublane-tile aligned).
    Hp = _round_up(H, 128)
    NB = max(1, int(num_batch_blocks))
    if NB == 1:
        Bb = _round_up(max(B, 8), 8)
    else:
        Bb = _round_up(max(-(-B // NB), 8), 16)
    Bp = NB * Bb

    cbytes = jnp.dtype(compute_dtype).itemsize
    obytes = jnp.dtype(out_dtype).itemsize

    def vmem_estimate(tc):
        weights = 2 * (I + Hp) * 4 * Hp * cbytes + 2 * 4 * Hp * 4
        xblk = 2 * 2 * tc * Bb * I * cbytes        # two x operands, double-buffered
        outblk = 2 * tc * Bb * Hp * obytes
        hc_io = 4 * 2 * Bb * Hp * 4                # h0, c0, hN, cN blocks
        pg = 2 * tc * Bb * 4 * Hp * 4              # pre-gates double buffer (f32)
        hc = 2 * Bb * Hp * 4                       # h/c carry scratch
        return weights + xblk + outblk + hc_io + pg + hc

    # Pick the chunk length: big enough to amortize per-step pipeline overhead,
    # small enough to fit every generation's VMEM (v7x: 64 MiB/TC) with headroom.
    vmem_budget = 40 * 1024 * 1024
    Tc = max(1, min(T, 32 if time_chunk is None else int(time_chunk)))
    while Tc > 1 and vmem_estimate(Tc) > vmem_budget:
        Tc = max(1, Tc // 2)
    NT = -(-T // Tc)
    T_pad = NT * Tc

    # ---- parameter / input preparation (PyTorch LSTMCell layout -> MXU layout) ----
    w_ih_t = jnp.transpose(w_ih).astype(compute_dtype)      # (I, 4H)
    w_hh_t = jnp.transpose(w_hh).astype(compute_dtype)      # (H, 4H)
    bias = (b_ih + b_hh).reshape(1, 4 * H).astype(jnp.float32)

    def pad_gate_cols(m, rows_pad):
        # (rows, 4H) -> (rows_pad, 4Hp), keeping gate k's block at offset k*Hp.
        # Zero padding keeps padded hidden units exactly at h = 0, c = 0.
        rows = m.shape[0]
        blocks = jnp.split(m, 4, axis=1)
        blocks = [jnp.pad(blk, ((0, rows_pad - rows), (0, Hp - H))) for blk in blocks]
        return jnp.concatenate(blocks, axis=1)

    w_ih_p = pad_gate_cols(w_ih_t, I)                        # (I, 4Hp)
    w_hh_p = pad_gate_cols(w_hh_t, Hp)                       # (Hp, 4Hp)
    bias_p = pad_gate_cols(bias, 1)                          # (1, 4Hp) f32

    x_p = jnp.pad(x.astype(compute_dtype),
                  ((0, T_pad - T), (0, Bp - B), (0, 0)))     # (T_pad, Bp, I)
    h0_p = jnp.pad(h0.astype(jnp.float32), ((0, Bp - B), (0, Hp - H)))
    c0_p = jnp.pad(c0.astype(jnp.float32), ((0, Bp - B), (0, Hp - H)))

    unroll = Tc if Tc <= 8 else 4          # modest partial unroll for larger chunks
    kernel = _make_lstm_kernel(T=T, Tc=Tc, Bb=Bb, Hp=Hp, unroll=unroll)

    grid_spec = pltpu.PrefetchScalarGridSpec(
        num_scalar_prefetch=0,
        grid=(NB, NT),
        in_specs=[
            # x, chunk 0 of this batch block (constant over t -> fetched once).
            pl.BlockSpec((Tc, Bb, I), lambda b, t: (0, b, 0)),
            # x, next chunk (clamped at the end) for the interleaved projection.
            pl.BlockSpec((Tc, Bb, I),
                         lambda b, t: (jnp.minimum(t + 1, NT - 1), b, 0)),
            pl.BlockSpec((I, 4 * Hp), lambda b, t: (0, 0)),      # W_ih^T
            pl.BlockSpec((Hp, 4 * Hp), lambda b, t: (0, 0)),     # W_hh^T
            pl.BlockSpec((1, 4 * Hp), lambda b, t: (0, 0)),      # fused bias (f32)
            pl.BlockSpec((Bb, Hp), lambda b, t: (b, 0)),         # h0
            pl.BlockSpec((Bb, Hp), lambda b, t: (b, 0)),         # c0
        ],
        out_specs=[
            pl.BlockSpec((Tc, Bb, Hp), lambda b, t: (t, b, 0)),  # all h_t (3-D, lane-dense)
            pl.BlockSpec((Bb, Hp), lambda b, t: (b, 0)),         # h_T
            pl.BlockSpec((Bb, Hp), lambda b, t: (b, 0)),         # c_T
        ],
        scratch_shapes=[
            pltpu.VMEM((2 * Tc * Bb, 4 * Hp), jnp.float32),      # pre-gates double buffer
            pltpu.VMEM((Bb, Hp), jnp.float32),                   # h carry
            pltpu.VMEM((Bb, Hp), jnp.float32),                   # c carry
        ],
    )

    est = vmem_estimate(Tc)
    vmem_limit = int(max(16 << 20, min(est * 5 // 4 + (4 << 20), 100 << 20)))

    outs_p, hN_p, cN_p = pl.pallas_call(
        kernel,
        grid_spec=grid_spec,
        out_shape=(
            jax.ShapeDtypeStruct((T_pad, Bp, Hp), out_dtype),
            jax.ShapeDtypeStruct((Bp, Hp), h0.dtype),
            jax.ShapeDtypeStruct((Bp, Hp), c0.dtype),
        ),
        compiler_params=pltpu.CompilerParams(
            dimension_semantics=("parallel", "arbitrary"),
            vmem_limit_bytes=vmem_limit,
        ),
    )(x_p, x_p, w_ih_p, w_hh_p, bias_p, h0_p, c0_p)

    # Slices are no-ops when B, H, T are already aligned (production shapes).
    outputs = outs_p[:T, :B, :H]
    h_T = hN_p[:B, :H]
    c_T = cN_p[:B, :H]
    return outputs, (h_T, c_T)


def _reference_lstm(x, state, w_ih, w_hh, b_ih, b_hh):
    """Pure-JAX reference (matches PyTorch nn.LSTMCell unrolled over time)."""
    def step(carry, x_t):
        h, c = carry
        gates = x_t @ w_ih.T + b_ih + h @ w_hh.T + b_hh
        H = h.shape[-1]
        i = jax.nn.sigmoid(gates[:, 0 * H:1 * H])
        f = jax.nn.sigmoid(gates[:, 1 * H:2 * H])
        g = jnp.tanh(gates[:, 2 * H:3 * H])
        o = jax.nn.sigmoid(gates[:, 3 * H:4 * H])
        c_new = f * c + i * g
        h_new = o * jnp.tanh(c_new)
        return (h_new, c_new), h_new

    (h_T, c_T), outs = lax.scan(step, state, x)
    return outs, (h_T, c_T)


if __name__ == "__main__":
    T, B, I, H = 8, 4, 16, 32   # seq=8, batch=4, input_size=16, hidden_size=32

    key = jax.random.PRNGKey(0)
    kx, kh, kc, k1, k2, k3, k4 = jax.random.split(key, 7)

    x = jax.random.normal(kx, (T, B, I), dtype=jnp.float32)
    h0 = jax.random.normal(kh, (B, H), dtype=jnp.float32)
    c0 = jax.random.normal(kc, (B, H), dtype=jnp.float32)

    scale = 1.0 / np.sqrt(H)
    w_ih = jax.random.uniform(k1, (4 * H, I), minval=-scale, maxval=scale, dtype=jnp.float32)
    w_hh = jax.random.uniform(k2, (4 * H, H), minval=-scale, maxval=scale, dtype=jnp.float32)
    b_ih = jax.random.uniform(k3, (4 * H,), minval=-scale, maxval=scale, dtype=jnp.float32)
    b_hh = jax.random.uniform(k4, (4 * H,), minval=-scale, maxval=scale, dtype=jnp.float32)

    ref_outs, (ref_h, ref_c) = _reference_lstm(x, (h0, c0), w_ih, w_hh, b_ih, b_hh)

    # 1) f32 matmuls, multi-chunk with a ragged last chunk: exercises the chunk
    #    carry, pg double buffer, interleaved projection and time masking.
    outs, (h_T, c_T) = rnn_layer_forward(
        x, (h0, c0), w_ih, w_hh, b_ih, b_hh,
        compute_dtype=jnp.float32, time_chunk=3)
    jax.block_until_ready(outs)
    np.testing.assert_allclose(np.asarray(outs), np.asarray(ref_outs), rtol=1e-4, atol=1e-4)
    np.testing.assert_allclose(np.asarray(h_T), np.asarray(ref_h), rtol=1e-4, atol=1e-4)
    np.testing.assert_allclose(np.asarray(c_T), np.asarray(ref_c), rtol=1e-4, atol=1e-4)

    # 2) f32, two batch blocks (the v7x two-TensorCore batch-split path).
    outs2, (h_T2, c_T2) = rnn_layer_forward(
        x, (h0, c0), w_ih, w_hh, b_ih, b_hh,
        compute_dtype=jnp.float32, time_chunk=4, num_batch_blocks=2)
    jax.block_until_ready(outs2)
    np.testing.assert_allclose(np.asarray(outs2), np.asarray(ref_outs), rtol=1e-4, atol=1e-4)
    np.testing.assert_allclose(np.asarray(h_T2), np.asarray(ref_h), rtol=1e-4, atol=1e-4)
    np.testing.assert_allclose(np.asarray(c_T2), np.asarray(ref_c), rtol=1e-4, atol=1e-4)

    # 3) default path: bf16 matmul operands, f32 gate math (looser tolerance).
    outs_bf, (h_bf, c_bf) = rnn_layer_forward(x, (h0, c0), w_ih, w_hh, b_ih, b_hh)
    jax.block_until_ready(outs_bf)
    np.testing.assert_allclose(np.asarray(outs_bf), np.asarray(ref_outs), rtol=0.1, atol=0.1)
    np.testing.assert_allclose(np.asarray(c_bf), np.asarray(ref_c), rtol=0.1, atol=0.1)

    print("KERNEL_OK")
</pallas_src>

<mosaic_0001>
module attributes {stable_mosaic.version = 11 : i64} {
  func.func @kernel(%arg0: i32, %arg1: i32, %arg2: memref<3x8x16xf32, #tpu.memory_space<vmem>>, %arg3: memref<3x8x16xf32, #tpu.memory_space<vmem>>, %arg4: memref<16x512xf32, #tpu.memory_space<vmem>>, %arg5: memref<128x512xf32, #tpu.memory_space<vmem>>, %arg6: memref<1x512xf32, #tpu.memory_space<vmem>>, %arg7: memref<8x128xf32, #tpu.memory_space<vmem>>, %arg8: memref<8x128xf32, #tpu.memory_space<vmem>>, %arg9: memref<3x8x128xf32, #tpu.memory_space<vmem>>, %arg10: memref<8x128xf32, #tpu.memory_space<vmem>>, %arg11: memref<8x128xf32, #tpu.memory_space<vmem>>, %arg12: memref<48x512xf32, #tpu.memory_space<vmem>>, %arg13: memref<8x128xf32, #tpu.memory_space<vmem>>, %arg14: memref<8x128xf32, #tpu.memory_space<vmem>>) attributes {dimension_semantics = [#tpu.dimension_semantics<parallel>, #tpu.dimension_semantics<arbitrary>], iteration_bounds = array<i64: 1, 3>, scalar_prefetch = 0 : i64, scratch_operands = 3 : i64, tpu.core_type = #tpu.core_type<tc>, window_params = [{transform_indices = @transform_0, window_bounds = array<i64: 3, 8, 16>}, {transform_indices = @transform_1, window_bounds = array<i64: 3, 8, 16>}, {pipeline_mode = #tpu.pipeline_mode<synchronous>, transform_indices = @transform_2, window_bounds = array<i64: 16, 512>}, {pipeline_mode = #tpu.pipeline_mode<synchronous>, transform_indices = @transform_3, window_bounds = array<i64: 128, 512>}, {pipeline_mode = #tpu.pipeline_mode<synchronous>, transform_indices = @transform_4, window_bounds = array<i64: 1, 512>}, {transform_indices = @transform_5, window_bounds = array<i64: 8, 128>}, {transform_indices = @transform_6, window_bounds = array<i64: 8, 128>}, {transform_indices = @transform_7, window_bounds = array<i64: 3, 8, 128>}, {transform_indices = @transform_8, window_bounds = array<i64: 8, 128>}, {transform_indices = @transform_9, window_bounds = array<i64: 8, 128>}]} {
    %c2_i32 = arith.constant 2 : i32
    %c0_i32 = arith.constant 0 : i32
    %0 = arith.cmpi eq, %c2_i32, %c0_i32 : i32
    %c1_i32 = arith.constant 1 : i32
    %1 = arith.select %0, %c1_i32, %c2_i32 : i32
    %2 = arith.remsi %arg1, %1 : i32
    %c0_i32_0 = arith.constant 0 : i32
    %3 = arith.cmpi ne, %2, %c0_i32_0 : i32
    %c0_i32_1 = arith.constant 0 : i32
    %4 = arith.cmpi slt, %2, %c0_i32_1 : i32
    %c0_i32_2 = arith.constant 0 : i32
    %5 = arith.cmpi slt, %1, %c0_i32_2 : i32
    %6 = arith.xori %4, %5 : i1
    %7 = arith.andi %6, %3 : i1
    %8 = arith.addi %2, %1 : i32
    %9 = arith.select %7, %8, %2 : i32
    %c24_i32 = arith.constant 24 : i32
    %10 = arith.muli %9, %c24_i32 : i32
    %c1_i32_3 = arith.constant 1 : i32
    %11 = arith.subi %c1_i32_3, %9 : i32
    %c24_i32_4 = arith.constant 24 : i32
    %12 = arith.muli %11, %c24_i32_4 : i32
    %c0 = arith.constant 0 : index
    %c0_5 = arith.constant 0 : index
    %13 = vector.load %arg6[%c0, %c0_5] : memref<1x512xf32, #tpu.memory_space<vmem>>, vector<1x512xf32>
    %c0_6 = arith.constant 0 : index
    %c0_7 = arith.constant 0 : index
    %14 = vector.load %arg4[%c0_6, %c0_7] : memref<16x512xf32, #tpu.memory_space<vmem>>, vector<16x512xf32>
    %c0_i32_8 = arith.constant 0 : i32
    %15 = arith.cmpi eq, %arg1, %c0_i32_8 : i32
    %16 = arith.extui %15 : i1 to i32
    %c0_i32_9 = arith.constant 0 : i32
    %17 = arith.cmpi ne, %16, %c0_i32_9 : i32
    scf.if %17 {
      %c0_113 = arith.constant 0 : index
      %c0_114 = arith.constant 0 : index
      %210 = vector.load %arg7[%c0_113, %c0_114] : memref<8x128xf32, #tpu.memory_space<vmem>>, vector<8x128xf32>
      %c0_115 = arith.constant 0 : index
      %c0_116 = arith.constant 0 : index
      %211 = vector.load %arg13[%c0_115, %c0_116] : memref<8x128xf32, #tpu.memory_space<vmem>>, vector<8x128xf32>
      tpu.vector_store %arg13[%c0_115, %c0_116], %210 {strides = array<i32>} : memref<8x128xf32, #tpu.memory_space<vmem>>, vector<8x128xf32>,
      %c0_117 = arith.constant 0 : index
      %c0_118 = arith.constant 0 : index
      %212 = vector.load %arg8[%c0_117, %c0_118] : memref<8x128xf32, #tpu.memory_space<vmem>>, vector<8x128xf32>
      %c0_119 = arith.constant 0 : index
      %c0_120 = arith.constant 0 : index
      %213 = vector.load %arg14[%c0_119, %c0_120] : memref<8x128xf32, #tpu.memory_space<vmem>>, vector<8x128xf32>
      tpu.vector_store %arg14[%c0_119, %c0_120], %212 {strides = array<i32>} : memref<8x128xf32, #tpu.memory_space<vmem>>, vector<8x128xf32>,
      %c0_i32_121 = arith.constant 0 : i32
      %c8_i32_122 = arith.constant 8 : i32
      %214 = arith.muli %c0_i32_121, %c8_i32_122 : i32
      %215 = tpu.assume_multiple %214, 8 : i32
      %216 = arith.index_cast %c0_i32_121 : i32 to index
      %c0_123 = arith.constant 0 : index
      %c0_124 = arith.constant 0 : index
      %217 = vector.load %arg2[%216, %c0_123, %c0_124] : memref<3x8x16xf32, #tpu.memory_space<vmem>>, vector<1x8x16xf32>
      %218 = vector.shape_cast %217 : vector<1x8x16xf32> to vector<8x16xf32>
      %cst_125 = arith.constant dense<0.000000e+00> : vector<8x512xf32>
      %219 = tpu.matmul %218, %14, %cst_125 {dimension_numbers = #tpu.dot_dimension_numbers<[1], [0], [0], [1], [0, 0, 1, 1], [], []>} : vector<8x16xf32>, vector<16x512xf32>, vector<8x512xf32> -> vector<8x512xf32>
      %220 = vector.broadcast %13 : vector<1x512xf32> to vector<8x512xf32>
      %221 = arith.addf %219, %220 : vector<8x512xf32>
      %222 = arith.index_cast %215 : i32 to index
      %c0_126 = arith.constant 0 : index
      %223 = vector.load %arg12[%222, %c0_126] : memref<48x512xf32, #tpu.memory_space<vmem>>, vector<8x512xf32>
      tpu.vector_store %arg12[%222, %c0_126], %221 {strides = array<i32>} : memref<48x512xf32, #tpu.memory_space<vmem>>, vector<8x512xf32>,
      %c1_i32_127 = arith.constant 1 : i32
      %c8_i32_128 = arith.constant 8 : i32
      %224 = arith.muli %c1_i32_127, %c8_i32_128 : i32
      %225 = tpu.assume_multiple %224, 8 : i32
      %226 = arith.index_cast %c1_i32_127 : i32 to index
      %c0_129 = arith.constant 0 : index
      %c0_130 = arith.constant 0 : index
      %227 = vector.load %arg2[%226, %c0_129, %c0_130] : memref<3x8x16xf32, #tpu.memory_space<vmem>>, vector<1x8x16xf32>
      %228 = vector.shape_cast %227 : vector<1x8x16xf32> to vector<8x16xf32>
      %cst_131 = arith.constant dense<0.000000e+00> : vector<8x512xf32>
      %229 = tpu.matmul %228, %14, %cst_131 {dimension_numbers = #tpu.dot_dimension_numbers<[1], [0], [0], [1], [0, 0, 1, 1], [], []>} : vector<8x16xf32>, vector<16x512xf32>, vector<8x512xf32> -> vector<8x512xf32>
      %230 = vector.broadcast %13 : vector<1x512xf32> to vector<8x512xf32>
      %231 = arith.addf %229, %230 : vector<8x512xf32>
      %232 = arith.index_cast %225 : i32 to index
      %c0_132 = arith.constant 0 : index
      %233 = vector.load %arg12[%232, %c0_132] : memref<48x512xf32, #tpu.memory_space<vmem>>, vector<8x512xf32>
      tpu.vector_store %arg12[%232, %c0_132], %231 {strides = array<i32>} : memref<48x512xf32, #tpu.memory_space<vmem>>, vector<8x512xf32>,
      %c2_i32_133 = arith.constant 2 : i32
      %c8_i32_134 = arith.constant 8 : i32
      %234 = arith.muli %c2_i32_133, %c8_i32_134 : i32
      %235 = tpu.assume_multiple %234, 8 : i32
      %236 = arith.index_cast %c2_i32_133 : i32 to index
      %c0_135 = arith.constant 0 : index
      %c0_136 = arith.constant 0 : index
      %237 = vector.load %arg2[%236, %c0_135, %c0_136] : memref<3x8x16xf32, #tpu.memory_space<vmem>>, vector<1x8x16xf32>
      %238 = vector.shape_cast %237 : vector<1x8x16xf32> to vector<8x16xf32>
      %cst_137 = arith.constant dense<0.000000e+00> : vector<8x512xf32>
      %239 = tpu.matmul %238, %14, %cst_137 {dimension_numbers = #tpu.dot_dimension_numbers<[1], [0], [0], [1], [0, 0, 1, 1], [], []>} : vector<8x16xf32>, vector<16x512xf32>, vector<8x512xf32> -> vector<8x512xf32>
      %240 = vector.broadcast %13 : vector<1x512xf32> to vector<8x512xf32>
      %241 = arith.addf %239, %240 : vector<8x512xf32>
      %242 = arith.index_cast %235 : i32 to index
      %c0_138 = arith.constant 0 : index
      %243 = vector.load %arg12[%242, %c0_138] : memref<48x512xf32, #tpu.memory_space<vmem>>, vector<8x512xf32>
      tpu.vector_store %arg12[%242, %c0_138], %241 {strides = array<i32>} : memref<48x512xf32, #tpu.memory_space<vmem>>, vector<8x512xf32>,
      %c3_i32_139 = arith.constant 3 : i32
    } else {
    }
    %c1_i32_10 = arith.constant 1 : i32
    %18 = arith.addi %arg1, %c1_i32_10 : i32
    %c3_i32 = arith.constant 3 : i32
    %19 = arith.cmpi slt, %18, %c3_i32 : i32
    %c0_11 = arith.constant 0 : index
    %c0_12 = arith.constant 0 : index
    %20 = vector.load %arg13[%c0_11, %c0_12] : memref<8x128xf32, #tpu.memory_space<vmem>>, vector<8x128xf32>
    %c0_13 = arith.constant 0 : index
    %c0_14 = arith.constant 0 : index
    %21 = vector.load %arg14[%c0_13, %c0_14] : memref<8x128xf32, #tpu.memory_space<vmem>>, vector<8x128xf32>
    %c0_i32_15 = arith.constant 0 : i32
    %c8_i32 = arith.constant 8 : i32
    %22 = arith.muli %c0_i32_15, %c8_i32 : i32
    %23 = arith.addi %10, %22 : i32
    %24 = tpu.assume_multiple %23, 8 : i32
    %c0_16 = arith.constant 0 : index
    %c0_17 = arith.constant 0 : index
    %25 = vector.load %arg5[%c0_16, %c0_17] : memref<128x512xf32, #tpu.memory_space<vmem>>, vector<128x128xf32>
    %26 = arith.index_cast %24 : i32 to index
    %c0_18 = arith.constant 0 : index
    %27 = vector.load %arg12[%26, %c0_18] : memref<48x512xf32, #tpu.memory_space<vmem>>, vector<8x128xf32>
    %cst = arith.constant dense<0.000000e+00> : vector<8x128xf32>
    %28 = tpu.matmul %20, %25, %cst {dimension_numbers = #tpu.dot_dimension_numbers<[1], [0], [0], [1], [0, 0, 1, 1], [], []>} : vector<8x128xf32>, vector<128x128xf32>, vector<8x128xf32> -> vector<8x128xf32>
    %29 = arith.addf %27, %28 : vector<8x128xf32>
    %cst_19 = arith.constant 5.000000e-01 : f32
    %30 = vector.broadcast %cst_19 : f32 to vector<8x128xf32>
    %31 = arith.mulf %30, %29 : vector<8x128xf32>
    %32 = math.tanh %31 : vector<8x128xf32>
    %cst_20 = arith.constant 5.000000e-01 : f32
    %33 = vector.broadcast %cst_20 : f32 to vector<8x128xf32>
    %34 = arith.mulf %33, %32 : vector<8x128xf32>
    %cst_21 = arith.constant 5.000000e-01 : f32
    %35 = vector.broadcast %cst_21 : f32 to vector<8x128xf32>
    %36 = arith.addf %34, %35 : vector<8x128xf32>
    %c0_22 = arith.constant 0 : index
    %c256 = arith.constant 256 : index
    %37 = vector.load %arg5[%c0_22, %c256] : memref<128x512xf32, #tpu.memory_space<vmem>>, vector<128x128xf32>
    %38 = arith.index_cast %24 : i32 to index
    %c256_23 = arith.constant 256 : index
    %39 = vector.load %arg12[%38, %c256_23] : memref<48x512xf32, #tpu.memory_space<vmem>>, vector<8x128xf32>
    %cst_24 = arith.constant dense<0.000000e+00> : vector<8x128xf32>
    %40 = tpu.matmul %20, %37, %cst_24 {dimension_numbers = #tpu.dot_dimension_numbers<[1], [0], [0], [1], [0, 0, 1, 1], [], []>} : vector<8x128xf32>, vector<128x128xf32>, vector<8x128xf32> -> vector<8x128xf32>
    %41 = arith.addf %39, %40 : vector<8x128xf32>
    %42 = math.tanh %41 : vector<8x128xf32>
    %43 = arith.mulf %36, %42 : vector<8x128xf32>
    %c0_25 = arith.constant 0 : index
    %c128 = arith.constant 128 : index
    %44 = vector.load %arg5[%c0_25, %c128] : memref<128x512xf32, #tpu.memory_space<vmem>>, vector<128x128xf32>
    %45 = arith.index_cast %24 : i32 to index
    %c128_26 = arith.constant 128 : index
    %46 = vector.load %arg12[%45, %c128_26] : memref<48x512xf32, #tpu.memory_space<vmem>>, vector<8x128xf32>
    %cst_27 = arith.constant dense<0.000000e+00> : vector<8x128xf32>
    %47 = tpu.matmul %20, %44, %cst_27 {dimension_numbers = #tpu.dot_dimension_numbers<[1], [0], [0], [1], [0, 0, 1, 1], [], []>} : vector<8x128xf32>, vector<128x128xf32>, vector<8x128xf32> -> vector<8x128xf32>
    %48 = arith.addf %46, %47 : vector<8x128xf32>
    %cst_28 = arith.constant 5.000000e-01 : f32
    %49 = vector.broadcast %cst_28 : f32 to vector<8x128xf32>
    %50 = arith.mulf %49, %48 : vector<8x128xf32>
    %51 = math.tanh %50 : vector<8x128xf32>
    %cst_29 = arith.constant 5.000000e-01 : f32
    %52 = vector.broadcast %cst_29 : f32 to vector<8x128xf32>
    %53 = arith.mulf %52, %51 : vector<8x128xf32>
    %cst_30 = arith.constant 5.000000e-01 : f32
    %54 = vector.broadcast %cst_30 : f32 to vector<8x128xf32>
    %55 = arith.addf %53, %54 : vector<8x128xf32>
    %56 = arith.mulf %55, %21 : vector<8x128xf32>
    %57 = arith.addf %56, %43 : vector<8x128xf32>
    %c0_31 = arith.constant 0 : index
    %c384 = arith.constant 384 : index
    %58 = vector.load %arg5[%c0_31, %c384] : memref<128x512xf32, #tpu.memory_space<vmem>>, vector<128x128xf32>
    %59 = arith.index_cast %24 : i32 to index
    %c384_32 = arith.constant 384 : index
    %60 = vector.load %arg12[%59, %c384_32] : memref<48x512xf32, #tpu.memory_space<vmem>>, vector<8x128xf32>
    %cst_33 = arith.constant dense<0.000000e+00> : vector<8x128xf32>
    %61 = tpu.matmul %20, %58, %cst_33 {dimension_numbers = #tpu.dot_dimension_numbers<[1], [0], [0], [1], [0, 0, 1, 1], [], []>} : vector<8x128xf32>, vector<128x128xf32>, vector<8x128xf32> -> vector<8x128xf32>
    %62 = arith.addf %60, %61 : vector<8x128xf32>
    %cst_34 = arith.constant 5.000000e-01 : f32
    %63 = vector.broadcast %cst_34 : f32 to vector<8x128xf32>
    %64 = arith.mulf %63, %62 : vector<8x128xf32>
    %65 = math.tanh %64 : vector<8x128xf32>
    %cst_35 = arith.constant 5.000000e-01 : f32
    %66 = vector.broadcast %cst_35 : f32 to vector<8x128xf32>
    %67 = arith.mulf %66, %65 : vector<8x128xf32>
    %cst_36 = arith.constant 5.000000e-01 : f32
    %68 = vector.broadcast %cst_36 : f32 to vector<8x128xf32>
    %69 = arith.addf %67, %68 : vector<8x128xf32>
    %70 = math.tanh %57 : vector<8x128xf32>
    %71 = arith.mulf %69, %70 : vector<8x128xf32>
    %c3_i32_37 = arith.constant 3 : i32
    %72 = arith.muli %arg1, %c3_i32_37 : i32
    %73 = arith.addi %72, %c0_i32_15 : i32
    %c8_i32_38 = arith.constant 8 : i32
    %74 = arith.cmpi slt, %73, %c8_i32_38 : i32
    %75 = arith.select %74, %71, %20 : vector<8x128xf32>
    %76 = arith.select %74, %57, %21 : vector<8x128xf32>
    %77 = arith.index_cast %c0_i32_15 : i32 to index
    %c0_39 = arith.constant 0 : index
    %c0_40 = arith.constant 0 : index
    %78 = vector.load %arg9[%77, %c0_39, %c0_40] : memref<3x8x128xf32, #tpu.memory_space<vmem>>, vector<1x8x128xf32>
    %79 = vector.shape_cast %78 : vector<1x8x128xf32> to vector<8x128xf32>
    %80 = vector.shape_cast %75 : vector<8x128xf32> to vector<1x8x128xf32>
    tpu.vector_store %arg9[%77, %c0_39, %c0_40], %80 {strides = array<i32>} : memref<3x8x128xf32, #tpu.memory_space<vmem>>, vector<1x8x128xf32>,
    %81 = arith.extui %19 : i1 to i32
    %c0_i32_41 = arith.constant 0 : i32
    %82 = arith.cmpi ne, %81, %c0_i32_41 : i32
    scf.if %82 {
      %c8_i32_113 = arith.constant 8 : i32
      %210 = arith.muli %c0_i32_15, %c8_i32_113 : i32
      %211 = arith.addi %12, %210 : i32
      %212 = tpu.assume_multiple %211, 8 : i32
      %213 = arith.index_cast %c0_i32_15 : i32 to index
      %c0_114 = arith.constant 0 : index
      %c0_115 = arith.constant 0 : index
      %214 = vector.load %arg3[%213, %c0_114, %c0_115] : memref<3x8x16xf32, #tpu.memory_space<vmem>>, vector<1x8x16xf32>
      %215 = vector.shape_cast %214 : vector<1x8x16xf32> to vector<8x16xf32>
      %cst_116 = arith.constant dense<0.000000e+00> : vector<8x512xf32>
      %216 = tpu.matmul %215, %14, %cst_116 {dimension_numbers = #tpu.dot_dimension_numbers<[1], [0], [0], [1], [0, 0, 1, 1], [], []>} : vector<8x16xf32>, vector<16x512xf32>, vector<8x512xf32> -> vector<8x512xf32>
      %217 = vector.broadcast %13 : vector<1x512xf32> to vector<8x512xf32>
      %218 = arith.addf %216, %217 : vector<8x512xf32>
      %219 = arith.index_cast %212 : i32 to index
      %c0_117 = arith.constant 0 : index
      %220 = vector.load %arg12[%219, %c0_117] : memref<48x512xf32, #tpu.memory_space<vmem>>, vector<8x512xf32>
      tpu.vector_store %arg12[%219, %c0_117], %218 {strides = array<i32>} : memref<48x512xf32, #tpu.memory_space<vmem>>, vector<8x512xf32>,
    } else {
    }
    %c1_i32_42 = arith.constant 1 : i32
    %c8_i32_43 = arith.constant 8 : i32
    %83 = arith.muli %c1_i32_42, %c8_i32_43 : i32
    %84 = arith.addi %10, %83 : i32
    %85 = tpu.assume_multiple %84, 8 : i32
    %c0_44 = arith.constant 0 : index
    %c0_45 = arith.constant 0 : index
    %86 = vector.load %arg5[%c0_44, %c0_45] : memref<128x512xf32, #tpu.memory_space<vmem>>, vector<128x128xf32>
    %87 = arith.index_cast %85 : i32 to index
    %c0_46 = arith.constant 0 : index
    %88 = vector.load %arg12[%87, %c0_46] : memref<48x512xf32, #tpu.memory_space<vmem>>, vector<8x128xf32>
    %cst_47 = arith.constant dense<0.000000e+00> : vector<8x128xf32>
    %89 = tpu.matmul %75, %86, %cst_47 {dimension_numbers = #tpu.dot_dimension_numbers<[1], [0], [0], [1], [0, 0, 1, 1], [], []>} : vector<8x128xf32>, vector<128x128xf32>, vector<8x128xf32> -> vector<8x128xf32>
    %90 = arith.addf %88, %89 : vector<8x128xf32>
    %cst_48 = arith.constant 5.000000e-01 : f32
    %91 = vector.broadcast %cst_48 : f32 to vector<8x128xf32>
    %92 = arith.mulf %91, %90 : vector<8x128xf32>
    %93 = math.tanh %92 : vector<8x128xf32>
    %cst_49 = arith.constant 5.000000e-01 : f32
    %94 = vector.broadcast %cst_49 : f32 to vector<8x128xf32>
    %95 = arith.mulf %94, %93 : vector<8x128xf32>
    %cst_50 = arith.constant 5.000000e-01 : f32
    %96 = vector.broadcast %cst_50 : f32 to vector<8x128xf32>
    %97 = arith.addf %95, %96 : vector<8x128xf32>
    %c0_51 = arith.constant 0 : index
    %c256_52 = arith.constant 256 : index
    %98 = vector.load %arg5[%c0_51, %c256_52] : memref<128x512xf32, #tpu.memory_space<vmem>>, vector<128x128xf32>
    %99 = arith.index_cast %85 : i32 to index
    %c256_53 = arith.constant 256 : index
    %100 = vector.load %arg12[%99, %c256_53] : memref<48x512xf32, #tpu.memory_space<vmem>>, vector<8x128xf32>
    %cst_54 = arith.constant dense<0.000000e+00> : vector<8x128xf32>
    %101 = tpu.matmul %75, %98, %cst_54 {dimension_numbers = #tpu.dot_dimension_numbers<[1], [0], [0], [1], [0, 0, 1, 1], [], []>} : vector<8x128xf32>, vector<128x128xf32>, vector<8x128xf32> -> vector<8x128xf32>
    %102 = arith.addf %100, %101 : vector<8x128xf32>
    %103 = math.tanh %102 : vector<8x128xf32>
    %104 = arith.mulf %97, %103 : vector<8x128xf32>
    %c0_55 = arith.constant 0 : index
    %c128_56 = arith.constant 128 : index
    %105 = vector.load %arg5[%c0_55, %c128_56] : memref<128x512xf32, #tpu.memory_space<vmem>>, vector<128x128xf32>
    %106 = arith.index_cast %85 : i32 to index
    %c128_57 = arith.constant 128 : index
    %107 = vector.load %arg12[%106, %c128_57] : memref<48x512xf32, #tpu.memory_space<vmem>>, vector<8x128xf32>
    %cst_58 = arith.constant dense<0.000000e+00> : vector<8x128xf32>
    %108 = tpu.matmul %75, %105, %cst_58 {dimension_numbers = #tpu.dot_dimension_numbers<[1], [0], [0], [1], [0, 0, 1, 1], [], []>} : vector<8x128xf32>, vector<128x128xf32>, vector<8x128xf32> -> vector<8x128xf32>
    %109 = arith.addf %107, %108 : vector<8x128xf32>
    %cst_59 = arith.constant 5.000000e-01 : f32
    %110 = vector.broadcast %cst_59 : f32 to vector<8x128xf32>
    %111 = arith.mulf %110, %109 : vector<8x128xf32>
    %112 = math.tanh %111 : vector<8x128xf32>
    %cst_60 = arith.constant 5.000000e-01 : f32
    %113 = vector.broadcast %cst_60 : f32 to vector<8x128xf32>
    %114 = arith.mulf %113, %112 : vector<8x128xf32>
    %cst_61 = arith.constant 5.000000e-01 : f32
    %115 = vector.broadcast %cst_61 : f32 to vector<8x128xf32>
    %116 = arith.addf %114, %115 : vector<8x128xf32>
    %117 = arith.mulf %116, %76 : vector<8x128xf32>
    %118 = arith.addf %117, %104 : vector<8x128xf32>
    %c0_62 = arith.constant 0 : index
    %c384_63 = arith.constant 384 : index
    %119 = vector.load %arg5[%c0_62, %c384_63] : memref<128x512xf32, #tpu.memory_space<vmem>>, vector<128x128xf32>
    %120 = arith.index_cast %85 : i32 to index
    %c384_64 = arith.constant 384 : index
    %121 = vector.load %arg12[%120, %c384_64] : memref<48x512xf32, #tpu.memory_space<vmem>>, vector<8x128xf32>
    %cst_65 = arith.constant dense<0.000000e+00> : vector<8x128xf32>
    %122 = tpu.matmul %75, %119, %cst_65 {dimension_numbers = #tpu.dot_dimension_numbers<[1], [0], [0], [1], [0, 0, 1, 1], [], []>} : vector<8x128xf32>, vector<128x128xf32>, vector<8x128xf32> -> vector<8x128xf32>
    %123 = arith.addf %121, %122 : vector<8x128xf32>
    %cst_66 = arith.constant 5.000000e-01 : f32
    %124 = vector.broadcast %cst_66 : f32 to vector<8x128xf32>
    %125 = arith.mulf %124, %123 : vector<8x128xf32>
    %126 = math.tanh %125 : vector<8x128xf32>
    %cst_67 = arith.constant 5.000000e-01 : f32
    %127 = vector.broadcast %cst_67 : f32 to vector<8x128xf32>
    %128 = arith.mulf %127, %126 : vector<8x128xf32>
    %cst_68 = arith.constant 5.000000e-01 : f32
    %129 = vector.broadcast %cst_68 : f32 to vector<8x128xf32>
    %130 = arith.addf %128, %129 : vector<8x128xf32>
    %131 = math.tanh %118 : vector<8x128xf32>
    %132 = arith.mulf %130, %131 : vector<8x128xf32>
    %c3_i32_69 = arith.constant 3 : i32
    %133 = arith.muli %arg1, %c3_i32_69 : i32
    %134 = arith.addi %133, %c1_i32_42 : i32
    %c8_i32_70 = arith.constant 8 : i32
    %135 = arith.cmpi slt, %134, %c8_i32_70 : i32
    %136 = arith.select %135, %132, %75 : vector<8x128xf32>
    %137 = arith.select %135, %118, %76 : vector<8x128xf32>
    %138 = arith.index_cast %c1_i32_42 : i32 to index
    %c0_71 = arith.constant 0 : index
    %c0_72 = arith.constant 0 : index
    %139 = vector.load %arg9[%138, %c0_71, %c0_72] : memref<3x8x128xf32, #tpu.memory_space<vmem>>, vector<1x8x128xf32>
    %140 = vector.shape_cast %139 : vector<1x8x128xf32> to vector<8x128xf32>
    %141 = vector.shape_cast %136 : vector<8x128xf32> to vector<1x8x128xf32>
    tpu.vector_store %arg9[%138, %c0_71, %c0_72], %141 {strides = array<i32>} : memref<3x8x128xf32, #tpu.memory_space<vmem>>, vector<1x8x128xf32>,
    %142 = arith.extui %19 : i1 to i32
    %c0_i32_73 = arith.constant 0 : i32
    %143 = arith.cmpi ne, %142, %c0_i32_73 : i32
    scf.if %143 {
      %c8_i32_113 = arith.constant 8 : i32
      %210 = arith.muli %c1_i32_42, %c8_i32_113 : i32
      %211 = arith.addi %12, %210 : i32
      %212 = tpu.assume_multiple %211, 8 : i32
      %213 = arith.index_cast %c1_i32_42 : i32 to index
      %c0_114 = arith.constant 0 : index
      %c0_115 = arith.constant 0 : index
      %214 = vector.load %arg3[%213, %c0_114, %c0_115] : memref<3x8x16xf32, #tpu.memory_space<vmem>>, vector<1x8x16xf32>
      %215 = vector.shape_cast %214 : vector<1x8x16xf32> to vector<8x16xf32>
      %cst_116 = arith.constant dense<0.000000e+00> : vector<8x512xf32>
      %216 = tpu.matmul %215, %14, %cst_116 {dimension_numbers = #tpu.dot_dimension_numbers<[1], [0], [0], [1], [0, 0, 1, 1], [], []>} : vector<8x16xf32>, vector<16x512xf32>, vector<8x512xf32> -> vector<8x512xf32>
      %217 = vector.broadcast %13 : vector<1x512xf32> to vector<8x512xf32>
      %218 = arith.addf %216, %217 : vector<8x512xf32>
      %219 = arith.index_cast %212 : i32 to index
      %c0_117 = arith.constant 0 : index
      %220 = vector.load %arg12[%219, %c0_117] : memref<48x512xf32, #tpu.memory_space<vmem>>, vector<8x512xf32>
      tpu.vector_store %arg12[%219, %c0_117], %218 {strides = array<i32>} : memref<48x512xf32, #tpu.memory_space<vmem>>, vector<8x512xf32>,
    } else {
    }
    %c2_i32_74 = arith.constant 2 : i32
    %c8_i32_75 = arith.constant 8 : i32
    %144 = arith.muli %c2_i32_74, %c8_i32_75 : i32
    %145 = arith.addi %10, %144 : i32
    %146 = tpu.assume_multiple %145, 8 : i32
    %c0_76 = arith.constant 0 : index
    %c0_77 = arith.constant 0 : index
    %147 = vector.load %arg5[%c0_76, %c0_77] : memref<128x512xf32, #tpu.memory_space<vmem>>, vector<128x128xf32>
    %148 = arith.index_cast %146 : i32 to index
    %c0_78 = arith.constant 0 : index
    %149 = vector.load %arg12[%148, %c0_78] : memref<48x512xf32, #tpu.memory_space<vmem>>, vector<8x128xf32>
    %cst_79 = arith.constant dense<0.000000e+00> : vector<8x128xf32>
    %150 = tpu.matmul %136, %147, %cst_79 {dimension_numbers = #tpu.dot_dimension_numbers<[1], [0], [0], [1], [0, 0, 1, 1], [], []>} : vector<8x128xf32>, vector<128x128xf32>, vector<8x128xf32> -> vector<8x128xf32>
    %151 = arith.addf %149, %150 : vector<8x128xf32>
    %cst_80 = arith.constant 5.000000e-01 : f32
    %152 = vector.broadcast %cst_80 : f32 to vector<8x128xf32>
    %153 = arith.mulf %152, %151 : vector<8x128xf32>
    %154 = math.tanh %153 : vector<8x128xf32>
    %cst_81 = arith.constant 5.000000e-01 : f32
    %155 = vector.broadcast %cst_81 : f32 to vector<8x128xf32>
    %156 = arith.mulf %155, %154 : vector<8x128xf32>
    %cst_82 = arith.constant 5.000000e-01 : f32
    %157 = vector.broadcast %cst_82 : f32 to vector<8x128xf32>
    %158 = arith.addf %156, %157 : vector<8x128xf32>
    %c0_83 = arith.constant 0 : index
    %c256_84 = arith.constant 256 : index
    %159 = vector.load %arg5[%c0_83, %c256_84] : memref<128x512xf32, #tpu.memory_space<vmem>>, vector<128x128xf32>
    %160 = arith.index_cast %146 : i32 to index
    %c256_85 = arith.constant 256 : index
    %161 = vector.load %arg12[%160, %c256_85] : memref<48x512xf32, #tpu.memory_space<vmem>>, vector<8x128xf32>
    %cst_86 = arith.constant dense<0.000000e+00> : vector<8x128xf32>
    %162 = tpu.matmul %136, %159, %cst_86 {dimension_numbers = #tpu.dot_dimension_numbers<[1], [0], [0], [1], [0, 0, 1, 1], [], []>} : vector<8x128xf32>, vector<128x128xf32>, vector<8x128xf32> -> vector<8x128xf32>
    %163 = arith.addf %161, %162 : vector<8x128xf32>
    %164 = math.tanh %163 : vector<8x128xf32>
    %165 = arith.mulf %158, %164 : vector<8x128xf32>
    %c0_87 = arith.constant 0 : index
    %c128_88 = arith.constant 128 : index
    %166 = vector.load %arg5[%c0_87, %c128_88] : memref<128x512xf32, #tpu.memory_space<vmem>>, vector<128x128xf32>
    %167 = arith.index_cast %146 : i32 to index
    %c128_89 = arith.constant 128 : index
    %168 = vector.load %arg12[%167, %c128_89] : memref<48x512xf32, #tpu.memory_space<vmem>>, vector<8x128xf32>
    %cst_90 = arith.constant dense<0.000000e+00> : vector<8x128xf32>
    %169 = tpu.matmul %136, %166, %cst_90 {dimension_numbers = #tpu.dot_dimension_numbers<[1], [0], [0], [1], [0, 0, 1, 1], [], []>} : vector<8x128xf32>, vector<128x128xf32>, vector<8x128xf32> -> vector<8x128xf32>
    %170 = arith.addf %168, %169 : vector<8x128xf32>
    %cst_91 = arith.constant 5.000000e-01 : f32
    %171 = vector.broadcast %cst_91 : f32 to vector<8x128xf32>
    %172 = arith.mulf %171, %170 : vector<8x128xf32>
    %173 = math.tanh %172 : vector<8x128xf32>
    %cst_92 = arith.constant 5.000000e-01 : f32
    %174 = vector.broadcast %cst_92 : f32 to vector<8x128xf32>
    %175 = arith.mulf %174, %173 : vector<8x128xf32>
    %cst_93 = arith.constant 5.000000e-01 : f32
    %176 = vector.broadcast %cst_93 : f32 to vector<8x128xf32>
    %177 = arith.addf %175, %176 : vector<8x128xf32>
    %178 = arith.mulf %177, %137 : vector<8x128xf32>
    %179 = arith.addf %178, %165 : vector<8x128xf32>
    %c0_94 = arith.constant 0 : index
    %c384_95 = arith.constant 384 : index
    %180 = vector.load %arg5[%c0_94, %c384_95] : memref<128x512xf32, #tpu.memory_space<vmem>>, vector<128x128xf32>
    %181 = arith.index_cast %146 : i32 to index
    %c384_96 = arith.constant 384 : index
    %182 = vector.load %arg12[%181, %c384_96] : memref<48x512xf32, #tpu.memory_space<vmem>>, vector<8x128xf32>
    %cst_97 = arith.constant dense<0.000000e+00> : vector<8x128xf32>
    %183 = tpu.matmul %136, %180, %cst_97 {dimension_numbers = #tpu.dot_dimension_numbers<[1], [0], [0], [1], [0, 0, 1, 1], [], []>} : vector<8x128xf32>, vector<128x128xf32>, vector<8x128xf32> -> vector<8x128xf32>
    %184 = arith.addf %182, %183 : vector<8x128xf32>
    %cst_98 = arith.constant 5.000000e-01 : f32
    %185 = vector.broadcast %cst_98 : f32 to vector<8x128xf32>
    %186 = arith.mulf %185, %184 : vector<8x128xf32>
    %187 = math.tanh %186 : vector<8x128xf32>
    %cst_99 = arith.constant 5.000000e-01 : f32
    %188 = vector.broadcast %cst_99 : f32 to vector<8x128xf32>
    %189 = arith.mulf %188, %187 : vector<8x128xf32>
    %cst_100 = arith.constant 5.000000e-01 : f32
    %190 = vector.broadcast %cst_100 : f32 to vector<8x128xf32>
    %191 = arith.addf %189, %190 : vector<8x128xf32>
    %192 = math.tanh %179 : vector<8x128xf32>
    %193 = arith.mulf %191, %192 : vector<8x128xf32>
    %c3_i32_101 = arith.constant 3 : i32
    %194 = arith.muli %arg1, %c3_i32_101 : i32
    %195 = arith.addi %194, %c2_i32_74 : i32
    %c8_i32_102 = arith.constant 8 : i32
    %196 = arith.cmpi slt, %195, %c8_i32_102 : i32
    %197 = arith.select %196, %193, %136 : vector<8x128xf32>
    %198 = arith.select %196, %179, %137 : vector<8x128xf32>
    %199 = arith.index_cast %c2_i32_74 : i32 to index
    %c0_103 = arith.constant 0 : index
    %c0_104 = arith.constant 0 : index
    %200 = vector.load %arg9[%199, %c0_103, %c0_104] : memref<3x8x128xf32, #tpu.memory_space<vmem>>, vector<1x8x128xf32>
    %201 = vector.shape_cast %200 : vector<1x8x128xf32> to vector<8x128xf32>
    %202 = vector.shape_cast %197 : vector<8x128xf32> to vector<1x8x128xf32>
    tpu.vector_store %arg9[%199, %c0_103, %c0_104], %202 {strides = array<i32>} : memref<3x8x128xf32, #tpu.memory_space<vmem>>, vector<1x8x128xf32>,
    %203 = arith.extui %19 : i1 to i32
    %c0_i32_105 = arith.constant 0 : i32
    %204 = arith.cmpi ne, %203, %c0_i32_105 : i32
    scf.if %204 {
      %c8_i32_113 = arith.constant 8 : i32
      %210 = arith.muli %c2_i32_74, %c8_i32_113 : i32
      %211 = arith.addi %12, %210 : i32
      %212 = tpu.assume_multiple %211, 8 : i32
      %213 = arith.index_cast %c2_i32_74 : i32 to index
      %c0_114 = arith.constant 0 : index
      %c0_115 = arith.constant 0 : index
      %214 = vector.load %arg3[%213, %c0_114, %c0_115] : memref<3x8x16xf32, #tpu.memory_space<vmem>>, vector<1x8x16xf32>
      %215 = vector.shape_cast %214 : vector<1x8x16xf32> to vector<8x16xf32>
      %cst_116 = arith.constant dense<0.000000e+00> : vector<8x512xf32>
      %216 = tpu.matmul %215, %14, %cst_116 {dimension_numbers = #tpu.dot_dimension_numbers<[1], [0], [0], [1], [0, 0, 1, 1], [], []>} : vector<8x16xf32>, vector<16x512xf32>, vector<8x512xf32> -> vector<8x512xf32>
      %217 = vector.broadcast %13 : vector<1x512xf32> to vector<8x512xf32>
      %218 = arith.addf %216, %217 : vector<8x512xf32>
      %219 = arith.index_cast %212 : i32 to index
      %c0_117 = arith.constant 0 : index
      %220 = vector.load %arg12[%219, %c0_117] : memref<48x512xf32, #tpu.memory_space<vmem>>, vector<8x512xf32>
      tpu.vector_store %arg12[%219, %c0_117], %218 {strides = array<i32>} : memref<48x512xf32, #tpu.memory_space<vmem>>, vector<8x512xf32>,
    } else {
    }
    %c3_i32_106 = arith.constant 3 : i32
    %c0_107 = arith.constant 0 : index
    %c0_108 = arith.constant 0 : index
    %205 = vector.load %arg13[%c0_107, %c0_108] : memref<8x128xf32, #tpu.memory_space<vmem>>, vector<8x128xf32>
    tpu.vector_store %arg13[%c0_107, %c0_108], %197 {strides = array<i32>} : memref<8x128xf32, #tpu.memory_space<vmem>>, vector<8x128xf32>,
    %c0_109 = arith.constant 0 : index
    %c0_110 = arith.constant 0 : index
    %206 = vector.load %arg14[%c0_109, %c0_110] : memref<8x128xf32, #tpu.memory_space<vmem>>, vector<8x128xf32>
    tpu.vector_store %arg14[%c0_109, %c0_110], %198 {strides = array<i32>} : memref<8x128xf32, #tpu.memory_space<vmem>>, vector<8x128xf32>,
    %c2_i32_111 = arith.constant 2 : i32
    %207 = arith.cmpi eq, %arg1, %c2_i32_111 : i32
    %208 = arith.extui %207 : i1 to i32
    %c0_i32_112 = arith.constant 0 : i32
    %209 = arith.cmpi ne, %208, %c0_i32_112 : i32
    scf.if %209 {
      %c0_113 = arith.constant 0 : index
      %c0_114 = arith.constant 0 : index
      %210 = vector.load %arg10[%c0_113, %c0_114] : memref<8x128xf32, #tpu.memory_space<vmem>>, vector<8x128xf32>
      tpu.vector_store %arg10[%c0_113, %c0_114], %197 {strides = array<i32>} : memref<8x128xf32, #tpu.memory_space<vmem>>, vector<8x128xf32>,
      %c0_115 = arith.constant 0 : index
      %c0_116 = arith.constant 0 : index
      %211 = vector.load %arg11[%c0_115, %c0_116] : memref<8x128xf32, #tpu.memory_space<vmem>>, vector<8x128xf32>
      tpu.vector_store %arg11[%c0_115, %c0_116], %198 {strides = array<i32>} : memref<8x128xf32, #tpu.memory_space<vmem>>, vector<8x128xf32>,
    } else {
    }
    return
  }
  func.func @transform_0(%arg0: i32, %arg1: i32) -> (i32, i32, i32) {
    %c0_i32 = arith.constant 0 : i32
    %c0_i32_0 = arith.constant 0 : i32
    %c0_i32_1 = arith.constant 0 : i32
    return %c0_i32, %arg0, %c0_i32_0 : i32, i32, i32
  }
  func.func @transform_1(%arg0: i32, %arg1: i32) -> (i32, i32, i32) {
    %c1_i32 = arith.constant 1 : i32
    %0 = arith.addi %arg1, %c1_i32 : i32
    %c2_i32 = arith.constant 2 : i32
    %1 = arith.minsi %0, %c2_i32 : i32
    %c0_i32 = arith.constant 0 : i32
    %c0_i32_0 = arith.constant 0 : i32
    return %1, %arg0, %c0_i32 : i32, i32, i32
  }
  func.func @transform_2(%arg0: i32, %arg1: i32) -> (i32, i32) {
    %c0_i32 = arith.constant 0 : i32
    %c0_i32_0 = arith.constant 0 : i32
    %c0_i32_1 = arith.constant 0 : i32
    return %c0_i32, %c0_i32_0 : i32, i32
  }
  func.func @transform_3(%arg0: i32, %arg1: i32) -> (i32, i32) {
    %c0_i32 = arith.constant 0 : i32
    %c0_i32_0 = arith.constant 0 : i32
    %c0_i32_1 = arith.constant 0 : i32
    return %c0_i32, %c0_i32_0 : i32, i32
  }
  func.func @transform_4(%arg0: i32, %arg1: i32) -> (i32, i32) {
    %c0_i32 = arith.constant 0 : i32
    %c0_i32_0 = arith.constant 0 : i32
    %c0_i32_1 = arith.constant 0 : i32
    return %c0_i32, %c0_i32_0 : i32, i32
  }
  func.func @transform_5(%arg0: i32, %arg1: i32) -> (i32, i32) {
    %c0_i32 = arith.constant 0 : i32
    %c0_i32_0 = arith.constant 0 : i32
    return %arg0, %c0_i32 : i32, i32
  }
  func.func @transform_6(%arg0: i32, %arg1: i32) -> (i32, i32) {
    %c0_i32 = arith.constant 0 : i32
    %c0_i32_0 = arith.constant 0 : i32
    return %arg0, %c0_i32 : i32, i32
  }
  func.func @transform_7(%arg0: i32, %arg1: i32) -> (i32, i32, i32) {
    %c0_i32 = arith.constant 0 : i32
    %c0_i32_0 = arith.constant 0 : i32
    return %arg1, %arg0, %c0_i32 : i32, i32, i32
  }
  func.func @transform_8(%arg0: i32, %arg1: i32) -> (i32, i32) {
    %c0_i32 = arith.constant 0 : i32
    %c0_i32_0 = arith.constant 0 : i32
    return %arg0, %c0_i32 : i32, i32
  }
  func.func @transform_9(%arg0: i32, %arg1: i32) -> (i32, i32) {
    %c0_i32 = arith.constant 0 : i32
    %c0_i32_0 = arith.constant 0 : i32
    return %arg0, %c0_i32 : i32, i32
  }
}

</mosaic_0001>

<llo_original>
// kernel: tpu_custom_call.1
$region0: #{tpu_custom_call.1}
  #allocation0 [shape = 'u32[]', space=smem, size = 0x4, offset = 0x4, fixed_abs, tag = 'smem constant byte address 0x4 - core index']
  #allocation1 [shape = 'u32[144,128]{1,0:T(1,128)}', space=vmem, size = 0x12000, scoped, tag = 'internal scratch']
  #allocation2 [shape = 'f32[48,512]{1,0:T(8,128)}', space=vmem, size = 0x18000, scoped, tag = 'scratch operand']
  #allocation3 [shape = 'f32[8,128]{1,0:T(8,128)}', space=vmem, size = 0x1000, scoped, tag = 'scratch operand']
  #allocation4 [shape = 'f32[8,128]{1,0:T(8,128)}', space=vmem, size = 0x1000, scoped, tag = 'scratch operand']
  %s0 = inlined_call_operand.hbm [shape: f32[9,8,16], index: 0, kind: input, shape index: {}]
  %s1 = inlined_call_operand.hbm [shape: f32[9,8,16], index: 1, kind: input, shape index: {}]
  %s2 = inlined_call_operand.hbm [shape: f32[16,512], index: 2, kind: input, shape index: {}]
  %s3 = inlined_call_operand.hbm [shape: f32[128,512], index: 3, kind: input, shape index: {}]
  %s4 = inlined_call_operand.hbm [shape: f32[1,512], index: 4, kind: input, shape index: {}]
  %s5 = inlined_call_operand.vmem [shape: f32[8,128], index: 5, kind: input, shape index: {}]
  %s6 = inlined_call_operand.vmem [shape: f32[8,128], index: 6, kind: input, shape index: {}]
  %s7 = inlined_call_operand.hbm [shape: f32[9,8,128], index: 7, kind: output, shape index: {0}]
  %s8 = inlined_call_operand.hbm [shape: f32[8,128], index: 8, kind: output, shape index: {1}]
  %s9 = inlined_call_operand.hbm [shape: f32[8,128], index: 9, kind: output, shape index: {2}]
  %10 = xla_tuple %s7, %s8, %s9
  %s11 = sld [smem:[#allocation0]]
  $region117: #{tpu_custom_call.1} parent=0
    _
  %s13 = ssub.s32 1, %s11
  %s14 = scalar_select 0, %s13, %s11
  $region1: #{tpu_custom_call.1} parent=0
    #allocation5 [shape = 'u8[12288]{0}', space=vmem, size = 0x3000, scoped, tag = 'input window, operand 0, single buffered']
    #allocation6 [shape = 's32[2]{0}', space=sflag, size = 0x8, scoped, tag = 'scoped memory for tpu_custom_call.1']
    #allocation7 [shape = 's32[2]{0}', space=sflag, size = 0x8, scoped, tag = 'scoped memory for tpu_custom_call.1']
    #allocation8 [shape = 'u8[24576]{0}', space=vmem, size = 0x6000, scoped, tag = 'input window, operand 1']
    #allocation9 [shape = 's32[2]{0}', space=sflag, size = 0x8, scoped, tag = 'scoped memory for tpu_custom_call.1']
    #allocation10 [shape = 'u8[32768]{0}', space=vmem, size = 0x8000, scoped, tag = 'input window, operand 2, single buffered']
    #allocation11 [shape = 'u8[262144]{0}', space=vmem, size = 0x40000, scoped, tag = 'input window, operand 3, single buffered']
    #allocation12 [shape = 's32[1]{0}', space=sflag, size = 0x4, scoped, tag = 'scoped memory for tpu_custom_call.1']
    #allocation13 [shape = 'u8[2048]{0}', space=vmem, size = 0x800, scoped, tag = 'input window, operand 4, single buffered']
    #allocation14 [shape = 'u8[24576]{0}', space=vmem, size = 0x6000, scoped, tag = 'output window, operand 0']
    #allocation15 [shape = 'u8[4096]{0}', space=vmem, size = 0x1000, scoped, tag = 'output window, operand 1, single buffered']
    #allocation16 [shape = 's32[1]{0}', space=sflag, size = 0x4, scoped, tag = 'scoped memory for tpu_custom_call.1']
    #allocation17 [shape = 'u8[4096]{0}', space=vmem, size = 0x1000, scoped, tag = 'output window, operand 2, single buffered']
    %15 = vsyncpa [#allocation6], 0
    %16 = vsyncpa [#allocation9], 0
    %s17 = scalar_lea.sflag [#allocation9], 1
    %18 = vsyncpa %s17, 0
    %19 = vsyncpa [#allocation12], 0
    %20 = vsyncpa [#allocation7], 0
    %s21 = scalar_lea.sflag [#allocation7], 1
    %22 = vsyncpa %s21, 0
    %23 = vsyncpa [#allocation16], 0
    loop: start=0, step=1, limit=5
    $region2: #{tpu_custom_call.1} parent=1 // loop_pre_header
      _
    $region3: #{tpu_custom_call.1} parent=1 // loop_header
      %s25 = sphi 0, %s29
      %p26 = scmp.ge.s32.totalorder %s25, 5
      %s32 = sphi 0, %s44
      %s33 = sphi 0, %s40
      %s34 = sphi 0, %s32
      %s35 = sphi 0, %s33
      %s36 = sphi 0, %s34
      %s37 = sphi 0, %s35
      %s47 = sphi 0, %s49
      %s50 = sphi 0, %s47
      %s51 = sphi 0, %s50
      %s67 = sphi 0, %s51
      %s81 = sphi 0, %s83
      %s84 = sphi 0, %s81
      %s85 = sphi 0, %s84
      %s101 = sphi 0, %s85
      %s105 = sphi 0, %s105
      %s107 = sphi 0, %s105
      %s108 = sphi 0, %s107
      %s122 = sphi 0, %s108
      %s126 = sphi 0, %s126
      %s128 = sphi 0, %s126
      %s129 = sphi 0, %s128
      %s143 = sphi 0, %s129
      %s147 = sphi 0, %s147
      %s149 = sphi 0, %s147
      %s150 = sphi 0, %s149
      %s164 = sphi 0, %s150
      %s170 = sphi 0, %s172
      %s173 = sphi 0, %s170
      %s174 = sphi 0, %s173
      %s190 = sphi 0, %s174
      %s196 = sphi 0, %s198
      %s199 = sphi 0, %s196
      %s200 = sphi 0, %s199
      %s216 = sphi 0, %s200
      %s224 = sphi 0, %s226
      %s227 = sphi 0, %s224
      %s228 = sphi 0, %s227
      %s244 = sphi 0, %s228
      %s250 = sphi 0, %s252
      %s253 = sphi 0, %s250
      %s254 = sphi 0, %s253
      %s270 = sphi 0, %s254
      %s276 = sphi 0, %s278
      %s279 = sphi 0, %s276
      %s280 = sphi 0, %s279
      %s296 = sphi 0, %s280
    $region4: #{tpu_custom_call.1} parent=1 // loop_header_branch
      %28 = sbr.rel (%p26) target = $region8
    $region5: #{tpu_custom_call.1} parent=1 // loop_body
      %s30 = ssub.s32 %s25, 1
      %s31 = ssub.s32 %s25, 2
      %s38 = sadd.s32 1, %s33
      %p39 = scmp.ge.s32.totalorder %s38, 3
      %s40 = scalar_select %p39, 0, %s38
      %s41 = sadd.s32 1, %s32
      %s42 = scalar_select %p39, %s41, %s32
      %p43 = scmp.ge.s32.totalorder %s42, 1
      %s44 = scalar_select %p43, 0, %s42
      %s45 = ssub.s32 %s32, %s44
      %p46 = scmp.eq.s32.totalorder %s45, 0
      %s48 = sadd.s32 %s47, 1
      %s49 = scalar_select %p46, %s47, %s48
      %p52 = pneg %p46
      %p53 = scmp.eq.s32.totalorder %s25, 2
      %p54 = por %p52, %p53
      %p55 = scmp.ne.s32.totalorder %s47, %s50
      %p56 = scmp.eq.s32.totalorder %s25, 0
      %p57 = por %p55, %p56
      %p58 = scmp.ne.s32.totalorder %s47, %s50
      %p59 = scmp.eq.s32.totalorder %s30, 2
      %p60 = por %p58, %p59
      %p61 = scmp.ne.s32.totalorder %s50, %s51
      %p62 = scmp.eq.s32.totalorder %s30, 0
      %p63 = por %p61, %p62
      %p64 = scmp.ne.s32.totalorder %s50, %s51
      %p65 = scmp.eq.s32.totalorder %s31, 2
      %p66 = por %p64, %p65
      %p68 = scmp.ne.s32.totalorder %s51, %s67
      %p69 = scmp.eq.s32.totalorder %s31, 0
      %p70 = por %p68, %p69
      %s71 = sadd.s32 %s33, 1
      %p72 = scmp.lt.s32.totalorder %s71, 2
      %s73 = scalar_select %p72, %s71, 2
      %s74 = sadd.s32 %s40, 1
      %p75 = scmp.lt.s32.totalorder %s74, 2
      %s76 = scalar_select %p75, %s74, 2
      %s77 = ssub.s32 %s73, %s76
      %s78 = ssub.s32 %s32, %s44
      %s79 = sor.u32 %s77, %s78
      %p80 = scmp.eq.s32.totalorder %s79, 0
      %s82 = sadd.s32 %s81, 1
      %s83 = scalar_select %p80, %s81, %s82
      %p86 = pneg %p80
      %p87 = scmp.eq.s32.totalorder %s25, 2
      %p88 = por %p86, %p87
      %p89 = scmp.ne.s32.totalorder %s81, %s84
      %p90 = scmp.eq.s32.totalorder %s25, 0
      %p91 = por %p89, %p90
      %p92 = scmp.ne.s32.totalorder %s81, %s84
      %p93 = scmp.eq.s32.totalorder %s30, 2
      %p94 = por %p92, %p93
      %p95 = scmp.ne.s32.totalorder %s84, %s85
      %p96 = scmp.eq.s32.totalorder %s30, 0
      %p97 = por %p95, %p96
      %p98 = scmp.ne.s32.totalorder %s84, %s85
      %p99 = scmp.eq.s32.totalorder %s31, 2
      %p100 = por %p98, %p99
      %p102 = scmp.ne.s32.totalorder %s85, %s101
      %p103 = scmp.eq.s32.totalorder %s31, 0
      %p104 = por %p102, %p103
      %s106 = sadd.s32 %s105, 1
      %p109 = scmp.eq.s32.totalorder %s25, 2
      %p110 = scmp.ne.s32.totalorder %s105, %s107
      %p111 = scmp.eq.s32.totalorder %s25, 0
      %p112 = por %p110, %p111
      %p113 = scmp.ne.s32.totalorder %s105, %s107
      %p114 = scmp.eq.s32.totalorder %s30, 2
      %p115 = por %p113, %p114
      %p116 = scmp.ne.s32.totalorder %s107, %s108
      %p117 = scmp.eq.s32.totalorder %s30, 0
      %p118 = por %p116, %p117
      %p119 = scmp.ne.s32.totalorder %s107, %s108
      %p120 = scmp.eq.s32.totalorder %s31, 2
      %p121 = por %p119, %p120
      %p123 = scmp.ne.s32.totalorder %s108, %s122
      %p124 = scmp.eq.s32.totalorder %s31, 0
      %p125 = por %p123, %p124
      %s127 = sadd.s32 %s126, 1
      %p130 = scmp.eq.s32.totalorder %s25, 2
      %p131 = scmp.ne.s32.totalorder %s126, %s128
      %p132 = scmp.eq.s32.totalorder %s25, 0
      %p133 = por %p131, %p132
      %p134 = scmp.ne.s32.totalorder %s126, %s128
      %p135 = scmp.eq.s32.totalorder %s30, 2
      %p136 = por %p134, %p135
      %p137 = scmp.ne.s32.totalorder %s128, %s129
      %p138 = scmp.eq.s32.totalorder %s30, 0
      %p139 = por %p137, %p138
      %p140 = scmp.ne.s32.totalorder %s128, %s129
      %p141 = scmp.eq.s32.totalorder %s31, 2
      %p142 = por %p140, %p141
      %p144 = scmp.ne.s32.totalorder %s129, %s143
      %p145 = scmp.eq.s32.totalorder %s31, 0
      %p146 = por %p144, %p145
      %s148 = sadd.s32 %s147, 1
      %p151 = scmp.eq.s32.totalorder %s25, 2
      %p152 = scmp.ne.s32.totalorder %s147, %s149
      %p153 = scmp.eq.s32.totalorder %s25, 0
      %p154 = por %p152, %p153
      %p155 = scmp.ne.s32.totalorder %s147, %s149
      %p156 = scmp.eq.s32.totalorder %s30, 2
      %p157 = por %p155, %p156
      %p158 = scmp.ne.s32.totalorder %s149, %s150
      %p159 = scmp.eq.s32.totalorder %s30, 0
      %p160 = por %p158, %p159
      %p161 = scmp.ne.s32.totalorder %s149, %s150
      %p162 = scmp.eq.s32.totalorder %s31, 2
      %p163 = por %p161, %p162
      %p165 = scmp.ne.s32.totalorder %s150, %s164
      %p166 = scmp.eq.s32.totalorder %s31, 0
      %p167 = por %p165, %p166
      %s168 = ssub.s32 %s32, %s44
      %p169 = scmp.eq.s32.totalorder %s168, 0
      %s171 = sadd.s32 %s170, 1
      %s172 = scalar_select %p169, %s170, %s171
      %p175 = pneg %p169
      %p176 = scmp.eq.s32.totalorder %s25, 2
      %p177 = por %p175, %p176
      %p178 = scmp.ne.s32.totalorder %s170, %s173
      %p179 = scmp.eq.s32.totalorder %s25, 0
      %p180 = por %p178, %p179
      %p181 = scmp.ne.s32.totalorder %s170, %s173
      %p182 = scmp.eq.s32.totalorder %s30, 2
      %p183 = por %p181, %p182
      %p184 = scmp.ne.s32.totalorder %s173, %s174
      %p185 = scmp.eq.s32.totalorder %s30, 0
      %p186 = por %p184, %p185
      %p187 = scmp.ne.s32.totalorder %s173, %s174
      %p188 = scmp.eq.s32.totalorder %s31, 2
      %p189 = por %p187, %p188
      %p191 = scmp.ne.s32.totalorder %s174, %s190
      %p192 = scmp.eq.s32.totalorder %s31, 0
      %p193 = por %p191, %p192
      %s194 = ssub.s32 %s32, %s44
      %p195 = scmp.eq.s32.totalorder %s194, 0
      %s197 = sadd.s32 %s196, 1
      %s198 = scalar_select %p195, %s196, %s197
      %p201 = pneg %p195
      %p202 = scmp.eq.s32.totalorder %s25, 2
      %p203 = por %p201, %p202
      %p204 = scmp.ne.s32.totalorder %s196, %s199
      %p205 = scmp.eq.s32.totalorder %s25, 0
      %p206 = por %p204, %p205
      %p207 = scmp.ne.s32.totalorder %s196, %s199
      %p208 = scmp.eq.s32.totalorder %s30, 2
      %p209 = por %p207, %p208
      %p210 = scmp.ne.s32.totalorder %s199, %s200
      %p211 = scmp.eq.s32.totalorder %s30, 0
      %p212 = por %p210, %p211
      %p213 = scmp.ne.s32.totalorder %s199, %s200
      %p214 = scmp.eq.s32.totalorder %s31, 2
      %p215 = por %p213, %p214
      %p217 = scmp.ne.s32.totalorder %s200, %s216
      %p218 = scmp.eq.s32.totalorder %s31, 0
      %p219 = por %p217, %p218
      %s220 = ssub.s32 %s33, %s40
      %s221 = ssub.s32 %s32, %s44
      %s222 = sor.u32 %s220, %s221
      %p223 = scmp.eq.s32.totalorder %s222, 0
      %s225 = sadd.s32 %s224, 1
      %s226 = scalar_select %p223, %s224, %s225
      %p229 = pneg %p223
      %p230 = scmp.eq.s32.totalorder %s25, 2
      %p231 = por %p229, %p230
      %p232 = scmp.ne.s32.totalorder %s224, %s227
      %p233 = scmp.eq.s32.totalorder %s25, 0
      %p234 = por %p232, %p233
      %p235 = scmp.ne.s32.totalorder %s224, %s227
      %p236 = scmp.eq.s32.totalorder %s30, 2
      %p237 = por %p235, %p236
      %p238 = scmp.ne.s32.totalorder %s227, %s228
      %p239 = scmp.eq.s32.totalorder %s30, 0
      %p240 = por %p238, %p239
      %p241 = scmp.ne.s32.totalorder %s227, %s228
      %p242 = scmp.eq.s32.totalorder %s31, 2
      %p243 = por %p241, %p242
      %p245 = scmp.ne.s32.totalorder %s228, %s244
      %p246 = scmp.eq.s32.totalorder %s31, 0
      %p247 = por %p245, %p246
      %s248 = ssub.s32 %s32, %s44
      %p249 = scmp.eq.s32.totalorder %s248, 0
      %s251 = sadd.s32 %s250, 1
      %s252 = scalar_select %p249, %s250, %s251
      %p255 = pneg %p249
      %p256 = scmp.eq.s32.totalorder %s25, 2
      %p257 = por %p255, %p256
      %p258 = scmp.ne.s32.totalorder %s250, %s253
      %p259 = scmp.eq.s32.totalorder %s25, 0
      %p260 = por %p258, %p259
      %p261 = scmp.ne.s32.totalorder %s250, %s253
      %p262 = scmp.eq.s32.totalorder %s30, 2
      %p263 = por %p261, %p262
      %p264 = scmp.ne.s32.totalorder %s253, %s254
      %p265 = scmp.eq.s32.totalorder %s30, 0
      %p266 = por %p264, %p265
      %p267 = scmp.ne.s32.totalorder %s253, %s254
      %p268 = scmp.eq.s32.totalorder %s31, 2
      %p269 = por %p267, %p268
      %p271 = scmp.ne.s32.totalorder %s254, %s270
      %p272 = scmp.eq.s32.totalorder %s31, 0
      %p273 = por %p271, %p272
      %s274 = ssub.s32 %s32, %s44
      %p275 = scmp.eq.s32.totalorder %s274, 0
      %s277 = sadd.s32 %s276, 1
      %s278 = scalar_select %p275, %s276, %s277
      %p281 = pneg %p275
      %p282 = scmp.eq.s32.totalorder %s25, 2
      %p283 = por %p281, %p282
      %p284 = scmp.ne.s32.totalorder %s276, %s279
      %p285 = scmp.eq.s32.totalorder %s25, 0
      %p286 = por %p284, %p285
      %p287 = scmp.ne.s32.totalorder %s276, %s279
      %p288 = scmp.eq.s32.totalorder %s30, 2
      %p289 = por %p287, %p288
      %p290 = scmp.ne.s32.totalorder %s279, %s280
      %p291 = scmp.eq.s32.totalorder %s30, 0
      %p292 = por %p290, %p291
      %p293 = scmp.ne.s32.totalorder %s279, %s280
      %p294 = scmp.eq.s32.totalorder %s31, 2
      %p295 = por %p293, %p294
      %p297 = scmp.ne.s32.totalorder %s280, %s296
      %p298 = scmp.eq.s32.totalorder %s31, 0
      %p299 = por %p297, %p298
      %p300 = scmp.le.s32.totalorder 1, %s25
      %p301 = scmp.lt.s32.totalorder %s25, 4
      %p302 = pnand %p300, %p301
      %p303 = pneg %p302
      // Predicated region
      $region9: #{tpu_custom_call.1} parent=5 // pred_check
        _
      $region10: #{tpu_custom_call.1} parent=5 // pred_check_branch
        %305 = sbr.rel (%p302) target = $region12
      $region11: #{tpu_custom_call.1} parent=5 // pred_region
        %s306 = ssub.s32 %s25, 1
        // Predicated region
        $region13: #{tpu_custom_call.1} parent=11 // pred_check
          %p307 = pneg %p63
        $region14: #{tpu_custom_call.1} parent=11 // pred_check_branch
          %309 = sbr.rel (%p307) target = $region16
        $region15: #{tpu_custom_call.1} parent=11 // pred_region
          %s311 = ssub.s32 384, 384
          %312 = vsyncadd [#allocation6], %s311
          %s313 = smul.addr %s34, 128
          %s314 = scalar_lea.hbm %s0, %s313
          %s315 = sshll.u32 [#allocation5], 4
          %s316 = int_to_ptr.vmem [resolvable:$true] %s315
          %321 = dma.hbm_to_vmem [thread:$0]  %s314, 384, %s316, [#allocation6], 128, 128, 8
        $region16: #{tpu_custom_call.1} parent=11 // pred_fallthru
          _
        // Predicated region
        $region17: #{tpu_custom_call.1} parent=11 // pred_check
          %p322 = pneg %p118
        $region18: #{tpu_custom_call.1} parent=11 // pred_check_branch
          %324 = sbr.rel (%p322) target = $region20
        $region19: #{tpu_custom_call.1} parent=11 // pred_region
          %s326 = ssub.s32 1024, 1024
          %327 = vsyncadd [#allocation9], %s326
          %s328 = sshll.u32 [#allocation10], 4
          %s329 = int_to_ptr.vmem [resolvable:$true] %s328
          %334 = dma.hbm_to_vmem [thread:$0]  %s2, 1024, %s329, [#allocation9], 512, 512, 32
        $region20: #{tpu_custom_call.1} parent=11 // pred_fallthru
          _
        // Predicated region
        $region21: #{tpu_custom_call.1} parent=11 // pred_check
          %p335 = pneg %p139
        $region22: #{tpu_custom_call.1} parent=11 // pred_check_branch
          %337 = sbr.rel (%p335) target = $region24
        $region23: #{tpu_custom_call.1} parent=11 // pred_region
          %s339 = ssub.s32 8192, 8192
          %340 = vsyncadd [#allocation12], %s339
          %s341 = sshll.u32 [#allocation11], 4
          %s342 = int_to_ptr.vmem [resolvable:$true] %s341
          %347 = dma.hbm_to_vmem [thread:$0]  %s3, 8192, %s342, [#allocation12], 512, 512, 32
        $region24: #{tpu_custom_call.1} parent=11 // pred_fallthru
          _
        // Predicated region
        $region25: #{tpu_custom_call.1} parent=11 // pred_check
          %p348 = pneg %p160
        $region26: #{tpu_custom_call.1} parent=11 // pred_check_branch
          %350 = sbr.rel (%p348) target = $region28
        $region27: #{tpu_custom_call.1} parent=11 // pred_region
          %s352 = ssub.s32 64, 64
          %353 = vsyncadd [#allocation12], %s352
          %s355 = sshll.u32 [#allocation13], 4
          %s356 = int_to_ptr.vmem [resolvable:$true] %s355
          %358 = dma.hbm_to_vmem [thread:$0]  %s4, 64, %s356, [#allocation12]
        $region28: #{tpu_custom_call.1} parent=11 // pred_fallthru
          _
        // Predicated region
        $region29: #{tpu_custom_call.1} parent=11 // pred_check
          %p359 = pneg %p186
        $region30: #{tpu_custom_call.1} parent=11 // pred_check_branch
          %361 = sbr.rel (%p359) target = $region32
        $region31: #{tpu_custom_call.1} parent=11 // pred_region
          %p362 = scmp.lt.s32.totalorder %s34, 0
          %s363 = scalar_select %p362, %s34, 0
          %s364 = smul.addr %s363, 8
          %s365 = scalar_lea.vmem %s5, %s364
        $region32: #{tpu_custom_call.1} parent=11 // pred_fallthru
          _
        // Predicated region
        $region33: #{tpu_custom_call.1} parent=11 // pred_check
          %p366 = pneg %p212
        $region34: #{tpu_custom_call.1} parent=11 // pred_check_branch
          %368 = sbr.rel (%p366) target = $region36
        $region35: #{tpu_custom_call.1} parent=11 // pred_region
          %p369 = scmp.lt.s32.totalorder %s34, 0
          %s370 = scalar_select %p369, %s34, 0
          %s371 = smul.addr %s370, 8
          %s372 = scalar_lea.vmem %s6, %s371
        $region36: #{tpu_custom_call.1} parent=11 // pred_fallthru
          _
      $region12: #{tpu_custom_call.1} parent=5 // pred_fallthru
        _
      %p373 = scmp.lt.s32.totalorder %s25, 3
      // Predicated region
      $region37: #{tpu_custom_call.1} parent=5 // pred_check
        %p374 = pneg %p373
      $region38: #{tpu_custom_call.1} parent=5 // pred_check_branch
        %376 = sbr.rel (%p374) target = $region40
      $region39: #{tpu_custom_call.1} parent=5 // pred_region
        // Predicated region
        $region41: #{tpu_custom_call.1} parent=39 // pred_check
          %p377 = pneg %p91
        $region42: #{tpu_custom_call.1} parent=39 // pred_check_branch
          %379 = sbr.rel (%p377) target = $region44
        $region43: #{tpu_custom_call.1} parent=39 // pred_region
          %s380 = sand.u32 %s25, 1
          %s381 = scalar_lea.sflag [#allocation9], %s380
          %s382 = sand.u32 %s81, 1
          %s383 = smul.addr %s382, 24
          %s384 = scalar_lea.vmem [#allocation8], %s383
          %s385 = sadd.s32 %s33, 1
          %p386 = scmp.lt.s32.totalorder %s385, 2
          %s387 = scalar_select %p386, %s385, 2
          %s388 = smul.u32 3, %s387
          %s390 = ssub.s32 384, 384
          %391 = vsyncadd %s381, %s390
          %s392 = sadd.s32 %s32, %s388
          %s393 = smul.addr %s392, 128
          %s394 = scalar_lea.hbm %s1, %s393
          %s395 = sshll.u32 %s384, 4
          %s396 = int_to_ptr.vmem [resolvable:$true] %s395
          %401 = dma.hbm_to_vmem [thread:$0]  %s394, 384, %s396, %s381, 128, 128, 8
        $region44: #{tpu_custom_call.1} parent=39 // pred_fallthru
          _
      $region40: #{tpu_custom_call.1} parent=5 // pred_fallthru
        _
      %p402 = scmp.le.s32.totalorder 1, %s25
      %p403 = scmp.lt.s32.totalorder %s25, 4
      %p404 = pnand %p402, %p403
      %p405 = pneg %p404
      // Predicated region
      $region45: #{tpu_custom_call.1} parent=5 // pred_check
        _
      $region46: #{tpu_custom_call.1} parent=5 // pred_check_branch
        %407 = sbr.rel (%p404) target = $region48
      $region47: #{tpu_custom_call.1} parent=5 // pred_region
        %s408 = ssub.s32 %s25, 1
        // Predicated region
        $region49: #{tpu_custom_call.1} parent=47 // pred_check
          %p409 = pneg %p63
        $region50: #{tpu_custom_call.1} parent=47 // pred_check_branch
          %411 = sbr.rel (%p409) target = $region52
        $region51: #{tpu_custom_call.1} parent=47 // pred_region
          %412 = dma.done [#allocation6], 384
        $region52: #{tpu_custom_call.1} parent=47 // pred_fallthru
          _
        %s413 = sand.u32 %s30, 1
        %s414 = scalar_lea.sflag [#allocation9], %s413
        %s415 = sand.u32 %s84, 1
        %s416 = smul.addr %s415, 24
        %s417 = scalar_lea.vmem [#allocation8], %s416
        // Predicated region
        $region53: #{tpu_custom_call.1} parent=47 // pred_check
          %p418 = pneg %p97
        $region54: #{tpu_custom_call.1} parent=47 // pred_check_branch
          %420 = sbr.rel (%p418) target = $region56
        $region55: #{tpu_custom_call.1} parent=47 // pred_region
          %421 = dma.done %s414, 384
        $region56: #{tpu_custom_call.1} parent=47 // pred_fallthru
          _
        // Predicated region
        $region57: #{tpu_custom_call.1} parent=47 // pred_check
          %p422 = pneg %p118
        $region58: #{tpu_custom_call.1} parent=47 // pred_check_branch
          %424 = sbr.rel (%p422) target = $region60
        $region59: #{tpu_custom_call.1} parent=47 // pred_region
          %425 = dma.done [#allocation9], 1024
        $region60: #{tpu_custom_call.1} parent=47 // pred_fallthru
          _
        // Predicated region
        $region61: #{tpu_custom_call.1} parent=47 // pred_check
          %p426 = pneg %p139
        $region62: #{tpu_custom_call.1} parent=47 // pred_check_branch
          %428 = sbr.rel (%p426) target = $region64
        $region63: #{tpu_custom_call.1} parent=47 // pred_region
          %429 = dma.done [#allocation12], 8192
        $region64: #{tpu_custom_call.1} parent=47 // pred_fallthru
          _
        // Predicated region
        $region65: #{tpu_custom_call.1} parent=47 // pred_check
          %p430 = pneg %p160
        $region66: #{tpu_custom_call.1} parent=47 // pred_check_branch
          %432 = sbr.rel (%p430) target = $region68
        $region67: #{tpu_custom_call.1} parent=47 // pred_region
          %433 = dma.done [#allocation12], 64
        $region68: #{tpu_custom_call.1} parent=47 // pred_fallthru
          _
        %p434 = pneg %p63
        %p435 = pneg %p60
        %s436 = sand.u32 %s30, 1
        %s437 = scalar_lea.sflag [#allocation9], %s436
        %s438 = sand.u32 %s84, 1
        %s439 = smul.addr %s438, 24
        %s440 = scalar_lea.vmem [#allocation8], %s439
        %p441 = pneg %p97
        %p442 = pneg %p94
        %p443 = pneg %p118
        %p444 = pneg %p115
        %p445 = pneg %p139
        %p446 = pneg %p136
        %p447 = pneg %p160
        %p448 = pneg %p157
        %p449 = scmp.lt.s32.totalorder %s34, 0
        %s450 = scalar_select %p449, %s34, 0
        %s451 = smul.addr %s450, 8
        %s452 = scalar_lea.vmem %s5, %s451
        %p453 = pneg %p186
        %p454 = pneg %p183
        %p455 = scmp.lt.s32.totalorder %s34, 0
        %s456 = scalar_select %p455, %s34, 0
        %s457 = smul.addr %s456, 8
        %s458 = scalar_lea.vmem %s6, %s457
        %p459 = pneg %p212
        %p460 = pneg %p209
        %p461 = pneg %p240
        %p462 = pneg %p237
        %s463 = sand.u32 %s227, 1
        %s464 = scalar_lea.sflag [#allocation7], %s463
        %s465 = sand.u32 %s227, 1
        %s466 = smul.addr %s465, 24
        %s467 = scalar_lea.vmem [#allocation14], %s466
        %p468 = pneg %p266
        %p469 = pneg %p263
        %p470 = pneg %p292
        %p471 = pneg %p289
        %s472 = sadd.s32 %s35, 1
        %p473 = scmp.lt.s32.totalorder %s472, 2
        %s474 = scalar_select %p473, %s472, 2
        %s475 = smul.u32 3, %s474
        %p476 = scmp.lt.s32.totalorder %s34, 0
        %s477 = scalar_select %p476, %s34, 0
        %s478 = smul.addr %s477, 8
        %s479 = scalar_lea.vmem %s5, %s478
        %p480 = scmp.lt.s32.totalorder %s34, 0
        %s481 = scalar_select %p480, %s34, 0
        %s482 = smul.addr %s481, 8
        %s483 = scalar_lea.vmem %s6, %s482
        %s484 = smul.u32 3, %s35
        %p485 = scmp.lt.s32.totalorder %s35, 0
        %s486 = ssub.s32 0, %s35
        %s487 = scalar_select %p485, %s486, %s35
        %s488 = sand.u32 %s487, 1
        %s489 = ssub.s32 0, %s488
        %s490 = scalar_select %p485, %s489, %s488
        %p491 = scmp.ne.s32.totalorder %s490, 0
        %p492 = scmp.lt.s32.totalorder %s490, 0
        %p493 = pnand %p492, %p491
        %p494 = pneg %p493
        %s495 = sadd.s32 %s490, 2
        %s496 = scalar_select %p494, %s495, %s490
        %s497 = smul.u32 %s496, 24
        %s498 = ssub.s32 1, %s496
        %s499 = smul.u32 %s498, 24
        %v500 = vld [vmem:[#allocation13] sm:$0xf]
        %v501 = vld [vmem:[#allocation10] sm:$0xff]
        %v502 = vld [vmem:[#allocation10 + $0x8] sm:$0xff]
        %v503 = vld [vmem:[#allocation10 + $0x10] sm:$0xff]
        %v504 = vld [vmem:[#allocation10 + $0x18] sm:$0xff]
        %v505 = vld [vmem:[#allocation10 + $0x20] sm:$0xff]
        %v506 = vld [vmem:[#allocation10 + $0x28] sm:$0xff]
        %v507 = vld [vmem:[#allocation10 + $0x30] sm:$0xff]
        %v508 = vld [vmem:[#allocation10 + $0x38] sm:$0xff]
        %p509 = scmp.eq.s32.totalorder %s35, 0
        // Predicated region
        $region69: #{tpu_custom_call.1} parent=47 // pred_check
          %p510 = pneg %p509
        $region70: #{tpu_custom_call.1} parent=47 // pred_check_branch
          %512 = sbr.rel (%p510) target = $region72
        $region71: #{tpu_custom_call.1} parent=47 // pred_region
          %v513 = vld [vmem:[%s479] sm:$0xff]
          %514 = vst [vmem:[#allocation3] sm:$0xff] %v513
          %v515 = vld [vmem:[%s483] sm:$0xff]
          %516 = vst [vmem:[#allocation4] sm:$0xff] %v515
          %v517 = vld [vmem:[#allocation5] sm:$0xff]
          %v519 = vlaneseq
          %v520 = vshrl.u32 %v519, 7
          %v521 = vsub.s32 0, %v520
          %v522 = vrot.slane %v500, %v521
          %v523 = vlaneseq
          %v524 = vshrl.u32 %v523, 7
          %v525 = vsub.s32 1, %v524
          %v526 = vrot.slane %v500, %v525
          %v527 = vlaneseq
          %v528 = vshrl.u32 %v527, 7
          %v529 = vsub.s32 2, %v528
          %v530 = vrot.slane %v500, %v529
          %v531 = vlaneseq
          %v532 = vshrl.u32 %v531, 7
          %v533 = vsub.s32 3, %v532
          %v534 = vrot.slane %v500, %v533
          %vm539 = vcmask 130048
          %v541 = vsel %vm539, %v517, 0
          %543 = vmatprep.subr.mxu0 %v502
          %544 = vmatpush1.msra.mxu0 %v501
          %545 = vmatprep.subr.mxu0 %v506
          %546 = vmatpush1.msra.mxu0 %v505
          %547 = vmatprep.subr.mxu0 0.0
          %548 = vmatpush1.msra.mxu0 0.0
          %549 = vmatprep.subr.mxu0 0.0
          %550 = vmatpush1.msra.mxu0 0.0
          %551 = vmatprep.subr.mxu0 0.0
          %552 = vmatpush1.msra.mxu0 0.0
          %553 = vmatprep.subr.mxu0 0.0
          %554 = vmatpush1.msra.mxu0 0.0
          %555 = vmatprep.subr.mxu0 0.0
          %556 = vmatpush1.msra.mxu0 0.0
          %557 = vmatprep.subr.mxu0 0.0
          %558 = vmatpush1.msra.mxu0 0.0
          %559 = vmatprep.subr.mxu0 0.0
          %560 = vmatpush1.msra.mxu0 0.0
          %561 = vmatprep.subr.mxu0 0.0
          %562 = vmatpush1.msra.mxu0 0.0
          %563 = vmatprep.subr.mxu0 0.0
          %564 = vmatpush1.msra.mxu0 0.0
          %565 = vmatprep.subr.mxu0 0.0
          %566 = vmatpush1.msra.mxu0 0.0
          %567 = vmatprep.subr.mxu0 0.0
          %568 = vmatpush1.msra.mxu0 0.0
          %569 = vmatprep.subr.mxu0 0.0
          %570 = vmatpush1.msra.mxu0 0.0
          %571 = vmatprep.subr.mxu0 0.0
          %572 = vmatpush1.msra.mxu0 0.0
          %573 = vmatprep.subr.mxu0 0.0
          %574 = vmatpush1.msra.mxu0 0.0
          %575 = vmatprep.subr.mxu0 0.0
          %576 = vmatpush1.msra.mxu0 0.0
          %577 = vmatprep.subr.mxu0 0.0
          %578 = vmatpush1.msra.mxu0 0.0
          %579 = vmatprep.subr.mxu0 0.0
          %580 = vmatpush1.msra.mxu0 0.0
          %581 = vmatprep.subr.mxu0 0.0
          %582 = vmatpush1.msra.mxu0 0.0
          %583 = vmatprep.subr.mxu0 0.0
          %584 = vmatpush1.msra.mxu0 0.0
          %585 = vmatprep.subr.mxu0 0.0
          %586 = vmatpush1.msra.mxu0 0.0
          %587 = vmatprep.subr.mxu0 0.0
          %588 = vmatpush1.msra.mxu0 0.0
          %589 = vmatprep.subr.mxu0 0.0
          %590 = vmatpush1.msra.mxu0 0.0
          %591 = vmatprep.subr.mxu0 0.0
          %592 = vmatpush1.msra.mxu0 0.0
          %593 = vmatprep.subr.mxu0 0.0
          %594 = vmatpush1.msra.mxu0 0.0
          %595 = vmatprep.subr.mxu0 0.0
          %596 = vmatpush1.msra.mxu0 0.0
          %597 = vmatprep.subr.mxu0 0.0
          %598 = vmatpush1.msra.mxu0 0.0
          %599 = vmatprep.subr.mxu0 0.0
          %600 = vmatpush1.msra.mxu0 0.0
          %601 = vmatprep.subr.mxu0 0.0
          %602 = vmatpush1.msra.mxu0 0.0
          %603 = vmatprep.subr.mxu0 0.0
          %604 = vmatpush1.msra.mxu0 0.0
          %605 = vmatprep.subr.mxu0 0.0
          %606 = vmatpush1.msra.mxu0 0.0
          %607 = vmatprep.mubr.f32.mxu0 0.0
          %608 = vmatmul.mubr.f32.gmra.mrb[0].mxu0 %v541
          %v609 = vpop.f32.mrb[0].mxu0
          %v610 = vadd.f32 %v522, %v609
          %v611 = vpop.f32.mrb[0].mxu0
          %v612 = vadd.f32 %v526, %v611
          %613 = vdwg.mxu0
          %614 = vmatprep.subr.mxu0 %v504
          %615 = vmatpush1.msra.mxu0 %v503
          %616 = vmatprep.subr.mxu0 %v508
          %617 = vmatpush1.msra.mxu0 %v507
          %618 = vmatprep.subr.mxu0 0.0
          %619 = vmatpush1.msra.mxu0 0.0
          %620 = vmatprep.subr.mxu0 0.0
          %621 = vmatpush1.msra.mxu0 0.0
          %622 = vmatprep.subr.mxu0 0.0
          %623 = vmatpush1.msra.mxu0 0.0
          %624 = vmatprep.subr.mxu0 0.0
          %625 = vmatpush1.msra.mxu0 0.0
          %626 = vmatprep.subr.mxu0 0.0
          %627 = vmatpush1.msra.mxu0 0.0
          %628 = vmatprep.subr.mxu0 0.0
          %629 = vmatpush1.msra.mxu0 0.0
          %630 = vmatprep.subr.mxu0 0.0
          %631 = vmatpush1.msra.mxu0 0.0
          %632 = vmatprep.subr.mxu0 0.0
          %633 = vmatpush1.msra.mxu0 0.0
          %634 = vmatprep.subr.mxu0 0.0
          %635 = vmatpush1.msra.mxu0 0.0
          %636 = vmatprep.subr.mxu0 0.0
          %637 = vmatpush1.msra.mxu0 0.0
          %638 = vmatprep.subr.mxu0 0.0
          %639 = vmatpush1.msra.mxu0 0.0
          %640 = vmatprep.subr.mxu0 0.0
          %641 = vmatpush1.msra.mxu0 0.0
          %642 = vmatprep.subr.mxu0 0.0
          %643 = vmatpush1.msra.mxu0 0.0
          %644 = vmatprep.subr.mxu0 0.0
          %645 = vmatpush1.msra.mxu0 0.0
          %646 = vmatprep.subr.mxu0 0.0
          %647 = vmatpush1.msra.mxu0 0.0
          %648 = vmatprep.subr.mxu0 0.0
          %649 = vmatpush1.msra.mxu0 0.0
          %650 = vmatprep.subr.mxu0 0.0
          %651 = vmatpush1.msra.mxu0 0.0
          %652 = vmatprep.subr.mxu0 0.0
          %653 = vmatpush1.msra.mxu0 0.0
          %654 = vmatprep.subr.mxu0 0.0
          %655 = vmatpush1.msra.mxu0 0.0
          %656 = vmatprep.subr.mxu0 0.0
          %657 = vmatpush1.msra.mxu0 0.0
          %658 = vmatprep.subr.mxu0 0.0
          %659 = vmatpush1.msra.mxu0 0.0
          %660 = vmatprep.subr.mxu0 0.0
          %661 = vmatpush1.msra.mxu0 0.0
          %662 = vmatprep.subr.mxu0 0.0
          %663 = vmatpush1.msra.mxu0 0.0
          %664 = vmatprep.subr.mxu0 0.0
          %665 = vmatpush1.msra.mxu0 0.0
          %666 = vmatprep.subr.mxu0 0.0
          %667 = vmatpush1.msra.mxu0 0.0
          %668 = vmatprep.subr.mxu0 0.0
          %669 = vmatpush1.msra.mxu0 0.0
          %670 = vmatprep.subr.mxu0 0.0
          %671 = vmatpush1.msra.mxu0 0.0
          %672 = vmatprep.subr.mxu0 0.0
          %673 = vmatpush1.msra.mxu0 0.0
          %674 = vmatprep.subr.mxu0 0.0
          %675 = vmatpush1.msra.mxu0 0.0
          %676 = vmatprep.subr.mxu0 0.0
          %677 = vmatpush1.msra.mxu0 0.0
          %678 = vmatprep.mubr.f32.mxu0 0.0
          %679 = vmatmul.mubr.f32.gmra.mrb[0].mxu0 %v541
          %v680 = vpop.f32.mrb[0].mxu0
          %v681 = vadd.f32 %v530, %v680
          %v682 = vpop.f32.mrb[0].mxu0
          %v683 = vadd.f32 %v534, %v682
          %684 = vdwg.mxu0
          %s685 = smul.u32 0, 4
          %s686 = smul.addr %s685, 8
          %s687 = scalar_lea.vmem [#allocation2], %s686
          %688 = vst [vmem:[%s687] sm:$0xff] %v610
          %689 = vst [vmem:[%s687 + $0x8] sm:$0xff] %v612
          %690 = vst [vmem:[%s687 + $0x10] sm:$0xff] %v681
          %691 = vst [vmem:[%s687 + $0x18] sm:$0xff] %v683
          %s692 = scalar_lea.vmem [#allocation5], 8
          %v693 = vld [vmem:[%s692] sm:$0xff]
          %v695 = vsel %vm539, %v693, 0
          %697 = vmatprep.subr.mxu0 %v502
          %698 = vmatpush1.msra.mxu0 %v501
          %699 = vmatprep.subr.mxu0 %v506
          %700 = vmatpush1.msra.mxu0 %v505
          %701 = vmatprep.subr.mxu0 0.0
          %702 = vmatpush1.msra.mxu0 0.0
          %703 = vmatprep.subr.mxu0 0.0
          %704 = vmatpush1.msra.mxu0 0.0
          %705 = vmatprep.subr.mxu0 0.0
          %706 = vmatpush1.msra.mxu0 0.0
          %707 = vmatprep.subr.mxu0 0.0
          %708 = vmatpush1.msra.mxu0 0.0
          %709 = vmatprep.subr.mxu0 0.0
          %710 = vmatpush1.msra.mxu0 0.0
          %711 = vmatprep.subr.mxu0 0.0
          %712 = vmatpush1.msra.mxu0 0.0
          %713 = vmatprep.subr.mxu0 0.0
          %714 = vmatpush1.msra.mxu0 0.0
          %715 = vmatprep.subr.mxu0 0.0
          %716 = vmatpush1.msra.mxu0 0.0
          %717 = vmatprep.subr.mxu0 0.0
          %718 = vmatpush1.msra.mxu0 0.0
          %719 = vmatprep.subr.mxu0 0.0
          %720 = vmatpush1.msra.mxu0 0.0
          %721 = vmatprep.subr.mxu0 0.0
          %722 = vmatpush1.msra.mxu0 0.0
          %723 = vmatprep.subr.mxu0 0.0
          %724 = vmatpush1.msra.mxu0 0.0
          %725 = vmatprep.subr.mxu0 0.0
          %726 = vmatpush1.msra.mxu0 0.0
          %727 = vmatprep.subr.mxu0 0.0
          %728 = vmatpush1.msra.mxu0 0.0
          %729 = vmatprep.subr.mxu0 0.0
          %730 = vmatpush1.msra.mxu0 0.0
          %731 = vmatprep.subr.mxu0 0.0
          %732 = vmatpush1.msra.mxu0 0.0
          %733 = vmatprep.subr.mxu0 0.0
          %734 = vmatpush1.msra.mxu0 0.0
          %735 = vmatprep.subr.mxu0 0.0
          %736 = vmatpush1.msra.mxu0 0.0
          %737 = vmatprep.subr.mxu0 0.0
          %738 = vmatpush1.msra.mxu0 0.0
          %739 = vmatprep.subr.mxu0 0.0
          %740 = vmatpush1.msra.mxu0 0.0
          %741 = vmatprep.subr.mxu0 0.0
          %742 = vmatpush1.msra.mxu0 0.0
          %743 = vmatprep.subr.mxu0 0.0
          %744 = vmatpush1.msra.mxu0 0.0
          %745 = vmatprep.subr.mxu0 0.0
          %746 = vmatpush1.msra.mxu0 0.0
          %747 = vmatprep.subr.mxu0 0.0
          %748 = vmatpush1.msra.mxu0 0.0
          %749 = vmatprep.subr.mxu0 0.0
          %750 = vmatpush1.msra.mxu0 0.0
          %751 = vmatprep.subr.mxu0 0.0
          %752 = vmatpush1.msra.mxu0 0.0
          %753 = vmatprep.subr.mxu0 0.0
          %754 = vmatpush1.msra.mxu0 0.0
          %755 = vmatprep.subr.mxu0 0.0
          %756 = vmatpush1.msra.mxu0 0.0
          %757 = vmatprep.subr.mxu0 0.0
          %758 = vmatpush1.msra.mxu0 0.0
          %759 = vmatprep.subr.mxu0 0.0
          %760 = vmatpush1.msra.mxu0 0.0
          %761 = vmatprep.mubr.f32.mxu0 0.0
          %762 = vmatmul.mubr.f32.gmra.mrb[0].mxu0 %v695
          %v763 = vpop.f32.mrb[0].mxu0
          %v764 = vadd.f32 %v522, %v763
          %v765 = vpop.f32.mrb[0].mxu0
          %v766 = vadd.f32 %v526, %v765
          %767 = vdwg.mxu0
          %768 = vmatprep.subr.mxu0 %v504
          %769 = vmatpush1.msra.mxu0 %v503
          %770 = vmatprep.subr.mxu0 %v508
          %771 = vmatpush1.msra.mxu0 %v507
          %772 = vmatprep.subr.mxu0 0.0
          %773 = vmatpush1.msra.mxu0 0.0
          %774 = vmatprep.subr.mxu0 0.0
          %775 = vmatpush1.msra.mxu0 0.0
          %776 = vmatprep.subr.mxu0 0.0
          %777 = vmatpush1.msra.mxu0 0.0
          %778 = vmatprep.subr.mxu0 0.0
          %779 = vmatpush1.msra.mxu0 0.0
          %780 = vmatprep.subr.mxu0 0.0
          %781 = vmatpush1.msra.mxu0 0.0
          %782 = vmatprep.subr.mxu0 0.0
          %783 = vmatpush1.msra.mxu0 0.0
          %784 = vmatprep.subr.mxu0 0.0
          %785 = vmatpush1.msra.mxu0 0.0
          %786 = vmatprep.subr.mxu0 0.0
          %787 = vmatpush1.msra.mxu0 0.0
          %788 = vmatprep.subr.mxu0 0.0
          %789 = vmatpush1.msra.mxu0 0.0
          %790 = vmatprep.subr.mxu0 0.0
          %791 = vmatpush1.msra.mxu0 0.0
          %792 = vmatprep.subr.mxu0 0.0
          %793 = vmatpush1.msra.mxu0 0.0
          %794 = vmatprep.subr.mxu0 0.0
          %795 = vmatpush1.msra.mxu0 0.0
          %796 = vmatprep.subr.mxu0 0.0
          %797 = vmatpush1.msra.mxu0 0.0
          %798 = vmatprep.subr.mxu0 0.0
          %799 = vmatpush1.msra.mxu0 0.0
          %800 = vmatprep.subr.mxu0 0.0
          %801 = vmatpush1.msra.mxu0 0.0
          %802 = vmatprep.subr.mxu0 0.0
          %803 = vmatpush1.msra.mxu0 0.0
          %804 = vmatprep.subr.mxu0 0.0
          %805 = vmatpush1.msra.mxu0 0.0
          %806 = vmatprep.subr.mxu0 0.0
          %807 = vmatpush1.msra.mxu0 0.0
          %808 = vmatprep.subr.mxu0 0.0
          %809 = vmatpush1.msra.mxu0 0.0
          %810 = vmatprep.subr.mxu0 0.0
          %811 = vmatpush1.msra.mxu0 0.0
          %812 = vmatprep.subr.mxu0 0.0
          %813 = vmatpush1.msra.mxu0 0.0
          %814 = vmatprep.subr.mxu0 0.0
          %815 = vmatpush1.msra.mxu0 0.0
          %816 = vmatprep.subr.mxu0 0.0
          %817 = vmatpush1.msra.mxu0 0.0
          %818 = vmatprep.subr.mxu0 0.0
          %819 = vmatpush1.msra.mxu0 0.0
          %820 = vmatprep.subr.mxu0 0.0
          %821 = vmatpush1.msra.mxu0 0.0
          %822 = vmatprep.subr.mxu0 0.0
          %823 = vmatpush1.msra.mxu0 0.0
          %824 = vmatprep.subr.mxu0 0.0
          %825 = vmatpush1.msra.mxu0 0.0
          %826 = vmatprep.subr.mxu0 0.0
          %827 = vmatpush1.msra.mxu0 0.0
          %828 = vmatprep.subr.mxu0 0.0
          %829 = vmatpush1.msra.mxu0 0.0
          %830 = vmatprep.subr.mxu0 0.0
          %831 = vmatpush1.msra.mxu0 0.0
          %832 = vmatprep.mubr.f32.mxu0 0.0
          %833 = vmatmul.mubr.f32.gmra.mrb[0].mxu0 %v695
          %v834 = vpop.f32.mrb[0].mxu0
          %v835 = vadd.f32 %v530, %v834
          %v836 = vpop.f32.mrb[0].mxu0
          %v837 = vadd.f32 %v534, %v836
          %838 = vdwg.mxu0
          %s839 = smul.u32 1, 4
          %s840 = smul.addr %s839, 8
          %s841 = scalar_lea.vmem [#allocation2], %s840
          %842 = vst [vmem:[%s841] sm:$0xff] %v764
          %843 = vst [vmem:[%s841 + $0x8] sm:$0xff] %v766
          %844 = vst [vmem:[%s841 + $0x10] sm:$0xff] %v835
          %845 = vst [vmem:[%s841 + $0x18] sm:$0xff] %v837
          %s846 = scalar_lea.vmem [#allocation5], 16
          %v847 = vld [vmem:[%s846] sm:$0xff]
          %v849 = vsel %vm539, %v847, 0
          %851 = vmatprep.subr.mxu0 %v502
          %852 = vmatpush1.msra.mxu0 %v501
          %853 = vmatprep.subr.mxu0 %v506
          %854 = vmatpush1.msra.mxu0 %v505
          %855 = vmatprep.subr.mxu0 0.0
          %856 = vmatpush1.msra.mxu0 0.0
          %857 = vmatprep.subr.mxu0 0.0
          %858 = vmatpush1.msra.mxu0 0.0
          %859 = vmatprep.subr.mxu0 0.0
          %860 = vmatpush1.msra.mxu0 0.0
          %861 = vmatprep.subr.mxu0 0.0
          %862 = vmatpush1.msra.mxu0 0.0
          %863 = vmatprep.subr.mxu0 0.0
          %864 = vmatpush1.msra.mxu0 0.0
          %865 = vmatprep.subr.mxu0 0.0
          %866 = vmatpush1.msra.mxu0 0.0
          %867 = vmatprep.subr.mxu0 0.0
          %868 = vmatpush1.msra.mxu0 0.0
          %869 = vmatprep.subr.mxu0 0.0
          %870 = vmatpush1.msra.mxu0 0.0
          %871 = vmatprep.subr.mxu0 0.0
          %872 = vmatpush1.msra.mxu0 0.0
          %873 = vmatprep.subr.mxu0 0.0
          %874 = vmatpush1.msra.mxu0 0.0
          %875 = vmatprep.subr.mxu0 0.0
          %876 = vmatpush1.msra.mxu0 0.0
          %877 = vmatprep.subr.mxu0 0.0
          %878 = vmatpush1.msra.mxu0 0.0
          %879 = vmatprep.subr.mxu0 0.0
          %880 = vmatpush1.msra.mxu0 0.0
          %881 = vmatprep.subr.mxu0 0.0
          %882 = vmatpush1.msra.mxu0 0.0
          %883 = vmatprep.subr.mxu0 0.0
          %884 = vmatpush1.msra.mxu0 0.0
          %885 = vmatprep.subr.mxu0 0.0
          %886 = vmatpush1.msra.mxu0 0.0
          %887 = vmatprep.subr.mxu0 0.0
          %888 = vmatpush1.msra.mxu0 0.0
          %889 = vmatprep.subr.mxu0 0.0
          %890 = vmatpush1.msra.mxu0 0.0
          %891 = vmatprep.subr.mxu0 0.0
          %892 = vmatpush1.msra.mxu0 0.0
          %893 = vmatprep.subr.mxu0 0.0
          %894 = vmatpush1.msra.mxu0 0.0
          %895 = vmatprep.subr.mxu0 0.0
          %896 = vmatpush1.msra.mxu0 0.0
          %897 = vmatprep.subr.mxu0 0.0
          %898 = vmatpush1.msra.mxu0 0.0
          %899 = vmatprep.subr.mxu0 0.0
          %900 = vmatpush1.msra.mxu0 0.0
          %901 = vmatprep.subr.mxu0 0.0
          %902 = vmatpush1.msra.mxu0 0.0
          %903 = vmatprep.subr.mxu0 0.0
          %904 = vmatpush1.msra.mxu0 0.0
          %905 = vmatprep.subr.mxu0 0.0
          %906 = vmatpush1.msra.mxu0 0.0
          %907 = vmatprep.subr.mxu0 0.0
          %908 = vmatpush1.msra.mxu0 0.0
          %909 = vmatprep.subr.mxu0 0.0
          %910 = vmatpush1.msra.mxu0 0.0
          %911 = vmatprep.subr.mxu0 0.0
          %912 = vmatpush1.msra.mxu0 0.0
          %913 = vmatprep.subr.mxu0 0.0
          %914 = vmatpush1.msra.mxu0 0.0
          %915 = vmatprep.mubr.f32.mxu0 0.0
          %916 = vmatmul.mubr.f32.gmra.mrb[0].mxu0 %v849
          %v917 = vpop.f32.mrb[0].mxu0
          %v918 = vadd.f32 %v522, %v917
          %v919 = vpop.f32.mrb[0].mxu0
          %v920 = vadd.f32 %v526, %v919
          %921 = vdwg.mxu0
          %922 = vmatprep.subr.mxu0 %v504
          %923 = vmatpush1.msra.mxu0 %v503
          %924 = vmatprep.subr.mxu0 %v508
          %925 = vmatpush1.msra.mxu0 %v507
          %926 = vmatprep.subr.mxu0 0.0
          %927 = vmatpush1.msra.mxu0 0.0
          %928 = vmatprep.subr.mxu0 0.0
          %929 = vmatpush1.msra.mxu0 0.0
          %930 = vmatprep.subr.mxu0 0.0
          %931 = vmatpush1.msra.mxu0 0.0
          %932 = vmatprep.subr.mxu0 0.0
          %933 = vmatpush1.msra.mxu0 0.0
          %934 = vmatprep.subr.mxu0 0.0
          %935 = vmatpush1.msra.mxu0 0.0
          %936 = vmatprep.subr.mxu0 0.0
          %937 = vmatpush1.msra.mxu0 0.0
          %938 = vmatprep.subr.mxu0 0.0
          %939 = vmatpush1.msra.mxu0 0.0
          %940 = vmatprep.subr.mxu0 0.0
          %941 = vmatpush1.msra.mxu0 0.0
          %942 = vmatprep.subr.mxu0 0.0
          %943 = vmatpush1.msra.mxu0 0.0
          %944 = vmatprep.subr.mxu0 0.0
          %945 = vmatpush1.msra.mxu0 0.0
          %946 = vmatprep.subr.mxu0 0.0
          %947 = vmatpush1.msra.mxu0 0.0
          %948 = vmatprep.subr.mxu0 0.0
          %949 = vmatpush1.msra.mxu0 0.0
          %950 = vmatprep.subr.mxu0 0.0
          %951 = vmatpush1.msra.mxu0 0.0
          %952 = vmatprep.subr.mxu0 0.0
          %953 = vmatpush1.msra.mxu0 0.0
          %954 = vmatprep.subr.mxu0 0.0
          %955 = vmatpush1.msra.mxu0 0.0
          %956 = vmatprep.subr.mxu0 0.0
          %957 = vmatpush1.msra.mxu0 0.0
          %958 = vmatprep.subr.mxu0 0.0
          %959 = vmatpush1.msra.mxu0 0.0
          %960 = vmatprep.subr.mxu0 0.0
          %961 = vmatpush1.msra.mxu0 0.0
          %962 = vmatprep.subr.mxu0 0.0
          %963 = vmatpush1.msra.mxu0 0.0
          %964 = vmatprep.subr.mxu0 0.0
          %965 = vmatpush1.msra.mxu0 0.0
          %966 = vmatprep.subr.mxu0 0.0
          %967 = vmatpush1.msra.mxu0 0.0
          %968 = vmatprep.subr.mxu0 0.0
          %969 = vmatpush1.msra.mxu0 0.0
          %970 = vmatprep.subr.mxu0 0.0
          %971 = vmatpush1.msra.mxu0 0.0
          %972 = vmatprep.subr.mxu0 0.0
          %973 = vmatpush1.msra.mxu0 0.0
          %974 = vmatprep.subr.mxu0 0.0
          %975 = vmatpush1.msra.mxu0 0.0
          %976 = vmatprep.subr.mxu0 0.0
          %977 = vmatpush1.msra.mxu0 0.0
          %978 = vmatprep.subr.mxu0 0.0
          %979 = vmatpush1.msra.mxu0 0.0
          %980 = vmatprep.subr.mxu0 0.0
          %981 = vmatpush1.msra.mxu0 0.0
          %982 = vmatprep.subr.mxu0 0.0
          %983 = vmatpush1.msra.mxu0 0.0
          %984 = vmatprep.subr.mxu0 0.0
          %985 = vmatpush1.msra.mxu0 0.0
          %986 = vmatprep.mubr.f32.mxu0 0.0
          %987 = vmatmul.mubr.f32.gmra.mrb[0].mxu0 %v849
          %v988 = vpop.f32.mrb[0].mxu0
          %v989 = vadd.f32 %v530, %v988
          %v990 = vpop.f32.mrb[0].mxu0
          %v991 = vadd.f32 %v534, %v990
          %992 = vdwg.mxu0
          %s993 = smul.u32 2, 4
          %s994 = smul.addr %s993, 8
          %s995 = scalar_lea.vmem [#allocation2], %s994
          %996 = vst [vmem:[%s995] sm:$0xff] %v918
          %997 = vst [vmem:[%s995 + $0x8] sm:$0xff] %v920
          %998 = vst [vmem:[%s995 + $0x10] sm:$0xff] %v989
          %999 = vst [vmem:[%s995 + $0x18] sm:$0xff] %v991
        $region72: #{tpu_custom_call.1} parent=47 // pred_fallthru
          _
        %s1000 = sadd.s32 %s35, 1
        %p1001 = scmp.lt.s32.totalorder %s1000, 3
        %v1002 = vld [vmem:[#allocation3] sm:$0xff]
        %v1003 = vld [vmem:[#allocation4] sm:$0xff]
        %v1004 = vld [vmem:[#allocation11] sm:$0xff]
        %v1005 = vld [vmem:[#allocation11 + $0x20] sm:$0xff]
        %v1006 = vld [vmem:[#allocation11 + $0x40] sm:$0xff]
        %v1007 = vld [vmem:[#allocation11 + $0x60] sm:$0xff]
        %v1008 = vld [vmem:[#allocation11 + $0x80] sm:$0xff]
        %v1009 = vld [vmem:[#allocation11 + $0xa0] sm:$0xff]
        %v1010 = vld [vmem:[#allocation11 + $0xc0] sm:$0xff]
        %v1011 = vld [vmem:[#allocation11 + $0xe0] sm:$0xff]
        %v1012 = vld [vmem:[#allocation11 + $0x100] sm:$0xff]
        %v1013 = vld [vmem:[#allocation11 + $0x120] sm:$0xff]
        %v1014 = vld [vmem:[#allocation11 + $0x140] sm:$0xff]
        %v1015 = vld [vmem:[#allocation11 + $0x160] sm:$0xff]
        %v1016 = vld [vmem:[#allocation11 + $0x180] sm:$0xff]
        %v1017 = vld [vmem:[#allocation11 + $0x1a0] sm:$0xff]
        %v1018 = vld [vmem:[#allocation11 + $0x1c0] sm:$0xff]
        %v1019 = vld [vmem:[#allocation11 + $0x1e0] sm:$0xff]
        %s1020 = sshra.s32 %s497, 3
        %s1021 = sand.u32 %s497, 7
        %s1022 = smul.u32 %s1020, 4
        %s1023 = smul.addr %s1022, 8
        %s1024 = scalar_lea.vmem [#allocation2], %s1023
        %v1025 = vld [vmem:[%s1024] sm:$0xff]
        %1026 = vmatprep.subr.mxu0 0.0
        %1027 = vmatpush1.msra.mxu0 %v1004
        %1028 = vmatprep.subr.mxu0 0.0
        %1029 = vmatpush1.msra.mxu0 %v1005
        %1030 = vmatprep.subr.mxu0 0.0
        %1031 = vmatpush1.msra.mxu0 %v1006
        %1032 = vmatprep.subr.mxu0 0.0
        %1033 = vmatpush1.msra.mxu0 %v1007
        %1034 = vmatprep.subr.mxu0 0.0
        %1035 = vmatpush1.msra.mxu0 %v1008
        %1036 = vmatprep.subr.mxu0 0.0
        %1037 = vmatpush1.msra.mxu0 %v1009
        %1038 = vmatprep.subr.mxu0 0.0
        %1039 = vmatpush1.msra.mxu0 %v1010
        %1040 = vmatprep.subr.mxu0 0.0
        %1041 = vmatpush1.msra.mxu0 %v1011
        %1042 = vmatprep.subr.mxu0 0.0
        %1043 = vmatpush1.msra.mxu0 %v1012
        %1044 = vmatprep.subr.mxu0 0.0
        %1045 = vmatpush1.msra.mxu0 %v1013
        %1046 = vmatprep.subr.mxu0 0.0
        %1047 = vmatpush1.msra.mxu0 %v1014
        %1048 = vmatprep.subr.mxu0 0.0
        %1049 = vmatpush1.msra.mxu0 %v1015
        %1050 = vmatprep.subr.mxu0 0.0
        %1051 = vmatpush1.msra.mxu0 %v1016
        %1052 = vmatprep.subr.mxu0 0.0
        %1053 = vmatpush1.msra.mxu0 %v1017
        %1054 = vmatprep.subr.mxu0 0.0
        %1055 = vmatpush1.msra.mxu0 %v1018
        %1056 = vmatprep.subr.mxu0 0.0
        %1057 = vmatpush1.msra.mxu0 %v1019
        %1058 = vmatprep.subr.mxu0 0.0
        %1059 = vmatpush1.msra.mxu0 0.0
        %1060 = vmatprep.subr.mxu0 0.0
        %1061 = vmatpush1.msra.mxu0 0.0
        %1062 = vmatprep.subr.mxu0 0.0
        %1063 = vmatpush1.msra.mxu0 0.0
        %1064 = vmatprep.subr.mxu0 0.0
        %1065 = vmatpush1.msra.mxu0 0.0
        %1066 = vmatprep.subr.mxu0 0.0
        %1067 = vmatpush1.msra.mxu0 0.0
        %1068 = vmatprep.subr.mxu0 0.0
        %1069 = vmatpush1.msra.mxu0 0.0
        %1070 = vmatprep.subr.mxu0 0.0
        %1071 = vmatpush1.msra.mxu0 0.0
        %1072 = vmatprep.subr.mxu0 0.0
        %1073 = vmatpush1.msra.mxu0 0.0
        %1074 = vmatprep.subr.mxu0 0.0
        %1075 = vmatpush1.msra.mxu0 0.0
        %1076 = vmatprep.subr.mxu0 0.0
        %1077 = vmatpush1.msra.mxu0 0.0
        %1078 = vmatprep.subr.mxu0 0.0
        %1079 = vmatpush1.msra.mxu0 0.0
        %1080 = vmatprep.subr.mxu0 0.0
        %1081 = vmatpush1.msra.mxu0 0.0
        %1082 = vmatprep.subr.mxu0 0.0
        %1083 = vmatpush1.msra.mxu0 0.0
        %1084 = vmatprep.subr.mxu0 0.0
        %1085 = vmatpush1.msra.mxu0 0.0
        %1086 = vmatprep.subr.mxu0 0.0
        %1087 = vmatpush1.msra.mxu0 0.0
        %1088 = vmatprep.subr.mxu0 0.0
        %1089 = vmatpush1.msra.mxu0 0.0
        %1090 = vmatprep.mubr.f32.mxu0 0.0
        %1091 = vmatmul.mubr.f32.gmra.mrb[0].mxu0 %v1002
        %v1092 = vpop.f32.mrb[0].mxu0
        %v1093 = vadd.f32 0.0, %v1092
        %v1094 = vpop.f32.mrb[0].mxu0
        %1095 = vdwg.mxu0
        %v1096 = vadd.f32 %v1025, %v1093
        %v1097 = vmul.f32 %v1096, 0.5
        %v1098 = vtanh.pop %v1097
        %v1099 = vmul.f32 %v1098, 0.5
        %v1100 = vadd.f32 %v1099, 0.5
        %v1101 = vld [vmem:[#allocation11 + $0x10] sm:$0xff]
        %v1102 = vld [vmem:[#allocation11 + $0x30] sm:$0xff]
        %v1103 = vld [vmem:[#allocation11 + $0x50] sm:$0xff]
        %v1104 = vld [vmem:[#allocation11 + $0x70] sm:$0xff]
        %v1105 = vld [vmem:[#allocation11 + $0x90] sm:$0xff]
        %v1106 = vld [vmem:[#allocation11 + $0xb0] sm:$0xff]
        %v1107 = vld [vmem:[#allocation11 + $0xd0] sm:$0xff]
        %v1108 = vld [vmem:[#allocation11 + $0xf0] sm:$0xff]
        %v1109 = vld [vmem:[#allocation11 + $0x110] sm:$0xff]
        %v1110 = vld [vmem:[#allocation11 + $0x130] sm:$0xff]
        %v1111 = vld [vmem:[#allocation11 + $0x150] sm:$0xff]
        %v1112 = vld [vmem:[#allocation11 + $0x170] sm:$0xff]
        %v1113 = vld [vmem:[#allocation11 + $0x190] sm:$0xff]
        %v1114 = vld [vmem:[#allocation11 + $0x1b0] sm:$0xff]
        %v1115 = vld [vmem:[#allocation11 + $0x1d0] sm:$0xff]
        %v1116 = vld [vmem:[#allocation11 + $0x1f0] sm:$0xff]
        %v1117 = vld [vmem:[%s1024 + $0x10] sm:$0xff]
        %1118 = vmatprep.subr.mxu0 0.0
        %1119 = vmatpush1.msra.mxu0 %v1101
        %1120 = vmatprep.subr.mxu0 0.0
        %1121 = vmatpush1.msra.mxu0 %v1102
        %1122 = vmatprep.subr.mxu0 0.0
        %1123 = vmatpush1.msra.mxu0 %v1103
        %1124 = vmatprep.subr.mxu0 0.0
        %1125 = vmatpush1.msra.mxu0 %v1104
        %1126 = vmatprep.subr.mxu0 0.0
        %1127 = vmatpush1.msra.mxu0 %v1105
        %1128 = vmatprep.subr.mxu0 0.0
        %1129 = vmatpush1.msra.mxu0 %v1106
        %1130 = vmatprep.subr.mxu0 0.0
        %1131 = vmatpush1.msra.mxu0 %v1107
        %1132 = vmatprep.subr.mxu0 0.0
        %1133 = vmatpush1.msra.mxu0 %v1108
        %1134 = vmatprep.subr.mxu0 0.0
        %1135 = vmatpush1.msra.mxu0 %v1109
        %1136 = vmatprep.subr.mxu0 0.0
        %1137 = vmatpush1.msra.mxu0 %v1110
        %1138 = vmatprep.subr.mxu0 0.0
        %1139 = vmatpush1.msra.mxu0 %v1111
        %1140 = vmatprep.subr.mxu0 0.0
        %1141 = vmatpush1.msra.mxu0 %v1112
        %1142 = vmatprep.subr.mxu0 0.0
        %1143 = vmatpush1.msra.mxu0 %v1113
        %1144 = vmatprep.subr.mxu0 0.0
        %1145 = vmatpush1.msra.mxu0 %v1114
        %1146 = vmatprep.subr.mxu0 0.0
        %1147 = vmatpush1.msra.mxu0 %v1115
        %1148 = vmatprep.subr.mxu0 0.0
        %1149 = vmatpush1.msra.mxu0 %v1116
        %1150 = vmatprep.subr.mxu0 0.0
        %1151 = vmatpush1.msra.mxu0 0.0
        %1152 = vmatprep.subr.mxu0 0.0
        %1153 = vmatpush1.msra.mxu0 0.0
        %1154 = vmatprep.subr.mxu0 0.0
        %1155 = vmatpush1.msra.mxu0 0.0
        %1156 = vmatprep.subr.mxu0 0.0
        %1157 = vmatpush1.msra.mxu0 0.0
        %1158 = vmatprep.subr.mxu0 0.0
        %1159 = vmatpush1.msra.mxu0 0.0
        %1160 = vmatprep.subr.mxu0 0.0
        %1161 = vmatpush1.msra.mxu0 0.0
        %1162 = vmatprep.subr.mxu0 0.0
        %1163 = vmatpush1.msra.mxu0 0.0
        %1164 = vmatprep.subr.mxu0 0.0
        %1165 = vmatpush1.msra.mxu0 0.0
        %1166 = vmatprep.subr.mxu0 0.0
        %1167 = vmatpush1.msra.mxu0 0.0
        %1168 = vmatprep.subr.mxu0 0.0
        %1169 = vmatpush1.msra.mxu0 0.0
        %1170 = vmatprep.subr.mxu0 0.0
        %1171 = vmatpush1.msra.mxu0 0.0
        %1172 = vmatprep.subr.mxu0 0.0
        %1173 = vmatpush1.msra.mxu0 0.0
        %1174 = vmatprep.subr.mxu0 0.0
        %1175 = vmatpush1.msra.mxu0 0.0
        %1176 = vmatprep.subr.mxu0 0.0
        %1177 = vmatpush1.msra.mxu0 0.0
        %1178 = vmatprep.subr.mxu0 0.0
        %1179 = vmatpush1.msra.mxu0 0.0
        %1180 = vmatprep.subr.mxu0 0.0
        %1181 = vmatpush1.msra.mxu0 0.0
        %1182 = vmatprep.mubr.f32.mxu0 0.0
        %1183 = vmatmul.mubr.f32.gmra.mrb[0].mxu0 %v1002
        %v1184 = vpop.f32.mrb[0].mxu0
        %v1185 = vadd.f32 0.0, %v1184
        %v1186 = vpop.f32.mrb[0].mxu0
        %1187 = vdwg.mxu0
        %v1188 = vadd.f32 %v1117, %v1185
        %v1189 = vtanh.pop %v1188
        %v1190 = vmul.f32 %v1100, %v1189
        %v1191 = vld [vmem:[#allocation11 + $0x8] sm:$0xff]
        %v1192 = vld [vmem:[#allocation11 + $0x28] sm:$0xff]
        %v1193 = vld [vmem:[#allocation11 + $0x48] sm:$0xff]
        %v1194 = vld [vmem:[#allocation11 + $0x68] sm:$0xff]
        %v1195 = vld [vmem:[#allocation11 + $0x88] sm:$0xff]
        %v1196 = vld [vmem:[#allocation11 + $0xa8] sm:$0xff]
        %v1197 = vld [vmem:[#allocation11 + $0xc8] sm:$0xff]
        %v1198 = vld [vmem:[#allocation11 + $0xe8] sm:$0xff]
        %v1199 = vld [vmem:[#allocation11 + $0x108] sm:$0xff]
        %v1200 = vld [vmem:[#allocation11 + $0x128] sm:$0xff]
        %v1201 = vld [vmem:[#allocation11 + $0x148] sm:$0xff]
        %v1202 = vld [vmem:[#allocation11 + $0x168] sm:$0xff]
        %v1203 = vld [vmem:[#allocation11 + $0x188] sm:$0xff]
        %v1204 = vld [vmem:[#allocation11 + $0x1a8] sm:$0xff]
        %v1205 = vld [vmem:[#allocation11 + $0x1c8] sm:$0xff]
        %v1206 = vld [vmem:[#allocation11 + $0x1e8] sm:$0xff]
        %v1207 = vld [vmem:[%s1024 + $0x8] sm:$0xff]
        %1208 = vmatprep.subr.mxu0 0.0
        %1209 = vmatpush1.msra.mxu0 %v1191
        %1210 = vmatprep.subr.mxu0 0.0
        %1211 = vmatpush1.msra.mxu0 %v1192
        %1212 = vmatprep.subr.mxu0 0.0
        %1213 = vmatpush1.msra.mxu0 %v1193
        %1214 = vmatprep.subr.mxu0 0.0
        %1215 = vmatpush1.msra.mxu0 %v1194
        %1216 = vmatprep.subr.mxu0 0.0
        %1217 = vmatpush1.msra.mxu0 %v1195
        %1218 = vmatprep.subr.mxu0 0.0
        %1219 = vmatpush1.msra.mxu0 %v1196
        %1220 = vmatprep.subr.mxu0 0.0
        %1221 = vmatpush1.msra.mxu0 %v1197
        %1222 = vmatprep.subr.mxu0 0.0
        %1223 = vmatpush1.msra.mxu0 %v1198
        %1224 = vmatprep.subr.mxu0 0.0
        %1225 = vmatpush1.msra.mxu0 %v1199
        %1226 = vmatprep.subr.mxu0 0.0
        %1227 = vmatpush1.msra.mxu0 %v1200
        %1228 = vmatprep.subr.mxu0 0.0
        %1229 = vmatpush1.msra.mxu0 %v1201
        %1230 = vmatprep.subr.mxu0 0.0
        %1231 = vmatpush1.msra.mxu0 %v1202
        %1232 = vmatprep.subr.mxu0 0.0
        %1233 = vmatpush1.msra.mxu0 %v1203
        %1234 = vmatprep.subr.mxu0 0.0
        %1235 = vmatpush1.msra.mxu0 %v1204
        %1236 = vmatprep.subr.mxu0 0.0
        %1237 = vmatpush1.msra.mxu0 %v1205
        %1238 = vmatprep.subr.mxu0 0.0
        %1239 = vmatpush1.msra.mxu0 %v1206
        %1240 = vmatprep.subr.mxu0 0.0
        %1241 = vmatpush1.msra.mxu0 0.0
        %1242 = vmatprep.subr.mxu0 0.0
        %1243 = vmatpush1.msra.mxu0 0.0
        %1244 = vmatprep.subr.mxu0 0.0
        %1245 = vmatpush1.msra.mxu0 0.0
        %1246 = vmatprep.subr.mxu0 0.0
        %1247 = vmatpush1.msra.mxu0 0.0
        %1248 = vmatprep.subr.mxu0 0.0
        %1249 = vmatpush1.msra.mxu0 0.0
        %1250 = vmatprep.subr.mxu0 0.0
        %1251 = vmatpush1.msra.mxu0 0.0
        %1252 = vmatprep.subr.mxu0 0.0
        %1253 = vmatpush1.msra.mxu0 0.0
        %1254 = vmatprep.subr.mxu0 0.0
        %1255 = vmatpush1.msra.mxu0 0.0
        %1256 = vmatprep.subr.mxu0 0.0
        %1257 = vmatpush1.msra.mxu0 0.0
        %1258 = vmatprep.subr.mxu0 0.0
        %1259 = vmatpush1.msra.mxu0 0.0
        %1260 = vmatprep.subr.mxu0 0.0
        %1261 = vmatpush1.msra.mxu0 0.0
        %1262 = vmatprep.subr.mxu0 0.0
        %1263 = vmatpush1.msra.mxu0 0.0
        %1264 = vmatprep.subr.mxu0 0.0
        %1265 = vmatpush1.msra.mxu0 0.0
        %1266 = vmatprep.subr.mxu0 0.0
        %1267 = vmatpush1.msra.mxu0 0.0
        %1268 = vmatprep.subr.mxu0 0.0
        %1269 = vmatpush1.msra.mxu0 0.0
        %1270 = vmatprep.subr.mxu0 0.0
        %1271 = vmatpush1.msra.mxu0 0.0
        %1272 = vmatprep.mubr.f32.mxu0 0.0
        %1273 = vmatmul.mubr.f32.gmra.mrb[0].mxu0 %v1002
        %v1274 = vpop.f32.mrb[0].mxu0
        %v1275 = vadd.f32 0.0, %v1274
        %v1276 = vpop.f32.mrb[0].mxu0
        %1277 = vdwg.mxu0
        %v1278 = vadd.f32 %v1207, %v1275
        %v1279 = vmul.f32 %v1278, 0.5
        %v1280 = vtanh.pop %v1279
        %v1281 = vmul.f32 %v1280, 0.5
        %v1282 = vadd.f32 %v1281, 0.5
        %v1283 = vmul.f32 %v1282, %v1003
        %v1284 = vadd.f32 %v1283, %v1190
        %v1285 = vld [vmem:[#allocation11 + $0x18] sm:$0xff]
        %v1286 = vld [vmem:[#allocation11 + $0x38] sm:$0xff]
        %v1287 = vld [vmem:[#allocation11 + $0x58] sm:$0xff]
        %v1288 = vld [vmem:[#allocation11 + $0x78] sm:$0xff]
        %v1289 = vld [vmem:[#allocation11 + $0x98] sm:$0xff]
        %v1290 = vld [vmem:[#allocation11 + $0xb8] sm:$0xff]
        %v1291 = vld [vmem:[#allocation11 + $0xd8] sm:$0xff]
        %v1292 = vld [vmem:[#allocation11 + $0xf8] sm:$0xff]
        %v1293 = vld [vmem:[#allocation11 + $0x118] sm:$0xff]
        %v1294 = vld [vmem:[#allocation11 + $0x138] sm:$0xff]
        %v1295 = vld [vmem:[#allocation11 + $0x158] sm:$0xff]
        %v1296 = vld [vmem:[#allocation11 + $0x178] sm:$0xff]
        %v1297 = vld [vmem:[#allocation11 + $0x198] sm:$0xff]
        %v1298 = vld [vmem:[#allocation11 + $0x1b8] sm:$0xff]
        %v1299 = vld [vmem:[#allocation11 + $0x1d8] sm:$0xff]
        %v1300 = vld [vmem:[#allocation11 + $0x1f8] sm:$0xff]
        %v1301 = vld [vmem:[%s1024 + $0x18] sm:$0xff]
        %1302 = vmatprep.subr.mxu0 0.0
        %1303 = vmatpush1.msra.mxu0 %v1285
        %1304 = vmatprep.subr.mxu0 0.0
        %1305 = vmatpush1.msra.mxu0 %v1286
        %1306 = vmatprep.subr.mxu0 0.0
        %1307 = vmatpush1.msra.mxu0 %v1287
        %1308 = vmatprep.subr.mxu0 0.0
        %1309 = vmatpush1.msra.mxu0 %v1288
        %1310 = vmatprep.subr.mxu0 0.0
        %1311 = vmatpush1.msra.mxu0 %v1289
        %1312 = vmatprep.subr.mxu0 0.0
        %1313 = vmatpush1.msra.mxu0 %v1290
        %1314 = vmatprep.subr.mxu0 0.0
        %1315 = vmatpush1.msra.mxu0 %v1291
        %1316 = vmatprep.subr.mxu0 0.0
        %1317 = vmatpush1.msra.mxu0 %v1292
        %1318 = vmatprep.subr.mxu0 0.0
        %1319 = vmatpush1.msra.mxu0 %v1293
        %1320 = vmatprep.subr.mxu0 0.0
        %1321 = vmatpush1.msra.mxu0 %v1294
        %1322 = vmatprep.subr.mxu0 0.0
        %1323 = vmatpush1.msra.mxu0 %v1295
        %1324 = vmatprep.subr.mxu0 0.0
        %1325 = vmatpush1.msra.mxu0 %v1296
        %1326 = vmatprep.subr.mxu0 0.0
        %1327 = vmatpush1.msra.mxu0 %v1297
        %1328 = vmatprep.subr.mxu0 0.0
        %1329 = vmatpush1.msra.mxu0 %v1298
        %1330 = vmatprep.subr.mxu0 0.0
        %1331 = vmatpush1.msra.mxu0 %v1299
        %1332 = vmatprep.subr.mxu0 0.0
        %1333 = vmatpush1.msra.mxu0 %v1300
        %1334 = vmatprep.subr.mxu0 0.0
        %1335 = vmatpush1.msra.mxu0 0.0
        %1336 = vmatprep.subr.mxu0 0.0
        %1337 = vmatpush1.msra.mxu0 0.0
        %1338 = vmatprep.subr.mxu0 0.0
        %1339 = vmatpush1.msra.mxu0 0.0
        %1340 = vmatprep.subr.mxu0 0.0
        %1341 = vmatpush1.msra.mxu0 0.0
        %1342 = vmatprep.subr.mxu0 0.0
        %1343 = vmatpush1.msra.mxu0 0.0
        %1344 = vmatprep.subr.mxu0 0.0
        %1345 = vmatpush1.msra.mxu0 0.0
        %1346 = vmatprep.subr.mxu0 0.0
        %1347 = vmatpush1.msra.mxu0 0.0
        %1348 = vmatprep.subr.mxu0 0.0
        %1349 = vmatpush1.msra.mxu0 0.0
        %1350 = vmatprep.subr.mxu0 0.0
        %1351 = vmatpush1.msra.mxu0 0.0
        %1352 = vmatprep.subr.mxu0 0.0
        %1353 = vmatpush1.msra.mxu0 0.0
        %1354 = vmatprep.subr.mxu0 0.0
        %1355 = vmatpush1.msra.mxu0 0.0
        %1356 = vmatprep.subr.mxu0 0.0
        %1357 = vmatpush1.msra.mxu0 0.0
        %1358 = vmatprep.subr.mxu0 0.0
        %1359 = vmatpush1.msra.mxu0 0.0
        %1360 = vmatprep.subr.mxu0 0.0
        %1361 = vmatpush1.msra.mxu0 0.0
        %1362 = vmatprep.subr.mxu0 0.0
        %1363 = vmatpush1.msra.mxu0 0.0
        %1364 = vmatprep.subr.mxu0 0.0
        %1365 = vmatpush1.msra.mxu0 0.0
        %1366 = vmatprep.mubr.f32.mxu0 0.0
        %1367 = vmatmul.mubr.f32.gmra.mrb[0].mxu0 %v1002
        %v1368 = vpop.f32.mrb[0].mxu0
        %v1369 = vadd.f32 0.0, %v1368
        %v1370 = vpop.f32.mrb[0].mxu0
        %1371 = vdwg.mxu0
        %v1372 = vadd.f32 %v1301, %v1369
        %v1373 = vmul.f32 %v1372, 0.5
        %v1374 = vtanh.pop %v1373
        %v1375 = vmul.f32 %v1374, 0.5
        %v1376 = vadd.f32 %v1375, 0.5
        %v1377 = vtanh.pop %v1284
        %v1378 = vmul.f32 %v1376, %v1377
        %s1379 = smul.u32 %s35, 3
        %p1380 = scmp.lt.s32.totalorder %s1379, 8
        %s1381 = scalar_select %p1380, 1, 0
        %v1382 = vstv %s1381
        %vm1383 = vcmp.eq.s32.totalorder %v1382, 1
        %v1384 = vsel %vm1383, %v1378, %v1002
        %v1385 = vsel %vm1383, %v1284, %v1003
        %1386 = vst [vmem:[%s467] sm:$0xff] %v1384
        // Predicated region
        $region73: #{tpu_custom_call.1} parent=47 // pred_check
          %p1387 = pneg %p1001
        $region74: #{tpu_custom_call.1} parent=47 // pred_check_branch
          %1389 = sbr.rel (%p1387) target = $region76
        $region75: #{tpu_custom_call.1} parent=47 // pred_region
          %v1390 = vld [vmem:[%s417] sm:$0xff]
          %v1392 = vlaneseq
          %v1393 = vshrl.u32 %v1392, 7
          %v1394 = vsub.s32 0, %v1393
          %v1395 = vrot.slane %v500, %v1394
          %v1396 = vlaneseq
          %v1397 = vshrl.u32 %v1396, 7
          %v1398 = vsub.s32 1, %v1397
          %v1399 = vrot.slane %v500, %v1398
          %v1400 = vlaneseq
          %v1401 = vshrl.u32 %v1400, 7
          %v1402 = vsub.s32 2, %v1401
          %v1403 = vrot.slane %v500, %v1402
          %v1404 = vlaneseq
          %v1405 = vshrl.u32 %v1404, 7
          %v1406 = vsub.s32 3, %v1405
          %v1407 = vrot.slane %v500, %v1406
          %vm1412 = vcmask 130048
          %v1414 = vsel %vm1412, %v1390, 0
          %1416 = vmatprep.subr.mxu0 %v502
          %1417 = vmatpush1.msra.mxu0 %v501
          %1418 = vmatprep.subr.mxu0 %v506
          %1419 = vmatpush1.msra.mxu0 %v505
          %1420 = vmatprep.subr.mxu0 0.0
          %1421 = vmatpush1.msra.mxu0 0.0
          %1422 = vmatprep.subr.mxu0 0.0
          %1423 = vmatpush1.msra.mxu0 0.0
          %1424 = vmatprep.subr.mxu0 0.0
          %1425 = vmatpush1.msra.mxu0 0.0
          %1426 = vmatprep.subr.mxu0 0.0
          %1427 = vmatpush1.msra.mxu0 0.0
          %1428 = vmatprep.subr.mxu0 0.0
          %1429 = vmatpush1.msra.mxu0 0.0
          %1430 = vmatprep.subr.mxu0 0.0
          %1431 = vmatpush1.msra.mxu0 0.0
          %1432 = vmatprep.subr.mxu0 0.0
          %1433 = vmatpush1.msra.mxu0 0.0
          %1434 = vmatprep.subr.mxu0 0.0
          %1435 = vmatpush1.msra.mxu0 0.0
          %1436 = vmatprep.subr.mxu0 0.0
          %1437 = vmatpush1.msra.mxu0 0.0
          %1438 = vmatprep.subr.mxu0 0.0
          %1439 = vmatpush1.msra.mxu0 0.0
          %1440 = vmatprep.subr.mxu0 0.0
          %1441 = vmatpush1.msra.mxu0 0.0
          %1442 = vmatprep.subr.mxu0 0.0
          %1443 = vmatpush1.msra.mxu0 0.0
          %1444 = vmatprep.subr.mxu0 0.0
          %1445 = vmatpush1.msra.mxu0 0.0
          %1446 = vmatprep.subr.mxu0 0.0
          %1447 = vmatpush1.msra.mxu0 0.0
          %1448 = vmatprep.subr.mxu0 0.0
          %1449 = vmatpush1.msra.mxu0 0.0
          %1450 = vmatprep.subr.mxu0 0.0
          %1451 = vmatpush1.msra.mxu0 0.0
          %1452 = vmatprep.subr.mxu0 0.0
          %1453 = vmatpush1.msra.mxu0 0.0
          %1454 = vmatprep.subr.mxu0 0.0
          %1455 = vmatpush1.msra.mxu0 0.0
          %1456 = vmatprep.subr.mxu0 0.0
          %1457 = vmatpush1.msra.mxu0 0.0
          %1458 = vmatprep.subr.mxu0 0.0
          %1459 = vmatpush1.msra.mxu0 0.0
          %1460 = vmatprep.subr.mxu0 0.0
          %1461 = vmatpush1.msra.mxu0 0.0
          %1462 = vmatprep.subr.mxu0 0.0
          %1463 = vmatpush1.msra.mxu0 0.0
          %1464 = vmatprep.subr.mxu0 0.0
          %1465 = vmatpush1.msra.mxu0 0.0
          %1466 = vmatprep.subr.mxu0 0.0
          %1467 = vmatpush1.msra.mxu0 0.0
          %1468 = vmatprep.subr.mxu0 0.0
          %1469 = vmatpush1.msra.mxu0 0.0
          %1470 = vmatprep.subr.mxu0 0.0
          %1471 = vmatpush1.msra.mxu0 0.0
          %1472 = vmatprep.subr.mxu0 0.0
          %1473 = vmatpush1.msra.mxu0 0.0
          %1474 = vmatprep.subr.mxu0 0.0
          %1475 = vmatpush1.msra.mxu0 0.0
          %1476 = vmatprep.subr.mxu0 0.0
          %1477 = vmatpush1.msra.mxu0 0.0
          %1478 = vmatprep.subr.mxu0 0.0
          %1479 = vmatpush1.msra.mxu0 0.0
          %1480 = vmatprep.mubr.f32.mxu0 0.0
          %1481 = vmatmul.mubr.f32.gmra.mrb[0].mxu0 %v1414
          %v1482 = vpop.f32.mrb[0].mxu0
          %v1483 = vadd.f32 %v1395, %v1482
          %v1484 = vpop.f32.mrb[0].mxu0
          %v1485 = vadd.f32 %v1399, %v1484
          %1486 = vdwg.mxu0
          %1487 = vmatprep.subr.mxu0 %v504
          %1488 = vmatpush1.msra.mxu0 %v503
          %1489 = vmatprep.subr.mxu0 %v508
          %1490 = vmatpush1.msra.mxu0 %v507
          %1491 = vmatprep.subr.mxu0 0.0
          %1492 = vmatpush1.msra.mxu0 0.0
          %1493 = vmatprep.subr.mxu0 0.0
          %1494 = vmatpush1.msra.mxu0 0.0
          %1495 = vmatprep.subr.mxu0 0.0
          %1496 = vmatpush1.msra.mxu0 0.0
          %1497 = vmatprep.subr.mxu0 0.0
          %1498 = vmatpush1.msra.mxu0 0.0
          %1499 = vmatprep.subr.mxu0 0.0
          %1500 = vmatpush1.msra.mxu0 0.0
          %1501 = vmatprep.subr.mxu0 0.0
          %1502 = vmatpush1.msra.mxu0 0.0
          %1503 = vmatprep.subr.mxu0 0.0
          %1504 = vmatpush1.msra.mxu0 0.0
          %1505 = vmatprep.subr.mxu0 0.0
          %1506 = vmatpush1.msra.mxu0 0.0
          %1507 = vmatprep.subr.mxu0 0.0
          %1508 = vmatpush1.msra.mxu0 0.0
          %1509 = vmatprep.subr.mxu0 0.0
          %1510 = vmatpush1.msra.mxu0 0.0
          %1511 = vmatprep.subr.mxu0 0.0
          %1512 = vmatpush1.msra.mxu0 0.0
          %1513 = vmatprep.subr.mxu0 0.0
          %1514 = vmatpush1.msra.mxu0 0.0
          %1515 = vmatprep.subr.mxu0 0.0
          %1516 = vmatpush1.msra.mxu0 0.0
          %1517 = vmatprep.subr.mxu0 0.0
          %1518 = vmatpush1.msra.mxu0 0.0
          %1519 = vmatprep.subr.mxu0 0.0
          %1520 = vmatpush1.msra.mxu0 0.0
          %1521 = vmatprep.subr.mxu0 0.0
          %1522 = vmatpush1.msra.mxu0 0.0
          %1523 = vmatprep.subr.mxu0 0.0
          %1524 = vmatpush1.msra.mxu0 0.0
          %1525 = vmatprep.subr.mxu0 0.0
          %1526 = vmatpush1.msra.mxu0 0.0
          %1527 = vmatprep.subr.mxu0 0.0
          %1528 = vmatpush1.msra.mxu0 0.0
          %1529 = vmatprep.subr.mxu0 0.0
          %1530 = vmatpush1.msra.mxu0 0.0
          %1531 = vmatprep.subr.mxu0 0.0
          %1532 = vmatpush1.msra.mxu0 0.0
          %1533 = vmatprep.subr.mxu0 0.0
          %1534 = vmatpush1.msra.mxu0 0.0
          %1535 = vmatprep.subr.mxu0 0.0
          %1536 = vmatpush1.msra.mxu0 0.0
          %1537 = vmatprep.subr.mxu0 0.0
          %1538 = vmatpush1.msra.mxu0 0.0
          %1539 = vmatprep.subr.mxu0 0.0
          %1540 = vmatpush1.msra.mxu0 0.0
          %1541 = vmatprep.subr.mxu0 0.0
          %1542 = vmatpush1.msra.mxu0 0.0
          %1543 = vmatprep.subr.mxu0 0.0
          %1544 = vmatpush1.msra.mxu0 0.0
          %1545 = vmatprep.subr.mxu0 0.0
          %1546 = vmatpush1.msra.mxu0 0.0
          %1547 = vmatprep.subr.mxu0 0.0
          %1548 = vmatpush1.msra.mxu0 0.0
          %1549 = vmatprep.subr.mxu0 0.0
          %1550 = vmatpush1.msra.mxu0 0.0
          %1551 = vmatprep.mubr.f32.mxu0 0.0
          %1552 = vmatmul.mubr.f32.gmra.mrb[0].mxu0 %v1414
          %v1553 = vpop.f32.mrb[0].mxu0
          %v1554 = vadd.f32 %v1403, %v1553
          %v1555 = vpop.f32.mrb[0].mxu0
          %v1556 = vadd.f32 %v1407, %v1555
          %1557 = vdwg.mxu0
          %s1558 = sshra.s32 %s499, 3
          %s1559 = sand.u32 %s499, 7
          %s1560 = smul.u32 %s1558, 4
          %s1561 = smul.addr %s1560, 8
          %s1562 = scalar_lea.vmem [#allocation2], %s1561
          %1563 = vst [vmem:[%s1562] sm:$0xff] %v1483
          %1564 = vst [vmem:[%s1562 + $0x8] sm:$0xff] %v1485
          %1565 = vst [vmem:[%s1562 + $0x10] sm:$0xff] %v1554
          %1566 = vst [vmem:[%s1562 + $0x18] sm:$0xff] %v1556
        $region76: #{tpu_custom_call.1} parent=47 // pred_fallthru
          _
        %s1567 = sadd.s32 %s497, 8
        %v1568 = vld [vmem:[#allocation11] sm:$0xff]
        %v1569 = vld [vmem:[#allocation11 + $0x20] sm:$0xff]
        %v1570 = vld [vmem:[#allocation11 + $0x40] sm:$0xff]
        %v1571 = vld [vmem:[#allocation11 + $0x60] sm:$0xff]
        %v1572 = vld [vmem:[#allocation11 + $0x80] sm:$0xff]
        %v1573 = vld [vmem:[#allocation11 + $0xa0] sm:$0xff]
        %v1574 = vld [vmem:[#allocation11 + $0xc0] sm:$0xff]
        %v1575 = vld [vmem:[#allocation11 + $0xe0] sm:$0xff]
        %v1576 = vld [vmem:[#allocation11 + $0x100] sm:$0xff]
        %v1577 = vld [vmem:[#allocation11 + $0x120] sm:$0xff]
        %v1578 = vld [vmem:[#allocation11 + $0x140] sm:$0xff]
        %v1579 = vld [vmem:[#allocation11 + $0x160] sm:$0xff]
        %v1580 = vld [vmem:[#allocation11 + $0x180] sm:$0xff]
        %v1581 = vld [vmem:[#allocation11 + $0x1a0] sm:$0xff]
        %v1582 = vld [vmem:[#allocation11 + $0x1c0] sm:$0xff]
        %v1583 = vld [vmem:[#allocation11 + $0x1e0] sm:$0xff]
        %s1584 = sshra.s32 %s1567, 3
        %s1585 = sand.u32 %s1567, 7
        %s1586 = smul.u32 %s1584, 4
        %s1587 = smul.addr %s1586, 8
        %s1588 = scalar_lea.vmem [#allocation2], %s1587
        %v1589 = vld [vmem:[%s1588] sm:$0xff]
        %1590 = vmatprep.subr.mxu0 0.0
        %1591 = vmatpush1.msra.mxu0 %v1568
        %1592 = vmatprep.subr.mxu0 0.0
        %1593 = vmatpush1.msra.mxu0 %v1569
        %1594 = vmatprep.subr.mxu0 0.0
        %1595 = vmatpush1.msra.mxu0 %v1570
        %1596 = vmatprep.subr.mxu0 0.0
        %1597 = vmatpush1.msra.mxu0 %v1571
        %1598 = vmatprep.subr.mxu0 0.0
        %1599 = vmatpush1.msra.mxu0 %v1572
        %1600 = vmatprep.subr.mxu0 0.0
        %1601 = vmatpush1.msra.mxu0 %v1573
        %1602 = vmatprep.subr.mxu0 0.0
        %1603 = vmatpush1.msra.mxu0 %v1574
        %1604 = vmatprep.subr.mxu0 0.0
        %1605 = vmatpush1.msra.mxu0 %v1575
        %1606 = vmatprep.subr.mxu0 0.0
        %1607 = vmatpush1.msra.mxu0 %v1576
        %1608 = vmatprep.subr.mxu0 0.0
        %1609 = vmatpush1.msra.mxu0 %v1577
        %1610 = vmatprep.subr.mxu0 0.0
        %1611 = vmatpush1.msra.mxu0 %v1578
        %1612 = vmatprep.subr.mxu0 0.0
        %1613 = vmatpush1.msra.mxu0 %v1579
        %1614 = vmatprep.subr.mxu0 0.0
        %1615 = vmatpush1.msra.mxu0 %v1580
        %1616 = vmatprep.subr.mxu0 0.0
        %1617 = vmatpush1.msra.mxu0 %v1581
        %1618 = vmatprep.subr.mxu0 0.0
        %1619 = vmatpush1.msra.mxu0 %v1582
        %1620 = vmatprep.subr.mxu0 0.0
        %1621 = vmatpush1.msra.mxu0 %v1583
        %1622 = vmatprep.subr.mxu0 0.0
        %1623 = vmatpush1.msra.mxu0 0.0
        %1624 = vmatprep.subr.mxu0 0.0
        %1625 = vmatpush1.msra.mxu0 0.0
        %1626 = vmatprep.subr.mxu0 0.0
        %1627 = vmatpush1.msra.mxu0 0.0
        %1628 = vmatprep.subr.mxu0 0.0
        %1629 = vmatpush1.msra.mxu0 0.0
        %1630 = vmatprep.subr.mxu0 0.0
        %1631 = vmatpush1.msra.mxu0 0.0
        %1632 = vmatprep.subr.mxu0 0.0
        %1633 = vmatpush1.msra.mxu0 0.0
        %1634 = vmatprep.subr.mxu0 0.0
        %1635 = vmatpush1.msra.mxu0 0.0
        %1636 = vmatprep.subr.mxu0 0.0
        %1637 = vmatpush1.msra.mxu0 0.0
        %1638 = vmatprep.subr.mxu0 0.0
        %1639 = vmatpush1.msra.mxu0 0.0
        %1640 = vmatprep.subr.mxu0 0.0
        %1641 = vmatpush1.msra.mxu0 0.0
        %1642 = vmatprep.subr.mxu0 0.0
        %1643 = vmatpush1.msra.mxu0 0.0
        %1644 = vmatprep.subr.mxu0 0.0
        %1645 = vmatpush1.msra.mxu0 0.0
        %1646 = vmatprep.subr.mxu0 0.0
        %1647 = vmatpush1.msra.mxu0 0.0
        %1648 = vmatprep.subr.mxu0 0.0
        %1649 = vmatpush1.msra.mxu0 0.0
        %1650 = vmatprep.subr.mxu0 0.0
        %1651 = vmatpush1.msra.mxu0 0.0
        %1652 = vmatprep.subr.mxu0 0.0
        %1653 = vmatpush1.msra.mxu0 0.0
        %1654 = vmatprep.mubr.f32.mxu0 0.0
        %1655 = vmatmul.mubr.f32.gmra.mrb[0].mxu0 %v1384
        %v1656 = vpop.f32.mrb[0].mxu0
        %v1657 = vadd.f32 0.0, %v1656
        %v1658 = vpop.f32.mrb[0].mxu0
        %1659 = vdwg.mxu0
        %v1660 = vadd.f32 %v1589, %v1657
        %v1661 = vmul.f32 %v1660, 0.5
        %v1662 = vtanh.pop %v1661
        %v1663 = vmul.f32 %v1662, 0.5
        %v1664 = vadd.f32 %v1663, 0.5
        %v1665 = vld [vmem:[#allocation11 + $0x10] sm:$0xff]
        %v1666 = vld [vmem:[#allocation11 + $0x30] sm:$0xff]
        %v1667 = vld [vmem:[#allocation11 + $0x50] sm:$0xff]
        %v1668 = vld [vmem:[#allocation11 + $0x70] sm:$0xff]
        %v1669 = vld [vmem:[#allocation11 + $0x90] sm:$0xff]
        %v1670 = vld [vmem:[#allocation11 + $0xb0] sm:$0xff]
        %v1671 = vld [vmem:[#allocation11 + $0xd0] sm:$0xff]
        %v1672 = vld [vmem:[#allocation11 + $0xf0] sm:$0xff]
        %v1673 = vld [vmem:[#allocation11 + $0x110] sm:$0xff]
        %v1674 = vld [vmem:[#allocation11 + $0x130] sm:$0xff]
        %v1675 = vld [vmem:[#allocation11 + $0x150] sm:$0xff]
        %v1676 = vld [vmem:[#allocation11 + $0x170] sm:$0xff]
        %v1677 = vld [vmem:[#allocation11 + $0x190] sm:$0xff]
        %v1678 = vld [vmem:[#allocation11 + $0x1b0] sm:$0xff]
        %v1679 = vld [vmem:[#allocation11 + $0x1d0] sm:$0xff]
        %v1680 = vld [vmem:[#allocation11 + $0x1f0] sm:$0xff]
        %v1681 = vld [vmem:[%s1588 + $0x10] sm:$0xff]
        %1682 = vmatprep.subr.mxu0 0.0
        %1683 = vmatpush1.msra.mxu0 %v1665
        %1684 = vmatprep.subr.mxu0 0.0
        %1685 = vmatpush1.msra.mxu0 %v1666
        %1686 = vmatprep.subr.mxu0 0.0
        %1687 = vmatpush1.msra.mxu0 %v1667
        %1688 = vmatprep.subr.mxu0 0.0
        %1689 = vmatpush1.msra.mxu0 %v1668
        %1690 = vmatprep.subr.mxu0 0.0
        %1691 = vmatpush1.msra.mxu0 %v1669
        %1692 = vmatprep.subr.mxu0 0.0
        %1693 = vmatpush1.msra.mxu0 %v1670
        %1694 = vmatprep.subr.mxu0 0.0
        %1695 = vmatpush1.msra.mxu0 %v1671
        %1696 = vmatprep.subr.mxu0 0.0
        %1697 = vmatpush1.msra.mxu0 %v1672
        %1698 = vmatprep.subr.mxu0 0.0
        %1699 = vmatpush1.msra.mxu0 %v1673
        %1700 = vmatprep.subr.mxu0 0.0
        %1701 = vmatpush1.msra.mxu0 %v1674
        %1702 = vmatprep.subr.mxu0 0.0
        %1703 = vmatpush1.msra.mxu0 %v1675
        %1704 = vmatprep.subr.mxu0 0.0
        %1705 = vmatpush1.msra.mxu0 %v1676
        %1706 = vmatprep.subr.mxu0 0.0
        %1707 = vmatpush1.msra.mxu0 %v1677
        %1708 = vmatprep.subr.mxu0 0.0
        %1709 = vmatpush1.msra.mxu0 %v1678
        %1710 = vmatprep.subr.mxu0 0.0
        %1711 = vmatpush1.msra.mxu0 %v1679
        %1712 = vmatprep.subr.mxu0 0.0
        %1713 = vmatpush1.msra.mxu0 %v1680
        %1714 = vmatprep.subr.mxu0 0.0
        %1715 = vmatpush1.msra.mxu0 0.0
        %1716 = vmatprep.subr.mxu0 0.0
        %1717 = vmatpush1.msra.mxu0 0.0
        %1718 = vmatprep.subr.mxu0 0.0
        %1719 = vmatpush1.msra.mxu0 0.0
        %1720 = vmatprep.subr.mxu0 0.0
        %1721 = vmatpush1.msra.mxu0 0.0
        %1722 = vmatprep.subr.mxu0 0.0
        %1723 = vmatpush1.msra.mxu0 0.0
        %1724 = vmatprep.subr.mxu0 0.0
        %1725 = vmatpush1.msra.mxu0 0.0
        %1726 = vmatprep.subr.mxu0 0.0
        %1727 = vmatpush1.msra.mxu0 0.0
        %1728 = vmatprep.subr.mxu0 0.0
        %1729 = vmatpush1.msra.mxu0 0.0
        %1730 = vmatprep.subr.mxu0 0.0
        %1731 = vmatpush1.msra.mxu0 0.0
        %1732 = vmatprep.subr.mxu0 0.0
        %1733 = vmatpush1.msra.mxu0 0.0
        %1734 = vmatprep.subr.mxu0 0.0
        %1735 = vmatpush1.msra.mxu0 0.0
        %1736 = vmatprep.subr.mxu0 0.0
        %1737 = vmatpush1.msra.mxu0 0.0
        %1738 = vmatprep.subr.mxu0 0.0
        %1739 = vmatpush1.msra.mxu0 0.0
        %1740 = vmatprep.subr.mxu0 0.0
        %1741 = vmatpush1.msra.mxu0 0.0
        %1742 = vmatprep.subr.mxu0 0.0
        %1743 = vmatpush1.msra.mxu0 0.0
        %1744 = vmatprep.subr.mxu0 0.0
        %1745 = vmatpush1.msra.mxu0 0.0
        %1746 = vmatprep.mubr.f32.mxu0 0.0
        %1747 = vmatmul.mubr.f32.gmra.mrb[0].mxu0 %v1384
        %v1748 = vpop.f32.mrb[0].mxu0
        %v1749 = vadd.f32 0.0, %v1748
        %v1750 = vpop.f32.mrb[0].mxu0
        %1751 = vdwg.mxu0
        %v1752 = vadd.f32 %v1681, %v1749
        %v1753 = vtanh.pop %v1752
        %v1754 = vmul.f32 %v1664, %v1753
        %v1755 = vld [vmem:[#allocation11 + $0x8] sm:$0xff]
        %v1756 = vld [vmem:[#allocation11 + $0x28] sm:$0xff]
        %v1757 = vld [vmem:[#allocation11 + $0x48] sm:$0xff]
        %v1758 = vld [vmem:[#allocation11 + $0x68] sm:$0xff]
        %v1759 = vld [vmem:[#allocation11 + $0x88] sm:$0xff]
        %v1760 = vld [vmem:[#allocation11 + $0xa8] sm:$0xff]
        %v1761 = vld [vmem:[#allocation11 + $0xc8] sm:$0xff]
        %v1762 = vld [vmem:[#allocation11 + $0xe8] sm:$0xff]
        %v1763 = vld [vmem:[#allocation11 + $0x108] sm:$0xff]
        %v1764 = vld [vmem:[#allocation11 + $0x128] sm:$0xff]
        %v1765 = vld [vmem:[#allocation11 + $0x148] sm:$0xff]
        %v1766 = vld [vmem:[#allocation11 + $0x168] sm:$0xff]
        %v1767 = vld [vmem:[#allocation11 + $0x188] sm:$0xff]
        %v1768 = vld [vmem:[#allocation11 + $0x1a8] sm:$0xff]
        %v1769 = vld [vmem:[#allocation11 + $0x1c8] sm:$0xff]
        %v1770 = vld [vmem:[#allocation11 + $0x1e8] sm:$0xff]
        %v1771 = vld [vmem:[%s1588 + $0x8] sm:$0xff]
        %1772 = vmatprep.subr.mxu0 0.0
        %1773 = vmatpush1.msra.mxu0 %v1755
        %1774 = vmatprep.subr.mxu0 0.0
        %1775 = vmatpush1.msra.mxu0 %v1756
        %1776 = vmatprep.subr.mxu0 0.0
        %1777 = vmatpush1.msra.mxu0 %v1757
        %1778 = vmatprep.subr.mxu0 0.0
        %1779 = vmatpush1.msra.mxu0 %v1758
        %1780 = vmatprep.subr.mxu0 0.0
        %1781 = vmatpush1.msra.mxu0 %v1759
        %1782 = vmatprep.subr.mxu0 0.0
        %1783 = vmatpush1.msra.mxu0 %v1760
        %1784 = vmatprep.subr.mxu0 0.0
        %1785 = vmatpush1.msra.mxu0 %v1761
        %1786 = vmatprep.subr.mxu0 0.0
        %1787 = vmatpush1.msra.mxu0 %v1762
        %1788 = vmatprep.subr.mxu0 0.0
        %1789 = vmatpush1.msra.mxu0 %v1763
        %1790 = vmatprep.subr.mxu0 0.0
        %1791 = vmatpush1.msra.mxu0 %v1764
        %1792 = vmatprep.subr.mxu0 0.0
        %1793 = vmatpush1.msra.mxu0 %v1765
        %1794 = vmatprep.subr.mxu0 0.0
        %1795 = vmatpush1.msra.mxu0 %v1766
        %1796 = vmatprep.subr.mxu0 0.0
        %1797 = vmatpush1.msra.mxu0 %v1767
        %1798 = vmatprep.subr.mxu0 0.0
        %1799 = vmatpush1.msra.mxu0 %v1768
        %1800 = vmatprep.subr.mxu0 0.0
        %1801 = vmatpush1.msra.mxu0 %v1769
        %1802 = vmatprep.subr.mxu0 0.0
        %1803 = vmatpush1.msra.mxu0 %v1770
        %1804 = vmatprep.subr.mxu0 0.0
        %1805 = vmatpush1.msra.mxu0 0.0
        %1806 = vmatprep.subr.mxu0 0.0
        %1807 = vmatpush1.msra.mxu0 0.0
        %1808 = vmatprep.subr.mxu0 0.0
        %1809 = vmatpush1.msra.mxu0 0.0
        %1810 = vmatprep.subr.mxu0 0.0
        %1811 = vmatpush1.msra.mxu0 0.0
        %1812 = vmatprep.subr.mxu0 0.0
        %1813 = vmatpush1.msra.mxu0 0.0
        %1814 = vmatprep.subr.mxu0 0.0
        %1815 = vmatpush1.msra.mxu0 0.0
        %1816 = vmatprep.subr.mxu0 0.0
        %1817 = vmatpush1.msra.mxu0 0.0
        %1818 = vmatprep.subr.mxu0 0.0
        %1819 = vmatpush1.msra.mxu0 0.0
        %1820 = vmatprep.subr.mxu0 0.0
        %1821 = vmatpush1.msra.mxu0 0.0
        %1822 = vmatprep.subr.mxu0 0.0
        %1823 = vmatpush1.msra.mxu0 0.0
        %1824 = vmatprep.subr.mxu0 0.0
        %1825 = vmatpush1.msra.mxu0 0.0
        %1826 = vmatprep.subr.mxu0 0.0
        %1827 = vmatpush1.msra.mxu0 0.0
        %1828 = vmatprep.subr.mxu0 0.0
        %1829 = vmatpush1.msra.mxu0 0.0
        %1830 = vmatprep.subr.mxu0 0.0
        %1831 = vmatpush1.msra.mxu0 0.0
        %1832 = vmatprep.subr.mxu0 0.0
        %1833 = vmatpush1.msra.mxu0 0.0
        %1834 = vmatprep.subr.mxu0 0.0
        %1835 = vmatpush1.msra.mxu0 0.0
        %1836 = vmatprep.mubr.f32.mxu0 0.0
        %1837 = vmatmul.mubr.f32.gmra.mrb[0].mxu0 %v1384
        %v1838 = vpop.f32.mrb[0].mxu0
        %v1839 = vadd.f32 0.0, %v1838
        %v1840 = vpop.f32.mrb[0].mxu0
        %1841 = vdwg.mxu0
        %v1842 = vadd.f32 %v1771, %v1839
        %v1843 = vmul.f32 %v1842, 0.5
        %v1844 = vtanh.pop %v1843
        %v1845 = vmul.f32 %v1844, 0.5
        %v1846 = vadd.f32 %v1845, 0.5
        %v1847 = vmul.f32 %v1846, %v1385
        %v1848 = vadd.f32 %v1847, %v1754
        %v1849 = vld [vmem:[#allocation11 + $0x18] sm:$0xff]
        %v1850 = vld [vmem:[#allocation11 + $0x38] sm:$0xff]
        %v1851 = vld [vmem:[#allocation11 + $0x58] sm:$0xff]
        %v1852 = vld [vmem:[#allocation11 + $0x78] sm:$0xff]
        %v1853 = vld [vmem:[#allocation11 + $0x98] sm:$0xff]
        %v1854 = vld [vmem:[#allocation11 + $0xb8] sm:$0xff]
        %v1855 = vld [vmem:[#allocation11 + $0xd8] sm:$0xff]
        %v1856 = vld [vmem:[#allocation11 + $0xf8] sm:$0xff]
        %v1857 = vld [vmem:[#allocation11 + $0x118] sm:$0xff]
        %v1858 = vld [vmem:[#allocation11 + $0x138] sm:$0xff]
        %v1859 = vld [vmem:[#allocation11 + $0x158] sm:$0xff]
        %v1860 = vld [vmem:[#allocation11 + $0x178] sm:$0xff]
        %v1861 = vld [vmem:[#allocation11 + $0x198] sm:$0xff]
        %v1862 = vld [vmem:[#allocation11 + $0x1b8] sm:$0xff]
        %v1863 = vld [vmem:[#allocation11 + $0x1d8] sm:$0xff]
        %v1864 = vld [vmem:[#allocation11 + $0x1f8] sm:$0xff]
        %v1865 = vld [vmem:[%s1588 + $0x18] sm:$0xff]
        %1866 = vmatprep.subr.mxu0 0.0
        %1867 = vmatpush1.msra.mxu0 %v1849
        %1868 = vmatprep.subr.mxu0 0.0
        %1869 = vmatpush1.msra.mxu0 %v1850
        %1870 = vmatprep.subr.mxu0 0.0
        %1871 = vmatpush1.msra.mxu0 %v1851
        %1872 = vmatprep.subr.mxu0 0.0
        %1873 = vmatpush1.msra.mxu0 %v1852
        %1874 = vmatprep.subr.mxu0 0.0
        %1875 = vmatpush1.msra.mxu0 %v1853
        %1876 = vmatprep.subr.mxu0 0.0
        %1877 = vmatpush1.msra.mxu0 %v1854
        %1878 = vmatprep.subr.mxu0 0.0
        %1879 = vmatpush1.msra.mxu0 %v1855
        %1880 = vmatprep.subr.mxu0 0.0
        %1881 = vmatpush1.msra.mxu0 %v1856
        %1882 = vmatprep.subr.mxu0 0.0
        %1883 = vmatpush1.msra.mxu0 %v1857
        %1884 = vmatprep.subr.mxu0 0.0
        %1885 = vmatpush1.msra.mxu0 %v1858
        %1886 = vmatprep.subr.mxu0 0.0
        %1887 = vmatpush1.msra.mxu0 %v1859
        %1888 = vmatprep.subr.mxu0 0.0
        %1889 = vmatpush1.msra.mxu0 %v1860
        %1890 = vmatprep.subr.mxu0 0.0
        %1891 = vmatpush1.msra.mxu0 %v1861
        %1892 = vmatprep.subr.mxu0 0.0
        %1893 = vmatpush1.msra.mxu0 %v1862
        %1894 = vmatprep.subr.mxu0 0.0
        %1895 = vmatpush1.msra.mxu0 %v1863
        %1896 = vmatprep.subr.mxu0 0.0
        %1897 = vmatpush1.msra.mxu0 %v1864
        %1898 = vmatprep.subr.mxu0 0.0
        %1899 = vmatpush1.msra.mxu0 0.0
        %1900 = vmatprep.subr.mxu0 0.0
        %1901 = vmatpush1.msra.mxu0 0.0
        %1902 = vmatprep.subr.mxu0 0.0
        %1903 = vmatpush1.msra.mxu0 0.0
        %1904 = vmatprep.subr.mxu0 0.0
        %1905 = vmatpush1.msra.mxu0 0.0
        %1906 = vmatprep.subr.mxu0 0.0
        %1907 = vmatpush1.msra.mxu0 0.0
        %1908 = vmatprep.subr.mxu0 0.0
        %1909 = vmatpush1.msra.mxu0 0.0
        %1910 = vmatprep.subr.mxu0 0.0
        %1911 = vmatpush1.msra.mxu0 0.0
        %1912 = vmatprep.subr.mxu0 0.0
        %1913 = vmatpush1.msra.mxu0 0.0
        %1914 = vmatprep.subr.mxu0 0.0
        %1915 = vmatpush1.msra.mxu0 0.0
        %1916 = vmatprep.subr.mxu0 0.0
        %1917 = vmatpush1.msra.mxu0 0.0
        %1918 = vmatprep.subr.mxu0 0.0
        %1919 = vmatpush1.msra.mxu0 0.0
        %1920 = vmatprep.subr.mxu0 0.0
        %1921 = vmatpush1.msra.mxu0 0.0
        %1922 = vmatprep.subr.mxu0 0.0
        %1923 = vmatpush1.msra.mxu0 0.0
        %1924 = vmatprep.subr.mxu0 0.0
        %1925 = vmatpush1.msra.mxu0 0.0
        %1926 = vmatprep.subr.mxu0 0.0
        %1927 = vmatpush1.msra.mxu0 0.0
        %1928 = vmatprep.subr.mxu0 0.0
        %1929 = vmatpush1.msra.mxu0 0.0
        %1930 = vmatprep.mubr.f32.mxu0 0.0
        %1931 = vmatmul.mubr.f32.gmra.mrb[0].mxu0 %v1384
        %v1932 = vpop.f32.mrb[0].mxu0
        %v1933 = vadd.f32 0.0, %v1932
        %v1934 = vpop.f32.mrb[0].mxu0
        %1935 = vdwg.mxu0
        %v1936 = vadd.f32 %v1865, %v1933
        %v1937 = vmul.f32 %v1936, 0.5
        %v1938 = vtanh.pop %v1937
        %v1939 = vmul.f32 %v1938, 0.5
        %v1940 = vadd.f32 %v1939, 0.5
        %v1941 = vtanh.pop %v1848
        %v1942 = vmul.f32 %v1940, %v1941
        %s1943 = sadd.s32 %s1379, 1
        %p1944 = scmp.lt.s32.totalorder %s1943, 8
        %s1945 = scalar_select %p1944, 1, 0
        %v1946 = vstv %s1945
        %vm1947 = vcmp.eq.s32.totalorder %v1946, 1
        %v1948 = vsel %vm1947, %v1942, %v1384
        %v1949 = vsel %vm1947, %v1848, %v1385
        %s1950 = scalar_lea.vmem %s467, 8 [#allocation14]
        %1951 = vst [vmem:[%s1950] sm:$0xff] %v1948
        // Predicated region
        $region77: #{tpu_custom_call.1} parent=47 // pred_check
          %p1952 = pneg %p1001
        $region78: #{tpu_custom_call.1} parent=47 // pred_check_branch
          %1954 = sbr.rel (%p1952) target = $region80
        $region79: #{tpu_custom_call.1} parent=47 // pred_region
          %s1955 = sadd.s32 %s499, 8
          %s1956 = scalar_lea.vmem %s417, 8 [#allocation8]
          %v1957 = vld [vmem:[%s1956] sm:$0xff]
          %v1959 = vlaneseq
          %v1960 = vshrl.u32 %v1959, 7
          %v1961 = vsub.s32 0, %v1960
          %v1962 = vrot.slane %v500, %v1961
          %v1963 = vlaneseq
          %v1964 = vshrl.u32 %v1963, 7
          %v1965 = vsub.s32 1, %v1964
          %v1966 = vrot.slane %v500, %v1965
          %v1967 = vlaneseq
          %v1968 = vshrl.u32 %v1967, 7
          %v1969 = vsub.s32 2, %v1968
          %v1970 = vrot.slane %v500, %v1969
          %v1971 = vlaneseq
          %v1972 = vshrl.u32 %v1971, 7
          %v1973 = vsub.s32 3, %v1972
          %v1974 = vrot.slane %v500, %v1973
          %vm1979 = vcmask 130048
          %v1981 = vsel %vm1979, %v1957, 0
          %1983 = vmatprep.subr.mxu0 %v502
          %1984 = vmatpush1.msra.mxu0 %v501
          %1985 = vmatprep.subr.mxu0 %v506
          %1986 = vmatpush1.msra.mxu0 %v505
          %1987 = vmatprep.subr.mxu0 0.0
          %1988 = vmatpush1.msra.mxu0 0.0
          %1989 = vmatprep.subr.mxu0 0.0
          %1990 = vmatpush1.msra.mxu0 0.0
          %1991 = vmatprep.subr.mxu0 0.0
          %1992 = vmatpush1.msra.mxu0 0.0
          %1993 = vmatprep.subr.mxu0 0.0
          %1994 = vmatpush1.msra.mxu0 0.0
          %1995 = vmatprep.subr.mxu0 0.0
          %1996 = vmatpush1.msra.mxu0 0.0
          %1997 = vmatprep.subr.mxu0 0.0
          %1998 = vmatpush1.msra.mxu0 0.0
          %1999 = vmatprep.subr.mxu0 0.0
          %2000 = vmatpush1.msra.mxu0 0.0
          %2001 = vmatprep.subr.mxu0 0.0
          %2002 = vmatpush1.msra.mxu0 0.0
          %2003 = vmatprep.subr.mxu0 0.0
          %2004 = vmatpush1.msra.mxu0 0.0
          %2005 = vmatprep.subr.mxu0 0.0
          %2006 = vmatpush1.msra.mxu0 0.0
          %2007 = vmatprep.subr.mxu0 0.0
          %2008 = vmatpush1.msra.mxu0 0.0
          %2009 = vmatprep.subr.mxu0 0.0
          %2010 = vmatpush1.msra.mxu0 0.0
          %2011 = vmatprep.subr.mxu0 0.0
          %2012 = vmatpush1.msra.mxu0 0.0
          %2013 = vmatprep.subr.mxu0 0.0
          %2014 = vmatpush1.msra.mxu0 0.0
          %2015 = vmatprep.subr.mxu0 0.0
          %2016 = vmatpush1.msra.mxu0 0.0
          %2017 = vmatprep.subr.mxu0 0.0
          %2018 = vmatpush1.msra.mxu0 0.0
          %2019 = vmatprep.subr.mxu0 0.0
          %2020 = vmatpush1.msra.mxu0 0.0
          %2021 = vmatprep.subr.mxu0 0.0
          %2022 = vmatpush1.msra.mxu0 0.0
          %2023 = vmatprep.subr.mxu0 0.0
          %2024 = vmatpush1.msra.mxu0 0.0
          %2025 = vmatprep.subr.mxu0 0.0
          %2026 = vmatpush1.msra.mxu0 0.0
          %2027 = vmatprep.subr.mxu0 0.0
          %2028 = vmatpush1.msra.mxu0 0.0
          %2029 = vmatprep.subr.mxu0 0.0
          %2030 = vmatpush1.msra.mxu0 0.0
          %2031 = vmatprep.subr.mxu0 0.0
          %2032 = vmatpush1.msra.mxu0 0.0
          %2033 = vmatprep.subr.mxu0 0.0
          %2034 = vmatpush1.msra.mxu0 0.0
          %2035 = vmatprep.subr.mxu0 0.0
          %2036 = vmatpush1.msra.mxu0 0.0
          %2037 = vmatprep.subr.mxu0 0.0
          %2038 = vmatpush1.msra.mxu0 0.0
          %2039 = vmatprep.subr.mxu0 0.0
          %2040 = vmatpush1.msra.mxu0 0.0
          %2041 = vmatprep.subr.mxu0 0.0
          %2042 = vmatpush1.msra.mxu0 0.0
          %2043 = vmatprep.subr.mxu0 0.0
          %2044 = vmatpush1.msra.mxu0 0.0
          %2045 = vmatprep.subr.mxu0 0.0
          %2046 = vmatpush1.msra.mxu0 0.0
          %2047 = vmatprep.mubr.f32.mxu0 0.0
          %2048 = vmatmul.mubr.f32.gmra.mrb[0].mxu0 %v1981
          %v2049 = vpop.f32.mrb[0].mxu0
          %v2050 = vadd.f32 %v1962, %v2049
          %v2051 = vpop.f32.mrb[0].mxu0
          %v2052 = vadd.f32 %v1966, %v2051
          %2053 = vdwg.mxu0
          %2054 = vmatprep.subr.mxu0 %v504
          %2055 = vmatpush1.msra.mxu0 %v503
          %2056 = vmatprep.subr.mxu0 %v508
          %2057 = vmatpush1.msra.mxu0 %v507
          %2058 = vmatprep.subr.mxu0 0.0
          %2059 = vmatpush1.msra.mxu0 0.0
          %2060 = vmatprep.subr.mxu0 0.0
          %2061 = vmatpush1.msra.mxu0 0.0
          %2062 = vmatprep.subr.mxu0 0.0
          %2063 = vmatpush1.msra.mxu0 0.0
          %2064 = vmatprep.subr.mxu0 0.0
          %2065 = vmatpush1.msra.mxu0 0.0
          %2066 = vmatprep.subr.mxu0 0.0
          %2067 = vmatpush1.msra.mxu0 0.0
          %2068 = vmatprep.subr.mxu0 0.0
          %2069 = vmatpush1.msra.mxu0 0.0
          %2070 = vmatprep.subr.mxu0 0.0
          %2071 = vmatpush1.msra.mxu0 0.0
          %2072 = vmatprep.subr.mxu0 0.0
          %2073 = vmatpush1.msra.mxu0 0.0
          %2074 = vmatprep.subr.mxu0 0.0
          %2075 = vmatpush1.msra.mxu0 0.0
          %2076 = vmatprep.subr.mxu0 0.0
          %2077 = vmatpush1.msra.mxu0 0.0
          %2078 = vmatprep.subr.mxu0 0.0
          %2079 = vmatpush1.msra.mxu0 0.0
          %2080 = vmatprep.subr.mxu0 0.0
          %2081 = vmatpush1.msra.mxu0 0.0
          %2082 = vmatprep.subr.mxu0 0.0
          %2083 = vmatpush1.msra.mxu0 0.0
          %2084 = vmatprep.subr.mxu0 0.0
          %2085 = vmatpush1.msra.mxu0 0.0
          %2086 = vmatprep.subr.mxu0 0.0
          %2087 = vmatpush1.msra.mxu0 0.0
          %2088 = vmatprep.subr.mxu0 0.0
          %2089 = vmatpush1.msra.mxu0 0.0
          %2090 = vmatprep.subr.mxu0 0.0
          %2091 = vmatpush1.msra.mxu0 0.0
          %2092 = vmatprep.subr.mxu0 0.0
          %2093 = vmatpush1.msra.mxu0 0.0
          %2094 = vmatprep.subr.mxu0 0.0
          %2095 = vmatpush1.msra.mxu0 0.0
          %2096 = vmatprep.subr.mxu0 0.0
          %2097 = vmatpush1.msra.mxu0 0.0
          %2098 = vmatprep.subr.mxu0 0.0
          %2099 = vmatpush1.msra.mxu0 0.0
          %2100 = vmatprep.subr.mxu0 0.0
          %2101 = vmatpush1.msra.mxu0 0.0
          %2102 = vmatprep.subr.mxu0 0.0
          %2103 = vmatpush1.msra.mxu0 0.0
          %2104 = vmatprep.subr.mxu0 0.0
          %2105 = vmatpush1.msra.mxu0 0.0
          %2106 = vmatprep.subr.mxu0 0.0
          %2107 = vmatpush1.msra.mxu0 0.0
          %2108 = vmatprep.subr.mxu0 0.0
          %2109 = vmatpush1.msra.mxu0 0.0
          %2110 = vmatprep.subr.mxu0 0.0
          %2111 = vmatpush1.msra.mxu0 0.0
          %2112 = vmatprep.subr.mxu0 0.0
          %2113 = vmatpush1.msra.mxu0 0.0
          %2114 = vmatprep.subr.mxu0 0.0
          %2115 = vmatpush1.msra.mxu0 0.0
          %2116 = vmatprep.subr.mxu0 0.0
          %2117 = vmatpush1.msra.mxu0 0.0
          %2118 = vmatprep.mubr.f32.mxu0 0.0
          %2119 = vmatmul.mubr.f32.gmra.mrb[0].mxu0 %v1981
          %v2120 = vpop.f32.mrb[0].mxu0
          %v2121 = vadd.f32 %v1970, %v2120
          %v2122 = vpop.f32.mrb[0].mxu0
          %v2123 = vadd.f32 %v1974, %v2122
          %2124 = vdwg.mxu0
          %s2125 = sshra.s32 %s1955, 3
          %s2126 = sand.u32 %s1955, 7
          %s2127 = smul.u32 %s2125, 4
          %s2128 = smul.addr %s2127, 8
          %s2129 = scalar_lea.vmem [#allocation2], %s2128
          %2130 = vst [vmem:[%s2129] sm:$0xff] %v2050
          %2131 = vst [vmem:[%s2129 + $0x8] sm:$0xff] %v2052
          %2132 = vst [vmem:[%s2129 + $0x10] sm:$0xff] %v2121
          %2133 = vst [vmem:[%s2129 + $0x18] sm:$0xff] %v2123
        $region80: #{tpu_custom_call.1} parent=47 // pred_fallthru
          _
        %s2134 = sadd.s32 %s497, 16
        %v2135 = vld [vmem:[#allocation11] sm:$0xff]
        %v2136 = vld [vmem:[#allocation11 + $0x20] sm:$0xff]
        %v2137 = vld [vmem:[#allocation11 + $0x40] sm:$0xff]
        %v2138 = vld [vmem:[#allocation11 + $0x60] sm:$0xff]
        %v2139 = vld [vmem:[#allocation11 + $0x80] sm:$0xff]
        %v2140 = vld [vmem:[#allocation11 + $0xa0] sm:$0xff]
        %v2141 = vld [vmem:[#allocation11 + $0xc0] sm:$0xff]
        %v2142 = vld [vmem:[#allocation11 + $0xe0] sm:$0xff]
        %v2143 = vld [vmem:[#allocation11 + $0x100] sm:$0xff]
        %v2144 = vld [vmem:[#allocation11 + $0x120] sm:$0xff]
        %v2145 = vld [vmem:[#allocation11 + $0x140] sm:$0xff]
        %v2146 = vld [vmem:[#allocation11 + $0x160] sm:$0xff]
        %v2147 = vld [vmem:[#allocation11 + $0x180] sm:$0xff]
        %v2148 = vld [vmem:[#allocation11 + $0x1a0] sm:$0xff]
        %v2149 = vld [vmem:[#allocation11 + $0x1c0] sm:$0xff]
        %v2150 = vld [vmem:[#allocation11 + $0x1e0] sm:$0xff]
        %s2151 = sshra.s32 %s2134, 3
        %s2152 = sand.u32 %s2134, 7
        %s2153 = smul.u32 %s2151, 4
        %s2154 = smul.addr %s2153, 8
        %s2155 = scalar_lea.vmem [#allocation2], %s2154
        %v2156 = vld [vmem:[%s2155] sm:$0xff]
        %2157 = vmatprep.subr.mxu0 0.0
        %2158 = vmatpush1.msra.mxu0 %v2135
        %2159 = vmatprep.subr.mxu0 0.0
        %2160 = vmatpush1.msra.mxu0 %v2136
        %2161 = vmatprep.subr.mxu0 0.0
        %2162 = vmatpush1.msra.mxu0 %v2137
        %2163 = vmatprep.subr.mxu0 0.0
        %2164 = vmatpush1.msra.mxu0 %v2138
        %2165 = vmatprep.subr.mxu0 0.0
        %2166 = vmatpush1.msra.mxu0 %v2139
        %2167 = vmatprep.subr.mxu0 0.0
        %2168 = vmatpush1.msra.mxu0 %v2140
        %2169 = vmatprep.subr.mxu0 0.0
        %2170 = vmatpush1.msra.mxu0 %v2141
        %2171 = vmatprep.subr.mxu0 0.0
        %2172 = vmatpush1.msra.mxu0 %v2142
        %2173 = vmatprep.subr.mxu0 0.0
        %2174 = vmatpush1.msra.mxu0 %v2143
        %2175 = vmatprep.subr.mxu0 0.0
        %2176 = vmatpush1.msra.mxu0 %v2144
        %2177 = vmatprep.subr.mxu0 0.0
        %2178 = vmatpush1.msra.mxu0 %v2145
        %2179 = vmatprep.subr.mxu0 0.0
        %2180 = vmatpush1.msra.mxu0 %v2146
        %2181 = vmatprep.subr.mxu0 0.0
        %2182 = vmatpush1.msra.mxu0 %v2147
        %2183 = vmatprep.subr.mxu0 0.0
        %2184 = vmatpush1.msra.mxu0 %v2148
        %2185 = vmatprep.subr.mxu0 0.0
        %2186 = vmatpush1.msra.mxu0 %v2149
        %2187 = vmatprep.subr.mxu0 0.0
        %2188 = vmatpush1.msra.mxu0 %v2150
        %2189 = vmatprep.subr.mxu0 0.0
        %2190 = vmatpush1.msra.mxu0 0.0
        %2191 = vmatprep.subr.mxu0 0.0
        %2192 = vmatpush1.msra.mxu0 0.0
        %2193 = vmatprep.subr.mxu0 0.0
        %2194 = vmatpush1.msra.mxu0 0.0
        %2195 = vmatprep.subr.mxu0 0.0
        %2196 = vmatpush1.msra.mxu0 0.0
        %2197 = vmatprep.subr.mxu0 0.0
        %2198 = vmatpush1.msra.mxu0 0.0
        %2199 = vmatprep.subr.mxu0 0.0
        %2200 = vmatpush1.msra.mxu0 0.0
        %2201 = vmatprep.subr.mxu0 0.0
        %2202 = vmatpush1.msra.mxu0 0.0
        %2203 = vmatprep.subr.mxu0 0.0
        %2204 = vmatpush1.msra.mxu0 0.0
        %2205 = vmatprep.subr.mxu0 0.0
        %2206 = vmatpush1.msra.mxu0 0.0
        %2207 = vmatprep.subr.mxu0 0.0
        %2208 = vmatpush1.msra.mxu0 0.0
        %2209 = vmatprep.subr.mxu0 0.0
        %2210 = vmatpush1.msra.mxu0 0.0
        %2211 = vmatprep.subr.mxu0 0.0
        %2212 = vmatpush1.msra.mxu0 0.0
        %2213 = vmatprep.subr.mxu0 0.0
        %2214 = vmatpush1.msra.mxu0 0.0
        %2215 = vmatprep.subr.mxu0 0.0
        %2216 = vmatpush1.msra.mxu0 0.0
        %2217 = vmatprep.subr.mxu0 0.0
        %2218 = vmatpush1.msra.mxu0 0.0
        %2219 = vmatprep.subr.mxu0 0.0
        %2220 = vmatpush1.msra.mxu0 0.0
        %2221 = vmatprep.mubr.f32.mxu0 0.0
        %2222 = vmatmul.mubr.f32.gmra.mrb[0].mxu0 %v1948
        %v2223 = vpop.f32.mrb[0].mxu0
        %v2224 = vadd.f32 0.0, %v2223
        %v2225 = vpop.f32.mrb[0].mxu0
        %2226 = vdwg.mxu0
        %v2227 = vadd.f32 %v2156, %v2224
        %v2228 = vmul.f32 %v2227, 0.5
        %v2229 = vtanh.pop %v2228
        %v2230 = vmul.f32 %v2229, 0.5
        %v2231 = vadd.f32 %v2230, 0.5
        %v2232 = vld [vmem:[#allocation11 + $0x10] sm:$0xff]
        %v2233 = vld [vmem:[#allocation11 + $0x30] sm:$0xff]
        %v2234 = vld [vmem:[#allocation11 + $0x50] sm:$0xff]
        %v2235 = vld [vmem:[#allocation11 + $0x70] sm:$0xff]
        %v2236 = vld [vmem:[#allocation11 + $0x90] sm:$0xff]
        %v2237 = vld [vmem:[#allocation11 + $0xb0] sm:$0xff]
        %v2238 = vld [vmem:[#allocation11 + $0xd0] sm:$0xff]
        %v2239 = vld [vmem:[#allocation11 + $0xf0] sm:$0xff]
        %v2240 = vld [vmem:[#allocation11 + $0x110] sm:$0xff]
        %v2241 = vld [vmem:[#allocation11 + $0x130] sm:$0xff]
        %v2242 = vld [vmem:[#allocation11 + $0x150] sm:$0xff]
        %v2243 = vld [vmem:[#allocation11 + $0x170] sm:$0xff]
        %v2244 = vld [vmem:[#allocation11 + $0x190] sm:$0xff]
        %v2245 = vld [vmem:[#allocation11 + $0x1b0] sm:$0xff]
        %v2246 = vld [vmem:[#allocation11 + $0x1d0] sm:$0xff]
        %v2247 = vld [vmem:[#allocation11 + $0x1f0] sm:$0xff]
        %v2248 = vld [vmem:[%s2155 + $0x10] sm:$0xff]
        %2249 = vmatprep.subr.mxu0 0.0
        %2250 = vmatpush1.msra.mxu0 %v2232
        %2251 = vmatprep.subr.mxu0 0.0
        %2252 = vmatpush1.msra.mxu0 %v2233
        %2253 = vmatprep.subr.mxu0 0.0
        %2254 = vmatpush1.msra.mxu0 %v2234
        %2255 = vmatprep.subr.mxu0 0.0
        %2256 = vmatpush1.msra.mxu0 %v2235
        %2257 = vmatprep.subr.mxu0 0.0
        %2258 = vmatpush1.msra.mxu0 %v2236
        %2259 = vmatprep.subr.mxu0 0.0
        %2260 = vmatpush1.msra.mxu0 %v2237
        %2261 = vmatprep.subr.mxu0 0.0
        %2262 = vmatpush1.msra.mxu0 %v2238
        %2263 = vmatprep.subr.mxu0 0.0
        %2264 = vmatpush1.msra.mxu0 %v2239
        %2265 = vmatprep.subr.mxu0 0.0
        %2266 = vmatpush1.msra.mxu0 %v2240
        %2267 = vmatprep.subr.mxu0 0.0
        %2268 = vmatpush1.msra.mxu0 %v2241
        %2269 = vmatprep.subr.mxu0 0.0
        %2270 = vmatpush1.msra.mxu0 %v2242
        %2271 = vmatprep.subr.mxu0 0.0
        %2272 = vmatpush1.msra.mxu0 %v2243
        %2273 = vmatprep.subr.mxu0 0.0
        %2274 = vmatpush1.msra.mxu0 %v2244
        %2275 = vmatprep.subr.mxu0 0.0
        %2276 = vmatpush1.msra.mxu0 %v2245
        %2277 = vmatprep.subr.mxu0 0.0
        %2278 = vmatpush1.msra.mxu0 %v2246
        %2279 = vmatprep.subr.mxu0 0.0
        %2280 = vmatpush1.msra.mxu0 %v2247
        %2281 = vmatprep.subr.mxu0 0.0
        %2282 = vmatpush1.msra.mxu0 0.0
        %2283 = vmatprep.subr.mxu0 0.0
        %2284 = vmatpush1.msra.mxu0 0.0
        %2285 = vmatprep.subr.mxu0 0.0
        %2286 = vmatpush1.msra.mxu0 0.0
        %2287 = vmatprep.subr.mxu0 0.0
        %2288 = vmatpush1.msra.mxu0 0.0
        %2289 = vmatprep.subr.mxu0 0.0
        %2290 = vmatpush1.msra.mxu0 0.0
        %2291 = vmatprep.subr.mxu0 0.0
        %2292 = vmatpush1.msra.mxu0 0.0
        %2293 = vmatprep.subr.mxu0 0.0
        %2294 = vmatpush1.msra.mxu0 0.0
        %2295 = vmatprep.subr.mxu0 0.0
        %2296 = vmatpush1.msra.mxu0 0.0
        %2297 = vmatprep.subr.mxu0 0.0
        %2298 = vmatpush1.msra.mxu0 0.0
        %2299 = vmatprep.subr.mxu0 0.0
        %2300 = vmatpush1.msra.mxu0 0.0
        %2301 = vmatprep.subr.mxu0 0.0
        %2302 = vmatpush1.msra.mxu0 0.0
        %2303 = vmatprep.subr.mxu0 0.0
        %2304 = vmatpush1.msra.mxu0 0.0
        %2305 = vmatprep.subr.mxu0 0.0
        %2306 = vmatpush1.msra.mxu0 0.0
        %2307 = vmatprep.subr.mxu0 0.0
        %2308 = vmatpush1.msra.mxu0 0.0
        %2309 = vmatprep.subr.mxu0 0.0
        %2310 = vmatpush1.msra.mxu0 0.0
        %2311 = vmatprep.subr.mxu0 0.0
        %2312 = vmatpush1.msra.mxu0 0.0
        %2313 = vmatprep.mubr.f32.mxu0 0.0
        %2314 = vmatmul.mubr.f32.gmra.mrb[0].mxu0 %v1948
        %v2315 = vpop.f32.mrb[0].mxu0
        %v2316 = vadd.f32 0.0, %v2315
        %v2317 = vpop.f32.mrb[0].mxu0
        %2318 = vdwg.mxu0
        %v2319 = vadd.f32 %v2248, %v2316
        %v2320 = vtanh.pop %v2319
        %v2321 = vmul.f32 %v2231, %v2320
        %v2322 = vld [vmem:[#allocation11 + $0x8] sm:$0xff]
        %v2323 = vld [vmem:[#allocation11 + $0x28] sm:$0xff]
        %v2324 = vld [vmem:[#allocation11 + $0x48] sm:$0xff]
        %v2325 = vld [vmem:[#allocation11 + $0x68] sm:$0xff]
        %v2326 = vld [vmem:[#allocation11 + $0x88] sm:$0xff]
        %v2327 = vld [vmem:[#allocation11 + $0xa8] sm:$0xff]
        %v2328 = vld [vmem:[#allocation11 + $0xc8] sm:$0xff]
        %v2329 = vld [vmem:[#allocation11 + $0xe8] sm:$0xff]
        %v2330 = vld [vmem:[#allocation11 + $0x108] sm:$0xff]
        %v2331 = vld [vmem:[#allocation11 + $0x128] sm:$0xff]
        %v2332 = vld [vmem:[#allocation11 + $0x148] sm:$0xff]
        %v2333 = vld [vmem:[#allocation11 + $0x168] sm:$0xff]
        %v2334 = vld [vmem:[#allocation11 + $0x188] sm:$0xff]
        %v2335 = vld [vmem:[#allocation11 + $0x1a8] sm:$0xff]
        %v2336 = vld [vmem:[#allocation11 + $0x1c8] sm:$0xff]
        %v2337 = vld [vmem:[#allocation11 + $0x1e8] sm:$0xff]
        %v2338 = vld [vmem:[%s2155 + $0x8] sm:$0xff]
        %2339 = vmatprep.subr.mxu0 0.0
        %2340 = vmatpush1.msra.mxu0 %v2322
        %2341 = vmatprep.subr.mxu0 0.0
        %2342 = vmatpush1.msra.mxu0 %v2323
        %2343 = vmatprep.subr.mxu0 0.0
        %2344 = vmatpush1.msra.mxu0 %v2324
        %2345 = vmatprep.subr.mxu0 0.0
        %2346 = vmatpush1.msra.mxu0 %v2325
        %2347 = vmatprep.subr.mxu0 0.0
        %2348 = vmatpush1.msra.mxu0 %v2326
        %2349 = vmatprep.subr.mxu0 0.0
        %2350 = vmatpush1.msra.mxu0 %v2327
        %2351 = vmatprep.subr.mxu0 0.0
        %2352 = vmatpush1.msra.mxu0 %v2328
        %2353 = vmatprep.subr.mxu0 0.0
        %2354 = vmatpush1.msra.mxu0 %v2329
        %2355 = vmatprep.subr.mxu0 0.0
        %2356 = vmatpush1.msra.mxu0 %v2330
        %2357 = vmatprep.subr.mxu0 0.0
        %2358 = vmatpush1.msra.mxu0 %v2331
        %2359 = vmatprep.subr.mxu0 0.0
        %2360 = vmatpush1.msra.mxu0 %v2332
        %2361 = vmatprep.subr.mxu0 0.0
        %2362 = vmatpush1.msra.mxu0 %v2333
        %2363 = vmatprep.subr.mxu0 0.0
        %2364 = vmatpush1.msra.mxu0 %v2334
        %2365 = vmatprep.subr.mxu0 0.0
        %2366 = vmatpush1.msra.mxu0 %v2335
        %2367 = vmatprep.subr.mxu0 0.0
        %2368 = vmatpush1.msra.mxu0 %v2336
        %2369 = vmatprep.subr.mxu0 0.0
        %2370 = vmatpush1.msra.mxu0 %v2337
        %2371 = vmatprep.subr.mxu0 0.0
        %2372 = vmatpush1.msra.mxu0 0.0
        %2373 = vmatprep.subr.mxu0 0.0
        %2374 = vmatpush1.msra.mxu0 0.0
        %2375 = vmatprep.subr.mxu0 0.0
        %2376 = vmatpush1.msra.mxu0 0.0
        %2377 = vmatprep.subr.mxu0 0.0
        %2378 = vmatpush1.msra.mxu0 0.0
        %2379 = vmatprep.subr.mxu0 0.0
        %2380 = vmatpush1.msra.mxu0 0.0
        %2381 = vmatprep.subr.mxu0 0.0
        %2382 = vmatpush1.msra.mxu0 0.0
        %2383 = vmatprep.subr.mxu0 0.0
        %2384 = vmatpush1.msra.mxu0 0.0
        %2385 = vmatprep.subr.mxu0 0.0
        %2386 = vmatpush1.msra.mxu0 0.0
        %2387 = vmatprep.subr.mxu0 0.0
        %2388 = vmatpush1.msra.mxu0 0.0
        %2389 = vmatprep.subr.mxu0 0.0
        %2390 = vmatpush1.msra.mxu0 0.0
        %2391 = vmatprep.subr.mxu0 0.0
        %2392 = vmatpush1.msra.mxu0 0.0
        %2393 = vmatprep.subr.mxu0 0.0
        %2394 = vmatpush1.msra.mxu0 0.0
        %2395 = vmatprep.subr.mxu0 0.0
        %2396 = vmatpush1.msra.mxu0 0.0
        %2397 = vmatprep.subr.mxu0 0.0
        %2398 = vmatpush1.msra.mxu0 0.0
        %2399 = vmatprep.subr.mxu0 0.0
        %2400 = vmatpush1.msra.mxu0 0.0
        %2401 = vmatprep.subr.mxu0 0.0
        %2402 = vmatpush1.msra.mxu0 0.0
        %2403 = vmatprep.mubr.f32.mxu0 0.0
        %2404 = vmatmul.mubr.f32.gmra.mrb[0].mxu0 %v1948
        %v2405 = vpop.f32.mrb[0].mxu0
        %v2406 = vadd.f32 0.0, %v2405
        %v2407 = vpop.f32.mrb[0].mxu0
        %2408 = vdwg.mxu0
        %v2409 = vadd.f32 %v2338, %v2406
        %v2410 = vmul.f32 %v2409, 0.5
        %v2411 = vtanh.pop %v2410
        %v2412 = vmul.f32 %v2411, 0.5
        %v2413 = vadd.f32 %v2412, 0.5
        %v2414 = vmul.f32 %v2413, %v1949
        %v2415 = vadd.f32 %v2414, %v2321
        %v2416 = vld [vmem:[#allocation11 + $0x18] sm:$0xff]
        %v2417 = vld [vmem:[#allocation11 + $0x38] sm:$0xff]
        %v2418 = vld [vmem:[#allocation11 + $0x58] sm:$0xff]
        %v2419 = vld [vmem:[#allocation11 + $0x78] sm:$0xff]
        %v2420 = vld [vmem:[#allocation11 + $0x98] sm:$0xff]
        %v2421 = vld [vmem:[#allocation11 + $0xb8] sm:$0xff]
        %v2422 = vld [vmem:[#allocation11 + $0xd8] sm:$0xff]
        %v2423 = vld [vmem:[#allocation11 + $0xf8] sm:$0xff]
        %v2424 = vld [vmem:[#allocation11 + $0x118] sm:$0xff]
        %v2425 = vld [vmem:[#allocation11 + $0x138] sm:$0xff]
        %v2426 = vld [vmem:[#allocation11 + $0x158] sm:$0xff]
        %v2427 = vld [vmem:[#allocation11 + $0x178] sm:$0xff]
        %v2428 = vld [vmem:[#allocation11 + $0x198] sm:$0xff]
        %v2429 = vld [vmem:[#allocation11 + $0x1b8] sm:$0xff]
        %v2430 = vld [vmem:[#allocation11 + $0x1d8] sm:$0xff]
        %v2431 = vld [vmem:[#allocation11 + $0x1f8] sm:$0xff]
        %v2432 = vld [vmem:[%s2155 + $0x18] sm:$0xff]
        %2433 = vmatprep.subr.mxu0 0.0
        %2434 = vmatpush1.msra.mxu0 %v2416
        %2435 = vmatprep.subr.mxu0 0.0
        %2436 = vmatpush1.msra.mxu0 %v2417
        %2437 = vmatprep.subr.mxu0 0.0
        %2438 = vmatpush1.msra.mxu0 %v2418
        %2439 = vmatprep.subr.mxu0 0.0
        %2440 = vmatpush1.msra.mxu0 %v2419
        %2441 = vmatprep.subr.mxu0 0.0
        %2442 = vmatpush1.msra.mxu0 %v2420
        %2443 = vmatprep.subr.mxu0 0.0
        %2444 = vmatpush1.msra.mxu0 %v2421
        %2445 = vmatprep.subr.mxu0 0.0
        %2446 = vmatpush1.msra.mxu0 %v2422
        %2447 = vmatprep.subr.mxu0 0.0
        %2448 = vmatpush1.msra.mxu0 %v2423
        %2449 = vmatprep.subr.mxu0 0.0
        %2450 = vmatpush1.msra.mxu0 %v2424
        %2451 = vmatprep.subr.mxu0 0.0
        %2452 = vmatpush1.msra.mxu0 %v2425
        %2453 = vmatprep.subr.mxu0 0.0
        %2454 = vmatpush1.msra.mxu0 %v2426
        %2455 = vmatprep.subr.mxu0 0.0
        %2456 = vmatpush1.msra.mxu0 %v2427
        %2457 = vmatprep.subr.mxu0 0.0
        %2458 = vmatpush1.msra.mxu0 %v2428
        %2459 = vmatprep.subr.mxu0 0.0
        %2460 = vmatpush1.msra.mxu0 %v2429
        %2461 = vmatprep.subr.mxu0 0.0
        %2462 = vmatpush1.msra.mxu0 %v2430
        %2463 = vmatprep.subr.mxu0 0.0
        %2464 = vmatpush1.msra.mxu0 %v2431
        %2465 = vmatprep.subr.mxu0 0.0
        %2466 = vmatpush1.msra.mxu0 0.0
        %2467 = vmatprep.subr.mxu0 0.0
        %2468 = vmatpush1.msra.mxu0 0.0
        %2469 = vmatprep.subr.mxu0 0.0
        %2470 = vmatpush1.msra.mxu0 0.0
        %2471 = vmatprep.subr.mxu0 0.0
        %2472 = vmatpush1.msra.mxu0 0.0
        %2473 = vmatprep.subr.mxu0 0.0
        %2474 = vmatpush1.msra.mxu0 0.0
        %2475 = vmatprep.subr.mxu0 0.0
        %2476 = vmatpush1.msra.mxu0 0.0
        %2477 = vmatprep.subr.mxu0 0.0
        %2478 = vmatpush1.msra.mxu0 0.0
        %2479 = vmatprep.subr.mxu0 0.0
        %2480 = vmatpush1.msra.mxu0 0.0
        %2481 = vmatprep.subr.mxu0 0.0
        %2482 = vmatpush1.msra.mxu0 0.0
        %2483 = vmatprep.subr.mxu0 0.0
        %2484 = vmatpush1.msra.mxu0 0.0
        %2485 = vmatprep.subr.mxu0 0.0
        %2486 = vmatpush1.msra.mxu0 0.0
        %2487 = vmatprep.subr.mxu0 0.0
        %2488 = vmatpush1.msra.mxu0 0.0
        %2489 = vmatprep.subr.mxu0 0.0
        %2490 = vmatpush1.msra.mxu0 0.0
        %2491 = vmatprep.subr.mxu0 0.0
        %2492 = vmatpush1.msra.mxu0 0.0
        %2493 = vmatprep.subr.mxu0 0.0
        %2494 = vmatpush1.msra.mxu0 0.0
        %2495 = vmatprep.subr.mxu0 0.0
        %2496 = vmatpush1.msra.mxu0 0.0
        %2497 = vmatprep.mubr.f32.mxu0 0.0
        %2498 = vmatmul.mubr.f32.gmra.mrb[0].mxu0 %v1948
        %v2499 = vpop.f32.mrb[0].mxu0
        %v2500 = vadd.f32 0.0, %v2499
        %v2501 = vpop.f32.mrb[0].mxu0
        %2502 = vdwg.mxu0
        %v2503 = vadd.f32 %v2432, %v2500
        %v2504 = vmul.f32 %v2503, 0.5
        %v2505 = vtanh.pop %v2504
        %v2506 = vmul.f32 %v2505, 0.5
        %v2507 = vadd.f32 %v2506, 0.5
        %v2508 = vtanh.pop %v2415
        %v2509 = vmul.f32 %v2507, %v2508
        %s2510 = sadd.s32 %s1379, 2
        %p2511 = scmp.lt.s32.totalorder %s2510, 8
        %s2512 = scalar_select %p2511, 1, 0
        %v2513 = vstv %s2512
        %vm2514 = vcmp.eq.s32.totalorder %v2513, 1
        %v2515 = vsel %vm2514, %v2509, %v1948
        %v2516 = vsel %vm2514, %v2415, %v1949
        %s2517 = scalar_lea.vmem %s467, 16 [#allocation14]
        %2518 = vst [vmem:[%s2517] sm:$0xff] %v2515
        // Predicated region
        $region81: #{tpu_custom_call.1} parent=47 // pred_check
          %p2519 = pneg %p1001
        $region82: #{tpu_custom_call.1} parent=47 // pred_check_branch
          %2521 = sbr.rel (%p2519) target = $region84
        $region83: #{tpu_custom_call.1} parent=47 // pred_region
          %s2522 = sadd.s32 %s499, 16
          %s2523 = scalar_lea.vmem %s417, 16 [#allocation8]
          %v2524 = vld [vmem:[%s2523] sm:$0xff]
          %v2526 = vlaneseq
          %v2527 = vshrl.u32 %v2526, 7
          %v2528 = vsub.s32 0, %v2527
          %v2529 = vrot.slane %v500, %v2528
          %v2530 = vlaneseq
          %v2531 = vshrl.u32 %v2530, 7
          %v2532 = vsub.s32 1, %v2531
          %v2533 = vrot.slane %v500, %v2532
          %v2534 = vlaneseq
          %v2535 = vshrl.u32 %v2534, 7
          %v2536 = vsub.s32 2, %v2535
          %v2537 = vrot.slane %v500, %v2536
          %v2538 = vlaneseq
          %v2539 = vshrl.u32 %v2538, 7
          %v2540 = vsub.s32 3, %v2539
          %v2541 = vrot.slane %v500, %v2540
          %vm2546 = vcmask 130048
          %v2548 = vsel %vm2546, %v2524, 0
          %2550 = vmatprep.subr.mxu0 %v502
          %2551 = vmatpush1.msra.mxu0 %v501
          %2552 = vmatprep.subr.mxu0 %v506
          %2553 = vmatpush1.msra.mxu0 %v505
          %2554 = vmatprep.subr.mxu0 0.0
          %2555 = vmatpush1.msra.mxu0 0.0
          %2556 = vmatprep.subr.mxu0 0.0
          %2557 = vmatpush1.msra.mxu0 0.0
          %2558 = vmatprep.subr.mxu0 0.0
          %2559 = vmatpush1.msra.mxu0 0.0
          %2560 = vmatprep.subr.mxu0 0.0
          %2561 = vmatpush1.msra.mxu0 0.0
          %2562 = vmatprep.subr.mxu0 0.0
          %2563 = vmatpush1.msra.mxu0 0.0
          %2564 = vmatprep.subr.mxu0 0.0
          %2565 = vmatpush1.msra.mxu0 0.0
          %2566 = vmatprep.subr.mxu0 0.0
          %2567 = vmatpush1.msra.mxu0 0.0
          %2568 = vmatprep.subr.mxu0 0.0
          %2569 = vmatpush1.msra.mxu0 0.0
          %2570 = vmatprep.subr.mxu0 0.0
          %2571 = vmatpush1.msra.mxu0 0.0
          %2572 = vmatprep.subr.mxu0 0.0
          %2573 = vmatpush1.msra.mxu0 0.0
          %2574 = vmatprep.subr.mxu0 0.0
          %2575 = vmatpush1.msra.mxu0 0.0
          %2576 = vmatprep.subr.mxu0 0.0
          %2577 = vmatpush1.msra.mxu0 0.0
          %2578 = vmatprep.subr.mxu0 0.0
          %2579 = vmatpush1.msra.mxu0 0.0
          %2580 = vmatprep.subr.mxu0 0.0
          %2581 = vmatpush1.msra.mxu0 0.0
          %2582 = vmatprep.subr.mxu0 0.0
          %2583 = vmatpush1.msra.mxu0 0.0
          %2584 = vmatprep.subr.mxu0 0.0
          %2585 = vmatpush1.msra.mxu0 0.0
          %2586 = vmatprep.subr.mxu0 0.0
          %2587 = vmatpush1.msra.mxu0 0.0
          %2588 = vmatprep.subr.mxu0 0.0
          %2589 = vmatpush1.msra.mxu0 0.0
          %2590 = vmatprep.subr.mxu0 0.0
          %2591 = vmatpush1.msra.mxu0 0.0
          %2592 = vmatprep.subr.mxu0 0.0
          %2593 = vmatpush1.msra.mxu0 0.0
          %2594 = vmatprep.subr.mxu0 0.0
          %2595 = vmatpush1.msra.mxu0 0.0
          %2596 = vmatprep.subr.mxu0 0.0
          %2597 = vmatpush1.msra.mxu0 0.0
          %2598 = vmatprep.subr.mxu0 0.0
          %2599 = vmatpush1.msra.mxu0 0.0
          %2600 = vmatprep.subr.mxu0 0.0
          %2601 = vmatpush1.msra.mxu0 0.0
          %2602 = vmatprep.subr.mxu0 0.0
          %2603 = vmatpush1.msra.mxu0 0.0
          %2604 = vmatprep.subr.mxu0 0.0
          %2605 = vmatpush1.msra.mxu0 0.0
          %2606 = vmatprep.subr.mxu0 0.0
          %2607 = vmatpush1.msra.mxu0 0.0
          %2608 = vmatprep.subr.mxu0 0.0
          %2609 = vmatpush1.msra.mxu0 0.0
          %2610 = vmatprep.subr.mxu0 0.0
          %2611 = vmatpush1.msra.mxu0 0.0
          %2612 = vmatprep.subr.mxu0 0.0
          %2613 = vmatpush1.msra.mxu0 0.0
          %2614 = vmatprep.mubr.f32.mxu0 0.0
          %2615 = vmatmul.mubr.f32.gmra.mrb[0].mxu0 %v2548
          %v2616 = vpop.f32.mrb[0].mxu0
          %v2617 = vadd.f32 %v2529, %v2616
          %v2618 = vpop.f32.mrb[0].mxu0
          %v2619 = vadd.f32 %v2533, %v2618
          %2620 = vdwg.mxu0
          %2621 = vmatprep.subr.mxu0 %v504
          %2622 = vmatpush1.msra.mxu0 %v503
          %2623 = vmatprep.subr.mxu0 %v508
          %2624 = vmatpush1.msra.mxu0 %v507
          %2625 = vmatprep.subr.mxu0 0.0
          %2626 = vmatpush1.msra.mxu0 0.0
          %2627 = vmatprep.subr.mxu0 0.0
          %2628 = vmatpush1.msra.mxu0 0.0
          %2629 = vmatprep.subr.mxu0 0.0
          %2630 = vmatpush1.msra.mxu0 0.0
          %2631 = vmatprep.subr.mxu0 0.0
          %2632 = vmatpush1.msra.mxu0 0.0
          %2633 = vmatprep.subr.mxu0 0.0
          %2634 = vmatpush1.msra.mxu0 0.0
          %2635 = vmatprep.subr.mxu0 0.0
          %2636 = vmatpush1.msra.mxu0 0.0
          %2637 = vmatprep.subr.mxu0 0.0
          %2638 = vmatpush1.msra.mxu0 0.0
          %2639 = vmatprep.subr.mxu0 0.0
          %2640 = vmatpush1.msra.mxu0 0.0
          %2641 = vmatprep.subr.mxu0 0.0
          %2642 = vmatpush1.msra.mxu0 0.0
          %2643 = vmatprep.subr.mxu0 0.0
          %2644 = vmatpush1.msra.mxu0 0.0
          %2645 = vmatprep.subr.mxu0 0.0
          %2646 = vmatpush1.msra.mxu0 0.0
          %2647 = vmatprep.subr.mxu0 0.0
          %2648 = vmatpush1.msra.mxu0 0.0
          %2649 = vmatprep.subr.mxu0 0.0
          %2650 = vmatpush1.msra.mxu0 0.0
          %2651 = vmatprep.subr.mxu0 0.0
          %2652 = vmatpush1.msra.mxu0 0.0
          %2653 = vmatprep.subr.mxu0 0.0
          %2654 = vmatpush1.msra.mxu0 0.0
          %2655 = vmatprep.subr.mxu0 0.0
          %2656 = vmatpush1.msra.mxu0 0.0
          %2657 = vmatprep.subr.mxu0 0.0
          %2658 = vmatpush1.msra.mxu0 0.0
          %2659 = vmatprep.subr.mxu0 0.0
          %2660 = vmatpush1.msra.mxu0 0.0
          %2661 = vmatprep.subr.mxu0 0.0
          %2662 = vmatpush1.msra.mxu0 0.0
          %2663 = vmatprep.subr.mxu0 0.0
          %2664 = vmatpush1.msra.mxu0 0.0
          %2665 = vmatprep.subr.mxu0 0.0
          %2666 = vmatpush1.msra.mxu0 0.0
          %2667 = vmatprep.subr.mxu0 0.0
          %2668 = vmatpush1.msra.mxu0 0.0
          %2669 = vmatprep.subr.mxu0 0.0
          %2670 = vmatpush1.msra.mxu0 0.0
          %2671 = vmatprep.subr.mxu0 0.0
          %2672 = vmatpush1.msra.mxu0 0.0
          %2673 = vmatprep.subr.mxu0 0.0
          %2674 = vmatpush1.msra.mxu0 0.0
          %2675 = vmatprep.subr.mxu0 0.0
          %2676 = vmatpush1.msra.mxu0 0.0
          %2677 = vmatprep.subr.mxu0 0.0
          %2678 = vmatpush1.msra.mxu0 0.0
          %2679 = vmatprep.subr.mxu0 0.0
          %2680 = vmatpush1.msra.mxu0 0.0
          %2681 = vmatprep.subr.mxu0 0.0
          %2682 = vmatpush1.msra.mxu0 0.0
          %2683 = vmatprep.subr.mxu0 0.0
          %2684 = vmatpush1.msra.mxu0 0.0
          %2685 = vmatprep.mubr.f32.mxu0 0.0
          %2686 = vmatmul.mubr.f32.gmra.mrb[0].mxu0 %v2548
          %v2687 = vpop.f32.mrb[0].mxu0
          %v2688 = vadd.f32 %v2537, %v2687
          %v2689 = vpop.f32.mrb[0].mxu0
          %v2690 = vadd.f32 %v2541, %v2689
          %2691 = vdwg.mxu0
          %s2692 = sshra.s32 %s2522, 3
          %s2693 = sand.u32 %s2522, 7
          %s2694 = smul.u32 %s2692, 4
          %s2695 = smul.addr %s2694, 8
          %s2696 = scalar_lea.vmem [#allocation2], %s2695
          %2697 = vst [vmem:[%s2696] sm:$0xff] %v2617
          %2698 = vst [vmem:[%s2696 + $0x8] sm:$0xff] %v2619
          %2699 = vst [vmem:[%s2696 + $0x10] sm:$0xff] %v2688
          %2700 = vst [vmem:[%s2696 + $0x18] sm:$0xff] %v2690
        $region84: #{tpu_custom_call.1} parent=47 // pred_fallthru
          _
        %2701 = vst [vmem:[#allocation3] sm:$0xff] %v2515
        %2702 = vst [vmem:[#allocation4] sm:$0xff] %v2516
        %p2703 = scmp.eq.s32.totalorder %s35, 2
        // Predicated region
        $region85: #{tpu_custom_call.1} parent=47 // pred_check
          %p2704 = pneg %p2703
        $region86: #{tpu_custom_call.1} parent=47 // pred_check_branch
          %2706 = sbr.rel (%p2704) target = $region88
        $region87: #{tpu_custom_call.1} parent=47 // pred_region
          %2707 = vst [vmem:[#allocation15] sm:$0xff] %v2515
          %2708 = vst [vmem:[#allocation17] sm:$0xff] %v2516
        $region88: #{tpu_custom_call.1} parent=47 // pred_fallthru
          _
        %s2709 = sand.u32 %s227, 1
        %s2710 = scalar_lea.sflag [#allocation7], %s2709
        %s2711 = sand.u32 %s227, 1
        %s2712 = smul.addr %s2711, 24
        %s2713 = scalar_lea.vmem [#allocation14], %s2712
        // Predicated region
        $region89: #{tpu_custom_call.1} parent=47 // pred_check
          %p2714 = pneg %p237
        $region90: #{tpu_custom_call.1} parent=47 // pred_check_branch
          %2716 = sbr.rel (%p2714) target = $region92
        $region91: #{tpu_custom_call.1} parent=47 // pred_region
          %s2717 = smul.u32 3, %s35
          %s2719 = ssub.s32 384, 384
          %2720 = vsyncadd %s2710, %s2719
          %s2721 = sadd.s32 %s34, %s2717
          %s2722 = smul.addr %s2721, 128
          %s2723 = scalar_lea.hbm %s7, %s2722
          %s2724 = sshll.u32 %s2713, 4
          %s2725 = int_to_ptr.vmem [resolvable:$true] %s2724
          %2730 = dma.vmem_to_hbm [thread:$0]  %s2725, 384, %s2723, %s2710, 128, 128, 8
        $region92: #{tpu_custom_call.1} parent=47 // pred_fallthru
          _
        // Predicated region
        $region93: #{tpu_custom_call.1} parent=47 // pred_check
          %p2731 = pneg %p263
        $region94: #{tpu_custom_call.1} parent=47 // pred_check_branch
          %2733 = sbr.rel (%p2731) target = $region96
        $region95: #{tpu_custom_call.1} parent=47 // pred_region
          %s2735 = ssub.s32 128, 128
          %2736 = vsyncadd [#allocation16], %s2735
          %s2737 = smul.addr %s34, 128
          %s2738 = scalar_lea.hbm %s8, %s2737
          %s2740 = sshll.u32 [#allocation15], 4
          %s2741 = int_to_ptr.vmem [resolvable:$true] %s2740
          %2743 = dma.vmem_to_hbm [thread:$0]  %s2741, 128, %s2738, [#allocation16]
        $region96: #{tpu_custom_call.1} parent=47 // pred_fallthru
          _
        // Predicated region
        $region97: #{tpu_custom_call.1} parent=47 // pred_check
          %p2744 = pneg %p289
        $region98: #{tpu_custom_call.1} parent=47 // pred_check_branch
          %2746 = sbr.rel (%p2744) target = $region100
        $region99: #{tpu_custom_call.1} parent=47 // pred_region
          %s2748 = ssub.s32 128, 128
          %2749 = vsyncadd [#allocation16], %s2748
          %s2750 = smul.addr %s34, 128
          %s2751 = scalar_lea.hbm %s9, %s2750
          %s2753 = sshll.u32 [#allocation17], 4
          %s2754 = int_to_ptr.vmem [resolvable:$true] %s2753
          %2756 = dma.vmem_to_hbm [thread:$0]  %s2754, 128, %s2751, [#allocation16]
        $region100: #{tpu_custom_call.1} parent=47 // pred_fallthru
          _
        // Predicated region
        $region101: #{tpu_custom_call.1} parent=47 // pred_check
          %p2757 = pneg %p263
        $region102: #{tpu_custom_call.1} parent=47 // pred_check_branch
          %2759 = sbr.rel (%p2757) target = $region104
        $region103: #{tpu_custom_call.1} parent=47 // pred_region
          %2760 = dma.done [#allocation16], 128
        $region104: #{tpu_custom_call.1} parent=47 // pred_fallthru
          _
        // Predicated region
        $region105: #{tpu_custom_call.1} parent=47 // pred_check
          %p2761 = pneg %p289
        $region106: #{tpu_custom_call.1} parent=47 // pred_check_branch
          %2763 = sbr.rel (%p2761) target = $region108
        $region107: #{tpu_custom_call.1} parent=47 // pred_region
          %2764 = dma.done [#allocation16], 128
        $region108: #{tpu_custom_call.1} parent=47 // pred_fallthru
          _
      $region48: #{tpu_custom_call.1} parent=5 // pred_fallthru
        _
      %p2765 = scmp.le.s32.totalorder 2, %s25
      // Predicated region
      $region109: #{tpu_custom_call.1} parent=5 // pred_check
        %p2766 = pneg %p2765
      $region110: #{tpu_custom_call.1} parent=5 // pred_check_branch
        %2768 = sbr.rel (%p2766) target = $region112
      $region111: #{tpu_custom_call.1} parent=5 // pred_region
        %s2769 = ssub.s32 %s25, 2
        // Predicated region
        $region113: #{tpu_custom_call.1} parent=111 // pred_check
          %p2770 = pneg %p243
        $region114: #{tpu_custom_call.1} parent=111 // pred_check_branch
          %2772 = sbr.rel (%p2770) target = $region116
        $region115: #{tpu_custom_call.1} parent=111 // pred_region
          %s2773 = sand.u32 %s228, 1
          %s2774 = scalar_lea.sflag [#allocation7], %s2773
          %s2775 = sand.u32 %s228, 1
          %s2776 = smul.addr %s2775, 24
          %s2777 = scalar_lea.vmem [#allocation14], %s2776
          %2778 = dma.done %s2774, 384
        $region116: #{tpu_custom_call.1} parent=111 // pred_fallthru
          _
      $region112: #{tpu_custom_call.1} parent=5 // pred_fallthru
        _
    $region6: #{tpu_custom_call.1} parent=1 // loop_footer
      %s29 = sadd.s32 1, %s25
    $region7: #{tpu_custom_call.1} parent=1 // loop_footer_branch
      %24 = sbr.rel target = $region3
    $region8: #{tpu_custom_call.1} parent=1 // loop_exit
      _
    %2779 = vsyncpa [#allocation6], 1
    %s2780 = scalar_lea.sflag [#allocation6], 1
    %2781 = vsyncpa %s2780, 1
    %2782 = vsyncpa [#allocation9], 1
    %s2783 = scalar_lea.sflag [#allocation9], 1
    %2784 = vsyncpa %s2783, 1
    %2785 = vsyncpa [#allocation12], 1
    %2786 = vsyncpa [#allocation7], 1
    %s2787 = scalar_lea.sflag [#allocation7], 1
    %2788 = vsyncpa %s2787, 1
    %2789 = vsyncpa [#allocation16], 1

</llo_original>
